<compile_context>
chip_gen: v6e
topology: v6e:2x2x1
jax: 0.10.0
libtpu: 0.0.40
codegen_flags: <defaults>
</compile_context>

<pallas_src>
import jax
import jax.numpy as jnp
from jax.experimental import pallas as pl
from jax.experimental.pallas import tpu as pltpu


# --------------------------------------------------------------------------------------
# Shared GRU gate math (PyTorch nn.GRUCell formulation, fused-gate layout r | z | n)
# --------------------------------------------------------------------------------------
def _gru_gates(gi, gh, h):
    """gi/gh: (rows, 3H) input-/hidden-side gate pre-activations (biases included)."""
    H = h.shape[-1]
    r = jax.nn.sigmoid(gi[:, 0:H] + gh[:, 0:H])
    z = jax.nn.sigmoid(gi[:, H:2 * H] + gh[:, H:2 * H])
    n = jnp.tanh(gi[:, 2 * H:3 * H] + r * gh[:, 2 * H:3 * H])
    return (1.0 - z) * n + z * h


# --------------------------------------------------------------------------------------
# Kernel 1: turn-level GRU.  All three turns are stacked along batch (3B rows), so one
# pallas_call / one grid pass handles them; the hidden state lives in VMEM scratch and
# only the final hidden is written (single lane-dense last-step store).
# --------------------------------------------------------------------------------------
def _turn_gru_kernel(x_ref, wih_ref, whh_ref, bih_ref, bhh_ref, out_ref, h_ref):
    t = pl.program_id(0)

    @pl.when(t == 0)
    def _():
        h_ref[...] = jnp.zeros_like(h_ref)

    x = x_ref[0]                                # (3B, D_emb)
    h = h_ref[...]                              # (3B, D_m)
    gi = jnp.dot(x, wih_ref[...], preferred_element_type=jnp.float32) + bih_ref[...]
    gh = jnp.dot(h, whh_ref[...], preferred_element_type=jnp.float32) + bhh_ref[...]
    h_new = _gru_gates(gi, gh, h)
    h_ref[...] = h_new

    @pl.when(t == pl.num_programs(0) - 1)
    def _():
        out_ref[...] = h_new                    # single last-step output write


def turn_gru_last_hidden(x_seq, gp):
    """x_seq: (S_tok, 3B, D_emb) f32 -> final hidden (3B, D_m) f32 (zero initial state)."""
    S, BE, D_in = x_seq.shape
    D_m = gp["w_hh"].shape[0]

    def full(shape):
        return pl.BlockSpec(shape, lambda t: (0,) * len(shape))

    return pl.pallas_call(
        _turn_gru_kernel,
        out_shape=jax.ShapeDtypeStruct((BE, D_m), jnp.float32),
        grid=(S,),
        in_specs=[
            pl.BlockSpec((1, BE, D_in), lambda t: (t, 0, 0)),
            full((D_in, 3 * D_m)), full((D_m, 3 * D_m)),
            full((1, 3 * D_m)), full((1, 3 * D_m)),
        ],
        out_specs=pl.BlockSpec((BE, D_m), lambda t: (0, 0)),
        scratch_shapes=[pltpu.VMEM((BE, D_m), jnp.float32)],
        compiler_params=pltpu.CompilerParams(dimension_semantics=("arbitrary",)),
    )(x_seq, gp["w_ih"], gp["w_hh"], gp["b_ih"], gp["b_hh"])


# --------------------------------------------------------------------------------------
# Kernel 2: fused forward DialogueRNN (3 utterances, fully unrolled) + the single live
# backward-direction step + classifier head.  Grid-less: every operand is a full-array
# VMEM ref, DMA'd once; one (B, n_classes) output store.
# --------------------------------------------------------------------------------------
def _dialogue_head_kernel(
    u_ref,                                                          # (3, B, D_m)
    fwgi_ref, fwgh_ref, fbgi_ref, fbgh_ref, fwatt_ref,              # fwd g-cell + attn
    fwpi_ref, fwph_ref, fbpi_ref, fbph_ref,                         # fwd p-cell
    fwei_ref, fweh_ref, fbei_ref, fbeh_ref,                         # fwd e-cell
    rwpi_ref, rwph_ref, rbpi_ref, rbph_ref,                         # bwd p-cell
    rwei_ref, rweh_ref, rbei_ref, rbeh_ref,                         # bwd e-cell
    w1_ref, b1_ref, w2_ref, b2_ref,                                 # classifier head
    out_ref,                                                        # (B, n_classes)
):
    f32 = jnp.float32
    B = u_ref.shape[1]
    D_g = fwgh_ref.shape[0]
    D_p = fwph_ref.shape[0]
    D_e = fweh_ref.shape[0]

    def gru(x_cat, h, wi_ref, bi_ref, wh_ref, bh_ref):
        gi = jnp.dot(x_cat, wi_ref[...], preferred_element_type=f32) + bi_ref[...]
        gh = jnp.dot(h, wh_ref[...], preferred_element_type=f32) + bh_ref[...]
        return _gru_gates(gi, gh, h)

    zeros_g = jnp.zeros((B, D_g), f32)
    zeros_p = jnp.zeros((B, D_p), f32)
    zeros_e = jnp.zeros((B, D_e), f32)
    watt = fwatt_ref[...]                                           # (1, D_g)

    # ---------------- forward DialogueRNN, S = 3 utterances, fully unrolled ----------
    speakers = (0, 1, 0)        # qmask is the compile-time constant [[1,0],[0,1],[1,0]]
    g_hist = []
    g_prev = zeros_g
    q2b = jnp.zeros((2 * B, D_p), f32)    # party 0 = rows [0:B], party 1 = rows [B:2B]
    e = zeros_e

    for t in range(3):
        Ut = u_ref[t]                                               # (B, D_m)
        sp = speakers[t]
        q_sel = q2b[sp * B:(sp + 1) * B]                            # speaker's prev state

        # global g-cell on [U ; q_sel]
        g_new = gru(jnp.concatenate([Ut, q_sel], axis=-1), g_prev,
                    fwgi_ref, fbgi_ref, fwgh_ref, fbgh_ref)

        # SimpleAttention over the g history (the current step is excluded)
        if len(g_hist) == 0:
            c = zeros_g
        elif len(g_hist) == 1:
            c = g_hist[0]                       # softmax over a single element == 1
        else:
            scores = [jnp.sum(g * watt, axis=-1, keepdims=True) for g in g_hist]
            m = scores[0]
            for s in scores[1:]:
                m = jnp.maximum(m, s)
            ex = [jnp.exp(s - m) for s in scores]
            denom = ex[0]
            for x in ex[1:]:
                denom = denom + x
            inv = 1.0 / denom
            c = ex[0] * inv * g_hist[0]
            for i in range(1, len(g_hist)):
                c = c + ex[i] * inv * g_hist[i]

        # party p-cell: both parties stacked along batch, one matmul, shared input gi
        gi_p = (jnp.dot(jnp.concatenate([Ut, c], axis=-1), fwpi_ref[...],
                        preferred_element_type=f32) + fbpi_ref[...])
        gh_p = jnp.dot(q2b, fwph_ref[...], preferred_element_type=f32) + fbph_ref[...]
        qs2b = _gru_gates(jnp.concatenate([gi_p, gi_p], axis=0), gh_p, q2b)
        # only the speaker party updates its state (listener_state=False)
        if sp == 0:
            q2b = jnp.concatenate([qs2b[:B], q2b[B:]], axis=0)
        else:
            q2b = jnp.concatenate([q2b[:B], qs2b[B:]], axis=0)
        q_sel_new = qs2b[sp * B:(sp + 1) * B]

        # emotion e-cell on the speaker's updated party state
        e = gru(q_sel_new, e, fwei_ref, fbei_ref, fweh_ref, fbeh_ref)

        g_hist.append(g_new)
        g_prev = g_new

    ef_last = e

    # ---------------- backward direction --------------------------------------------
    # emotions_b[-1] (after _reverse_seq) == step 0 of the reversed run: it sees U[2],
    # zero g-history (c = 0), zero party states and zero e-state; its g-cell output is
    # never consumed, so only the p-cell and e-cell are evaluated.  With a zero hidden
    # state the hidden-side gate pre-activation is exactly the hidden bias.
    U2 = u_ref[2]
    gi_p = (jnp.dot(jnp.concatenate([U2, zeros_g], axis=-1), rwpi_ref[...],
                    preferred_element_type=f32) + rbpi_ref[...])
    qs = _gru_gates(gi_p, rbph_ref[...], zeros_p)
    gi_e = jnp.dot(qs, rwei_ref[...], preferred_element_type=f32) + rbei_ref[...]
    eb_last = _gru_gates(gi_e, rbeh_ref[...], zeros_e)

    # ---------------- classifier head: linear1 + ReLU + smax_fc + log_softmax --------
    feats = jnp.concatenate([ef_last, eb_last], axis=-1)            # (B, 2*D_e)
    hidden = jnp.maximum(
        jnp.dot(feats, w1_ref[...], preferred_element_type=f32) + b1_ref[...], 0.0)
    logits = jnp.dot(hidden, w2_ref[...], preferred_element_type=f32) + b2_ref[...]
    m = jnp.max(logits, axis=-1, keepdims=True)
    lse = jnp.log(jnp.sum(jnp.exp(logits - m), axis=-1, keepdims=True)) + m
    out_ref[...] = logits - lse                                      # log_softmax


def dialogue_head_logprobs(U, pf, pr, hp):
    """U: (3, B, D_m) -> (B, n_classes) log-probs."""
    B = U.shape[1]
    C = hp["w2"].shape[-1]
    return pl.pallas_call(
        _dialogue_head_kernel,
        out_shape=jax.ShapeDtypeStruct((B, C), jnp.float32),
    )(U,
      pf["wg_i"], pf["wg_h"], pf["bg_i"], pf["bg_h"], pf["watt"],
      pf["wp_i"], pf["wp_h"], pf["bp_i"], pf["bp_h"],
      pf["we_i"], pf["we_h"], pf["be_i"], pf["be_h"],
      pr["wp_i"], pr["wp_h"], pr["bp_i"], pr["bp_h"],
      pr["we_i"], pr["we_h"], pr["be_i"], pr["be_h"],
      hp["w1"], hp["b1"], hp["w2"], hp["b2"])


# --------------------------------------------------------------------------------------
# Full BiE2EModel forward built from the two Pallas kernels
# --------------------------------------------------------------------------------------
def bi_e2e_forward(params, turn1, turn2, turn3):
    emb = params["embedding"]
    gp = params["turn_rnn"]
    S_tok, B = turn1.shape
    D_m = gp["w_hh"].shape[0]

    # Embedding gather in plain XLA: the table is ~6 KB, a standalone Pallas gather
    # kernel was pure launch / grid-step overhead.
    ids = jnp.stack([turn1, turn2, turn3], axis=1).reshape(S_tok, 3 * B)
    x_seq = jnp.take(emb, ids.astype(jnp.int32), axis=0)            # (S_tok, 3B, D_emb)

    u_stacked = turn_gru_last_hidden(x_seq, gp)                     # (3B, D_m)
    U = u_stacked.reshape(3, B, D_m)                                # (turn, batch, D_m)

    return dialogue_head_logprobs(U, params["dialog_f"], params["dialog_r"],
                                  params["head"])


# --------------------------------------------------------------------------------------
# Pure-JAX reference (mirrors the PyTorch module: full bidirectional run; dropout = id)
# --------------------------------------------------------------------------------------
def _gru_ref(x, h, w_i, b_i, w_h, b_h):
    gi = x @ w_i + b_i
    gh = h @ w_h + b_h
    return _gru_gates(gi, gh, h)


def _turn_gru_ref(x_seq, gp):
    h = jnp.zeros((x_seq.shape[1], gp["w_hh"].shape[0]), jnp.float32)
    for t in range(x_seq.shape[0]):
        h = _gru_ref(x_seq[t], h, gp["w_ih"], gp["b_ih"], gp["w_hh"], gp["b_hh"])
    return h


def _dialogue_rnn_ref(U, qmask, p):
    S, B, _ = U.shape
    D_g = p["wg_h"].shape[0]
    D_p = p["wp_h"].shape[0]
    D_e = p["we_h"].shape[0]
    g_hist = []
    g_prev = jnp.zeros((B, D_g), jnp.float32)
    q = jnp.zeros((B, 2, D_p), jnp.float32)
    e = jnp.zeros((B, D_e), jnp.float32)
    outs = []
    for t in range(S):
        Ut, qm = U[t], qmask[t]
        q_sel = jnp.einsum("bp,bpd->bd", qm, q)
        g_new = _gru_ref(jnp.concatenate([Ut, q_sel], -1), g_prev,
                         p["wg_i"], p["bg_i"], p["wg_h"], p["bg_h"])
        if t == 0:
            c = jnp.zeros((B, D_g), jnp.float32)
        else:
            M = jnp.stack(g_hist, 0)
            scores = jnp.sum(M * p["watt"], -1, keepdims=True)
            alpha = jax.nn.softmax(scores, axis=0)
            c = jnp.sum(alpha * M, axis=0)
        pin = jnp.concatenate([Ut, c], -1)
        qs = jnp.stack([_gru_ref(pin, q[:, pp], p["wp_i"], p["bp_i"],
                                 p["wp_h"], p["bp_h"]) for pp in range(2)], axis=1)
        q = q * (1.0 - qm[..., None]) + qs * qm[..., None]
        e = _gru_ref(jnp.einsum("bp,bpd->bd", qm, q), e,
                     p["we_i"], p["be_i"], p["we_h"], p["be_h"])
        g_hist.append(g_new)
        g_prev = g_new
        outs.append(e)
    return jnp.stack(outs, 0)


def reference_forward(params, turn1, turn2, turn3):
    emb = params["embedding"]
    gp = params["turn_rnn"]
    B = turn1.shape[1]
    U = jnp.stack([_turn_gru_ref(emb[t], gp) for t in (turn1, turn2, turn3)], 0)
    qmask = jnp.broadcast_to(
        jnp.asarray([[1.0, 0.0], [0.0, 1.0], [1.0, 0.0]], jnp.float32)[:, None, :],
        (3, B, 2))
    ef = _dialogue_rnn_ref(U, qmask, params["dialog_f"])
    # umask is all-ones in BiE2EModel.forward -> _reverse_seq is a plain time flip.
    eb = _dialogue_rnn_ref(U[::-1], qmask[::-1], params["dialog_r"])[::-1]
    hp = params["head"]
    feats = jnp.concatenate([ef[-1], eb[-1]], axis=-1)
    hidden = jnp.maximum(feats @ hp["w1"] + hp["b1"], 0.0)
    logits = hidden @ hp["w2"] + hp["b2"]
    return jax.nn.log_softmax(logits, axis=-1)


# --------------------------------------------------------------------------------------
# Parameter construction (fused r|z|n gate layout; input streams packed along K)
# --------------------------------------------------------------------------------------
def init_params(key, V, D_emb, D_m, D_g, D_p, D_e, D_h, C):
    state = {"key": key}

    def nxt():
        state["key"], sub = jax.random.split(state["key"])
        return sub

    def w(shape, scale=0.3):
        return (scale * jax.random.normal(nxt(), shape)).astype(jnp.float32)

    def dialog():
        return dict(
            wg_i=w((D_m + D_p, 3 * D_g)), wg_h=w((D_g, 3 * D_g)),
            bg_i=w((1, 3 * D_g), 0.05), bg_h=w((1, 3 * D_g), 0.05),
            watt=w((1, D_g)),
            wp_i=w((D_m + D_g, 3 * D_p)), wp_h=w((D_p, 3 * D_p)),
            bp_i=w((1, 3 * D_p), 0.05), bp_h=w((1, 3 * D_p), 0.05),
            we_i=w((D_p, 3 * D_e)), we_h=w((D_e, 3 * D_e)),
            be_i=w((1, 3 * D_e), 0.05), be_h=w((1, 3 * D_e), 0.05))

    return dict(
        embedding=w((V, D_emb), 1.0),
        turn_rnn=dict(w_ih=w((D_emb, 3 * D_m)), w_hh=w((D_m, 3 * D_m)),
                      b_ih=w((1, 3 * D_m), 0.05), b_hh=w((1, 3 * D_m), 0.05)),
        dialog_f=dialog(),
        dialog_r=dialog(),
        head=dict(w1=w((2 * D_e, D_h)), b1=w((1, D_h), 0.05),
                  w2=w((D_h, C)), b2=w((1, C), 0.05)))


# --------------------------------------------------------------------------------------
if __name__ == "__main__":
    key = jax.random.PRNGKey(0)
    V, D_emb, D_m, D_g, D_p, D_e, D_h, n_classes = 50, 32, 16, 16, 16, 16, 32, 7
    S_tok, batch = 8, 2

    kp, k1, k2, k3 = jax.random.split(key, 4)
    params = init_params(kp, V, D_emb, D_m, D_g, D_p, D_e, D_h, n_classes)
    turn1 = jax.random.randint(k1, (S_tok, batch), 0, V, dtype=jnp.int32)
    turn2 = jax.random.randint(k2, (S_tok, batch), 0, V, dtype=jnp.int32)
    turn3 = jax.random.randint(k3, (S_tok, batch), 0, V, dtype=jnp.int32)

    fwd = jax.jit(bi_e2e_forward)
    log_prob = fwd(params, turn1, turn2, turn3)
    jax.block_until_ready(log_prob)

    ref = reference_forward(params, turn1, turn2, turn3)
    max_err = float(jnp.max(jnp.abs(log_prob - ref)))

    assert log_prob.shape == (batch, n_classes), log_prob.shape
    assert bool(jnp.all(jnp.isfinite(log_prob)))
    assert max_err < 2e-2, (max_err, log_prob, ref)
    print("KERNEL_OK")
</pallas_src>

<mosaic_0001>
module attributes {stable_mosaic.version = 11 : i64} {
  func.func @_turn_gru_kernel(%arg0: i32, %arg1: memref<1x6x32xf32, #tpu.memory_space<vmem>>, %arg2: memref<32x48xf32, #tpu.memory_space<vmem>>, %arg3: memref<16x48xf32, #tpu.memory_space<vmem>>, %arg4: memref<1x48xf32, #tpu.memory_space<vmem>>, %arg5: memref<1x48xf32, #tpu.memory_space<vmem>>, %arg6: memref<6x16xf32, #tpu.memory_space<vmem>>, %arg7: memref<6x16xf32, #tpu.memory_space<vmem>>) attributes {dimension_semantics = [#tpu.dimension_semantics<arbitrary>], iteration_bounds = array<i64: 8>, scalar_prefetch = 0 : i64, scratch_operands = 1 : i64, tpu.core_type = #tpu.core_type<tc>, window_params = [{transform_indices = @transform_0, window_bounds = array<i64: 1, 6, 32>}, {pipeline_mode = #tpu.pipeline_mode<synchronous>, transform_indices = @transform_1, window_bounds = array<i64: 32, 48>}, {pipeline_mode = #tpu.pipeline_mode<synchronous>, transform_indices = @transform_2, window_bounds = array<i64: 16, 48>}, {pipeline_mode = #tpu.pipeline_mode<synchronous>, transform_indices = @transform_3, window_bounds = array<i64: 1, 48>}, {pipeline_mode = #tpu.pipeline_mode<synchronous>, transform_indices = @transform_4, window_bounds = array<i64: 1, 48>}, {pipeline_mode = #tpu.pipeline_mode<synchronous>, transform_indices = @transform_5, window_bounds = array<i64: 6, 16>}]} {
    %c0_i32 = arith.constant 0 : i32
    %0 = arith.cmpi eq, %arg0, %c0_i32 : i32
    %1 = arith.extui %0 : i1 to i32
    %c0_i32_0 = arith.constant 0 : i32
    %2 = arith.cmpi ne, %1, %c0_i32_0 : i32
    scf.if %2 {
      %cst_20 = arith.constant 0.000000e+00 : f32
      %46 = vector.broadcast %cst_20 : f32 to vector<6x16xf32>
      %c0_21 = arith.constant 0 : index
      %c0_22 = arith.constant 0 : index
      %47 = vector.load %arg7[%c0_21, %c0_22] : memref<6x16xf32, #tpu.memory_space<vmem>>, vector<6x16xf32>
      tpu.vector_store %arg7[%c0_21, %c0_22], %46 {strides = array<i32>} : memref<6x16xf32, #tpu.memory_space<vmem>>, vector<6x16xf32>,
    } else {
    }
    %c0 = arith.constant 0 : index
    %c0_1 = arith.constant 0 : index
    %c0_2 = arith.constant 0 : index
    %3 = vector.load %arg1[%c0, %c0_1, %c0_2] : memref<1x6x32xf32, #tpu.memory_space<vmem>>, vector<1x6x32xf32>
    %4 = vector.shape_cast %3 : vector<1x6x32xf32> to vector<6x32xf32>
    %c0_3 = arith.constant 0 : index
    %c0_4 = arith.constant 0 : index
    %5 = vector.load %arg7[%c0_3, %c0_4] : memref<6x16xf32, #tpu.memory_space<vmem>>, vector<6x16xf32>
    %c0_5 = arith.constant 0 : index
    %c0_6 = arith.constant 0 : index
    %6 = vector.load %arg2[%c0_5, %c0_6] : memref<32x48xf32, #tpu.memory_space<vmem>>, vector<32x48xf32>
    %cst = arith.constant dense<0.000000e+00> : vector<6x48xf32>
    %7 = tpu.matmul %4, %6, %cst {dimension_numbers = #tpu.dot_dimension_numbers<[1], [0], [0], [1], [0, 0, 1, 1], [], []>} : vector<6x32xf32>, vector<32x48xf32>, vector<6x48xf32> -> vector<6x48xf32>
    %c0_7 = arith.constant 0 : index
    %c0_8 = arith.constant 0 : index
    %8 = vector.load %arg4[%c0_7, %c0_8] : memref<1x48xf32, #tpu.memory_space<vmem>>, vector<1x48xf32>
    %9 = vector.broadcast %8 : vector<1x48xf32> to vector<6x48xf32>
    %10 = arith.addf %7, %9 : vector<6x48xf32>
    %c0_9 = arith.constant 0 : index
    %c0_10 = arith.constant 0 : index
    %11 = vector.load %arg3[%c0_9, %c0_10] : memref<16x48xf32, #tpu.memory_space<vmem>>, vector<16x48xf32>
    %cst_11 = arith.constant dense<0.000000e+00> : vector<6x48xf32>
    %12 = tpu.matmul %5, %11, %cst_11 {dimension_numbers = #tpu.dot_dimension_numbers<[1], [0], [0], [1], [0, 0, 1, 1], [], []>} : vector<6x16xf32>, vector<16x48xf32>, vector<6x48xf32> -> vector<6x48xf32>
    %c0_12 = arith.constant 0 : index
    %c0_13 = arith.constant 0 : index
    %13 = vector.load %arg5[%c0_12, %c0_13] : memref<1x48xf32, #tpu.memory_space<vmem>>, vector<1x48xf32>
    %14 = vector.broadcast %13 : vector<1x48xf32> to vector<6x48xf32>
    %15 = arith.addf %12, %14 : vector<6x48xf32>
    %16 = vector.extract_strided_slice %10 {offsets = [0, 0], sizes = [6, 16], strides = [1, 1]} : vector<6x48xf32> to vector<6x16xf32>
    %17 = vector.extract_strided_slice %15 {offsets = [0, 0], sizes = [6, 16], strides = [1, 1]} : vector<6x48xf32> to vector<6x16xf32>
    %18 = arith.addf %16, %17 : vector<6x16xf32>
    %19 = arith.negf %18 : vector<6x16xf32>
    %20 = math.exp %19 : vector<6x16xf32>
    %cst_14 = arith.constant 1.000000e+00 : f32
    %21 = vector.broadcast %cst_14 : f32 to vector<6x16xf32>
    %22 = arith.addf %21, %20 : vector<6x16xf32>
    %23 = arith.divf %21, %22 : vector<6x16xf32>
    %24 = vector.extract_strided_slice %10 {offsets = [0, 16], sizes = [6, 16], strides = [1, 1]} : vector<6x48xf32> to vector<6x16xf32>
    %25 = vector.extract_strided_slice %15 {offsets = [0, 16], sizes = [6, 16], strides = [1, 1]} : vector<6x48xf32> to vector<6x16xf32>
    %26 = arith.addf %24, %25 : vector<6x16xf32>
    %27 = arith.negf %26 : vector<6x16xf32>
    %28 = math.exp %27 : vector<6x16xf32>
    %cst_15 = arith.constant 1.000000e+00 : f32
    %29 = vector.broadcast %cst_15 : f32 to vector<6x16xf32>
    %30 = arith.addf %29, %28 : vector<6x16xf32>
    %31 = arith.divf %29, %30 : vector<6x16xf32>
    %32 = vector.extract_strided_slice %10 {offsets = [0, 32], sizes = [6, 16], strides = [1, 1]} : vector<6x48xf32> to vector<6x16xf32>
    %33 = vector.extract_strided_slice %15 {offsets = [0, 32], sizes = [6, 16], strides = [1, 1]} : vector<6x48xf32> to vector<6x16xf32>
    %34 = arith.mulf %23, %33 : vector<6x16xf32>
    %35 = arith.addf %32, %34 : vector<6x16xf32>
    %36 = math.tanh %35 : vector<6x16xf32>
    %cst_16 = arith.constant 1.000000e+00 : f32
    %37 = vector.broadcast %cst_16 : f32 to vector<6x16xf32>
    %38 = arith.subf %37, %31 : vector<6x16xf32>
    %39 = arith.mulf %38, %36 : vector<6x16xf32>
    %40 = arith.mulf %31, %5 : vector<6x16xf32>
    %41 = arith.addf %39, %40 : vector<6x16xf32>
    %c0_17 = arith.constant 0 : index
    %c0_18 = arith.constant 0 : index
    %42 = vector.load %arg7[%c0_17, %c0_18] : memref<6x16xf32, #tpu.memory_space<vmem>>, vector<6x16xf32>
    tpu.vector_store %arg7[%c0_17, %c0_18], %41 {strides = array<i32>} : memref<6x16xf32, #tpu.memory_space<vmem>>, vector<6x16xf32>,
    %c7_i32 = arith.constant 7 : i32
    %43 = arith.cmpi eq, %arg0, %c7_i32 : i32
    %44 = arith.extui %43 : i1 to i32
    %c0_i32_19 = arith.constant 0 : i32
    %45 = arith.cmpi ne, %44, %c0_i32_19 : i32
    scf.if %45 {
      %c0_20 = arith.constant 0 : index
      %c0_21 = arith.constant 0 : index
      %46 = vector.load %arg6[%c0_20, %c0_21] : memref<6x16xf32, #tpu.memory_space<vmem>>, vector<6x16xf32>
      tpu.vector_store %arg6[%c0_20, %c0_21], %41 {strides = array<i32>} : memref<6x16xf32, #tpu.memory_space<vmem>>, vector<6x16xf32>,
    } else {
    }
    return
  }
  func.func @transform_0(%arg0: i32) -> (i32, i32, i32) {
    %c0_i32 = arith.constant 0 : i32
    %c0_i32_0 = arith.constant 0 : i32
    %c0_i32_1 = arith.constant 0 : i32
    return %arg0, %c0_i32, %c0_i32_0 : i32, i32, i32
  }
  func.func @transform_1(%arg0: i32) -> (i32, i32) {
    %c0_i32 = arith.constant 0 : i32
    %c0_i32_0 = arith.constant 0 : i32
    %c0_i32_1 = arith.constant 0 : i32
    return %c0_i32, %c0_i32_0 : i32, i32
  }
  func.func @transform_2(%arg0: i32) -> (i32, i32) {
    %c0_i32 = arith.constant 0 : i32
    %c0_i32_0 = arith.constant 0 : i32
    %c0_i32_1 = arith.constant 0 : i32
    return %c0_i32, %c0_i32_0 : i32, i32
  }
  func.func @transform_3(%arg0: i32) -> (i32, i32) {
    %c0_i32 = arith.constant 0 : i32
    %c0_i32_0 = arith.constant 0 : i32
    %c0_i32_1 = arith.constant 0 : i32
    return %c0_i32, %c0_i32_0 : i32, i32
  }
  func.func @transform_4(%arg0: i32) -> (i32, i32) {
    %c0_i32 = arith.constant 0 : i32
    %c0_i32_0 = arith.constant 0 : i32
    %c0_i32_1 = arith.constant 0 : i32
    return %c0_i32, %c0_i32_0 : i32, i32
  }
  func.func @transform_5(%arg0: i32) -> (i32, i32) {
    %c0_i32 = arith.constant 0 : i32
    %c0_i32_0 = arith.constant 0 : i32
    %c0_i32_1 = arith.constant 0 : i32
    return %c0_i32, %c0_i32_0 : i32, i32
  }
}

module attributes {stable_mosaic.version = 11 : i64} {
  func.func @_dialogue_head_kernel(%arg0: memref<3x2x16xf32, #tpu.memory_space<vmem>>, %arg1: memref<32x48xf32, #tpu.memory_space<vmem>>, %arg2: memref<16x48xf32, #tpu.memory_space<vmem>>, %arg3: memref<1x48xf32, #tpu.memory_space<vmem>>, %arg4: memref<1x48xf32, #tpu.memory_space<vmem>>, %arg5: memref<1x16xf32, #tpu.memory_space<vmem>>, %arg6: memref<32x48xf32, #tpu.memory_space<vmem>>, %arg7: memref<16x48xf32, #tpu.memory_space<vmem>>, %arg8: memref<1x48xf32, #tpu.memory_space<vmem>>, %arg9: memref<1x48xf32, #tpu.memory_space<vmem>>, %arg10: memref<16x48xf32, #tpu.memory_space<vmem>>, %arg11: memref<16x48xf32, #tpu.memory_space<vmem>>, %arg12: memref<1x48xf32, #tpu.memory_space<vmem>>, %arg13: memref<1x48xf32, #tpu.memory_space<vmem>>, %arg14: memref<32x48xf32, #tpu.memory_space<vmem>>, %arg15: memref<16x48xf32, #tpu.memory_space<vmem>>, %arg16: memref<1x48xf32, #tpu.memory_space<vmem>>, %arg17: memref<1x48xf32, #tpu.memory_space<vmem>>, %arg18: memref<16x48xf32, #tpu.memory_space<vmem>>, %arg19: memref<16x48xf32, #tpu.memory_space<vmem>>, %arg20: memref<1x48xf32, #tpu.memory_space<vmem>>, %arg21: memref<1x48xf32, #tpu.memory_space<vmem>>, %arg22: memref<32x32xf32, #tpu.memory_space<vmem>>, %arg23: memref<1x32xf32, #tpu.memory_space<vmem>>, %arg24: memref<32x7xf32, #tpu.memory_space<vmem>>, %arg25: memref<1x7xf32, #tpu.memory_space<vmem>>, %arg26: memref<2x7xf32, #tpu.memory_space<vmem>>) attributes {dimension_semantics = [], scalar_prefetch = 0 : i64, scratch_operands = 0 : i64, tpu.core_type = #tpu.core_type<tc>} {
    %cst = arith.constant 0.000000e+00 : f32
    %0 = vector.broadcast %cst : f32 to vector<2x16xf32>
    %cst_0 = arith.constant 0.000000e+00 : f32
    %1 = vector.broadcast %cst_0 : f32 to vector<2x16xf32>
    %cst_1 = arith.constant 0.000000e+00 : f32
    %2 = vector.broadcast %cst_1 : f32 to vector<2x16xf32>
    %c0 = arith.constant 0 : index
    %c0_2 = arith.constant 0 : index
    %3 = vector.load %arg5[%c0, %c0_2] : memref<1x16xf32, #tpu.memory_space<vmem>>, vector<1x16xf32>
    %cst_3 = arith.constant 0.000000e+00 : f32
    %4 = vector.broadcast %cst_3 : f32 to vector<4x16xf32>
    %c0_4 = arith.constant 0 : index
    %c0_5 = arith.constant 0 : index
    %c0_6 = arith.constant 0 : index
    %5 = vector.load %arg0[%c0_4, %c0_5, %c0_6] : memref<3x2x16xf32, #tpu.memory_space<vmem>>, vector<1x2x16xf32>
    %6 = vector.shape_cast %5 : vector<1x2x16xf32> to vector<2x16xf32>
    %7 = vector.extract_strided_slice %4 {offsets = [0, 0], sizes = [2, 16], strides = [1, 1]} : vector<4x16xf32> to vector<2x16xf32>
    %8 = tpu.concatenate %6, %7 in 1 : vector<2x16xf32>, vector<2x16xf32> -> vector<2x32xf32>
    %c0_7 = arith.constant 0 : index
    %c0_8 = arith.constant 0 : index
    %9 = vector.load %arg1[%c0_7, %c0_8] : memref<32x48xf32, #tpu.memory_space<vmem>>, vector<32x48xf32>
    %cst_9 = arith.constant dense<0.000000e+00> : vector<2x48xf32>
    %10 = tpu.matmul %8, %9, %cst_9 {dimension_numbers = #tpu.dot_dimension_numbers<[1], [0], [0], [1], [0, 0, 1, 1], [], []>} : vector<2x32xf32>, vector<32x48xf32>, vector<2x48xf32> -> vector<2x48xf32>
    %c0_10 = arith.constant 0 : index
    %c0_11 = arith.constant 0 : index
    %11 = vector.load %arg3[%c0_10, %c0_11] : memref<1x48xf32, #tpu.memory_space<vmem>>, vector<1x48xf32>
    %12 = vector.broadcast %11 : vector<1x48xf32> to vector<2x48xf32>
    %13 = arith.addf %10, %12 : vector<2x48xf32>
    %c0_12 = arith.constant 0 : index
    %c0_13 = arith.constant 0 : index
    %14 = vector.load %arg2[%c0_12, %c0_13] : memref<16x48xf32, #tpu.memory_space<vmem>>, vector<16x48xf32>
    %cst_14 = arith.constant dense<0.000000e+00> : vector<2x48xf32>
    %15 = tpu.matmul %0, %14, %cst_14 {dimension_numbers = #tpu.dot_dimension_numbers<[1], [0], [0], [1], [0, 0, 1, 1], [], []>} : vector<2x16xf32>, vector<16x48xf32>, vector<2x48xf32> -> vector<2x48xf32>
    %c0_15 = arith.constant 0 : index
    %c0_16 = arith.constant 0 : index
    %16 = vector.load %arg4[%c0_15, %c0_16] : memref<1x48xf32, #tpu.memory_space<vmem>>, vector<1x48xf32>
    %17 = vector.broadcast %16 : vector<1x48xf32> to vector<2x48xf32>
    %18 = arith.addf %15, %17 : vector<2x48xf32>
    %19 = vector.extract_strided_slice %13 {offsets = [0, 0], sizes = [2, 16], strides = [1, 1]} : vector<2x48xf32> to vector<2x16xf32>
    %20 = vector.extract_strided_slice %18 {offsets = [0, 0], sizes = [2, 16], strides = [1, 1]} : vector<2x48xf32> to vector<2x16xf32>
    %21 = arith.addf %19, %20 : vector<2x16xf32>
    %22 = arith.negf %21 : vector<2x16xf32>
    %23 = math.exp %22 : vector<2x16xf32>
    %cst_17 = arith.constant 1.000000e+00 : f32
    %24 = vector.broadcast %cst_17 : f32 to vector<2x16xf32>
    %25 = arith.addf %24, %23 : vector<2x16xf32>
    %26 = arith.divf %24, %25 : vector<2x16xf32>
    %27 = vector.extract_strided_slice %13 {offsets = [0, 16], sizes = [2, 16], strides = [1, 1]} : vector<2x48xf32> to vector<2x16xf32>
    %28 = vector.extract_strided_slice %18 {offsets = [0, 16], sizes = [2, 16], strides = [1, 1]} : vector<2x48xf32> to vector<2x16xf32>
    %29 = arith.addf %27, %28 : vector<2x16xf32>
    %30 = arith.negf %29 : vector<2x16xf32>
    %31 = math.exp %30 : vector<2x16xf32>
    %cst_18 = arith.constant 1.000000e+00 : f32
    %32 = vector.broadcast %cst_18 : f32 to vector<2x16xf32>
    %33 = arith.addf %32, %31 : vector<2x16xf32>
    %34 = arith.divf %32, %33 : vector<2x16xf32>
    %35 = vector.extract_strided_slice %13 {offsets = [0, 32], sizes = [2, 16], strides = [1, 1]} : vector<2x48xf32> to vector<2x16xf32>
    %36 = vector.extract_strided_slice %18 {offsets = [0, 32], sizes = [2, 16], strides = [1, 1]} : vector<2x48xf32> to vector<2x16xf32>
    %37 = arith.mulf %26, %36 : vector<2x16xf32>
    %38 = arith.addf %35, %37 : vector<2x16xf32>
    %39 = math.tanh %38 : vector<2x16xf32>
    %cst_19 = arith.constant 1.000000e+00 : f32
    %40 = vector.broadcast %cst_19 : f32 to vector<2x16xf32>
    %41 = arith.subf %40, %34 : vector<2x16xf32>
    %42 = arith.mulf %41, %39 : vector<2x16xf32>
    %43 = arith.mulf %34, %0 : vector<2x16xf32>
    %44 = arith.addf %42, %43 : vector<2x16xf32>
    %45 = tpu.concatenate %6, %0 in 1 : vector<2x16xf32>, vector<2x16xf32> -> vector<2x32xf32>
    %c0_20 = arith.constant 0 : index
    %c0_21 = arith.constant 0 : index
    %46 = vector.load %arg6[%c0_20, %c0_21] : memref<32x48xf32, #tpu.memory_space<vmem>>, vector<32x48xf32>
    %cst_22 = arith.constant dense<0.000000e+00> : vector<2x48xf32>
    %47 = tpu.matmul %45, %46, %cst_22 {dimension_numbers = #tpu.dot_dimension_numbers<[1], [0], [0], [1], [0, 0, 1, 1], [], []>} : vector<2x32xf32>, vector<32x48xf32>, vector<2x48xf32> -> vector<2x48xf32>
    %c0_23 = arith.constant 0 : index
    %c0_24 = arith.constant 0 : index
    %48 = vector.load %arg8[%c0_23, %c0_24] : memref<1x48xf32, #tpu.memory_space<vmem>>, vector<1x48xf32>
    %49 = vector.broadcast %48 : vector<1x48xf32> to vector<2x48xf32>
    %50 = arith.addf %47, %49 : vector<2x48xf32>
    %c0_25 = arith.constant 0 : index
    %c0_26 = arith.constant 0 : index
    %51 = vector.load %arg7[%c0_25, %c0_26] : memref<16x48xf32, #tpu.memory_space<vmem>>, vector<16x48xf32>
    %cst_27 = arith.constant dense<0.000000e+00> : vector<4x48xf32>
    %52 = tpu.matmul %4, %51, %cst_27 {dimension_numbers = #tpu.dot_dimension_numbers<[1], [0], [0], [1], [0, 0, 1, 1], [], []>} : vector<4x16xf32>, vector<16x48xf32>, vector<4x48xf32> -> vector<4x48xf32>
    %c0_28 = arith.constant 0 : index
    %c0_29 = arith.constant 0 : index
    %53 = vector.load %arg9[%c0_28, %c0_29] : memref<1x48xf32, #tpu.memory_space<vmem>>, vector<1x48xf32>
    %54 = vector.broadcast %53 : vector<1x48xf32> to vector<4x48xf32>
    %55 = arith.addf %52, %54 : vector<4x48xf32>
    %56 = tpu.concatenate %50, %50 in 0 : vector<2x48xf32>, vector<2x48xf32> -> vector<4x48xf32>
    %57 = vector.extract_strided_slice %56 {offsets = [0, 0], sizes = [4, 16], strides = [1, 1]} : vector<4x48xf32> to vector<4x16xf32>
    %58 = vector.extract_strided_slice %55 {offsets = [0, 0], sizes = [4, 16], strides = [1, 1]} : vector<4x48xf32> to vector<4x16xf32>
    %59 = arith.addf %57, %58 : vector<4x16xf32>
    %60 = arith.negf %59 : vector<4x16xf32>
    %61 = math.exp %60 : vector<4x16xf32>
    %cst_30 = arith.constant 1.000000e+00 : f32
    %62 = vector.broadcast %cst_30 : f32 to vector<4x16xf32>
    %63 = arith.addf %62, %61 : vector<4x16xf32>
    %64 = arith.divf %62, %63 : vector<4x16xf32>
    %65 = vector.extract_strided_slice %56 {offsets = [0, 16], sizes = [4, 16], strides = [1, 1]} : vector<4x48xf32> to vector<4x16xf32>
    %66 = vector.extract_strided_slice %55 {offsets = [0, 16], sizes = [4, 16], strides = [1, 1]} : vector<4x48xf32> to vector<4x16xf32>
    %67 = arith.addf %65, %66 : vector<4x16xf32>
    %68 = arith.negf %67 : vector<4x16xf32>
    %69 = math.exp %68 : vector<4x16xf32>
    %cst_31 = arith.constant 1.000000e+00 : f32
    %70 = vector.broadcast %cst_31 : f32 to vector<4x16xf32>
    %71 = arith.addf %70, %69 : vector<4x16xf32>
    %72 = arith.divf %70, %71 : vector<4x16xf32>
    %73 = vector.extract_strided_slice %56 {offsets = [0, 32], sizes = [4, 16], strides = [1, 1]} : vector<4x48xf32> to vector<4x16xf32>
    %74 = vector.extract_strided_slice %55 {offsets = [0, 32], sizes = [4, 16], strides = [1, 1]} : vector<4x48xf32> to vector<4x16xf32>
    %75 = arith.mulf %64, %74 : vector<4x16xf32>
    %76 = arith.addf %73, %75 : vector<4x16xf32>
    %77 = math.tanh %76 : vector<4x16xf32>
    %cst_32 = arith.constant 1.000000e+00 : f32
    %78 = vector.broadcast %cst_32 : f32 to vector<4x16xf32>
    %79 = arith.subf %78, %72 : vector<4x16xf32>
    %80 = arith.mulf %79, %77 : vector<4x16xf32>
    %81 = arith.mulf %72, %4 : vector<4x16xf32>
    %82 = arith.addf %80, %81 : vector<4x16xf32>
    %83 = vector.extract_strided_slice %82 {offsets = [0, 0], sizes = [2, 16], strides = [1, 1]} : vector<4x16xf32> to vector<2x16xf32>
    %84 = vector.extract_strided_slice %4 {offsets = [2, 0], sizes = [2, 16], strides = [1, 1]} : vector<4x16xf32> to vector<2x16xf32>
    %85 = tpu.concatenate %83, %84 in 0 : vector<2x16xf32>, vector<2x16xf32> -> vector<4x16xf32>
    %86 = vector.extract_strided_slice %82 {offsets = [0, 0], sizes = [2, 16], strides = [1, 1]} : vector<4x16xf32> to vector<2x16xf32>
    %c0_33 = arith.constant 0 : index
    %c0_34 = arith.constant 0 : index
    %87 = vector.load %arg10[%c0_33, %c0_34] : memref<16x48xf32, #tpu.memory_space<vmem>>, vector<16x48xf32>
    %cst_35 = arith.constant dense<0.000000e+00> : vector<2x48xf32>
    %88 = tpu.matmul %86, %87, %cst_35 {dimension_numbers = #tpu.dot_dimension_numbers<[1], [0], [0], [1], [0, 0, 1, 1], [], []>} : vector<2x16xf32>, vector<16x48xf32>, vector<2x48xf32> -> vector<2x48xf32>
    %c0_36 = arith.constant 0 : index
    %c0_37 = arith.constant 0 : index
    %89 = vector.load %arg12[%c0_36, %c0_37] : memref<1x48xf32, #tpu.memory_space<vmem>>, vector<1x48xf32>
    %90 = vector.broadcast %89 : vector<1x48xf32> to vector<2x48xf32>
    %91 = arith.addf %88, %90 : vector<2x48xf32>
    %c0_38 = arith.constant 0 : index
    %c0_39 = arith.constant 0 : index
    %92 = vector.load %arg11[%c0_38, %c0_39] : memref<16x48xf32, #tpu.memory_space<vmem>>, vector<16x48xf32>
    %cst_40 = arith.constant dense<0.000000e+00> : vector<2x48xf32>
    %93 = tpu.matmul %2, %92, %cst_40 {dimension_numbers = #tpu.dot_dimension_numbers<[1], [0], [0], [1], [0, 0, 1, 1], [], []>} : vector<2x16xf32>, vector<16x48xf32>, vector<2x48xf32> -> vector<2x48xf32>
    %c0_41 = arith.constant 0 : index
    %c0_42 = arith.constant 0 : index
    %94 = vector.load %arg13[%c0_41, %c0_42] : memref<1x48xf32, #tpu.memory_space<vmem>>, vector<1x48xf32>
    %95 = vector.broadcast %94 : vector<1x48xf32> to vector<2x48xf32>
    %96 = arith.addf %93, %95 : vector<2x48xf32>
    %97 = vector.extract_strided_slice %91 {offsets = [0, 0], sizes = [2, 16], strides = [1, 1]} : vector<2x48xf32> to vector<2x16xf32>
    %98 = vector.extract_strided_slice %96 {offsets = [0, 0], sizes = [2, 16], strides = [1, 1]} : vector<2x48xf32> to vector<2x16xf32>
    %99 = arith.addf %97, %98 : vector<2x16xf32>
    %100 = arith.negf %99 : vector<2x16xf32>
    %101 = math.exp %100 : vector<2x16xf32>
    %cst_43 = arith.constant 1.000000e+00 : f32
    %102 = vector.broadcast %cst_43 : f32 to vector<2x16xf32>
    %103 = arith.addf %102, %101 : vector<2x16xf32>
    %104 = arith.divf %102, %103 : vector<2x16xf32>
    %105 = vector.extract_strided_slice %91 {offsets = [0, 16], sizes = [2, 16], strides = [1, 1]} : vector<2x48xf32> to vector<2x16xf32>
    %106 = vector.extract_strided_slice %96 {offsets = [0, 16], sizes = [2, 16], strides = [1, 1]} : vector<2x48xf32> to vector<2x16xf32>
    %107 = arith.addf %105, %106 : vector<2x16xf32>
    %108 = arith.negf %107 : vector<2x16xf32>
    %109 = math.exp %108 : vector<2x16xf32>
    %cst_44 = arith.constant 1.000000e+00 : f32
    %110 = vector.broadcast %cst_44 : f32 to vector<2x16xf32>
    %111 = arith.addf %110, %109 : vector<2x16xf32>
    %112 = arith.divf %110, %111 : vector<2x16xf32>
    %113 = vector.extract_strided_slice %91 {offsets = [0, 32], sizes = [2, 16], strides = [1, 1]} : vector<2x48xf32> to vector<2x16xf32>
    %114 = vector.extract_strided_slice %96 {offsets = [0, 32], sizes = [2, 16], strides = [1, 1]} : vector<2x48xf32> to vector<2x16xf32>
    %115 = arith.mulf %104, %114 : vector<2x16xf32>
    %116 = arith.addf %113, %115 : vector<2x16xf32>
    %117 = math.tanh %116 : vector<2x16xf32>
    %cst_45 = arith.constant 1.000000e+00 : f32
    %118 = vector.broadcast %cst_45 : f32 to vector<2x16xf32>
    %119 = arith.subf %118, %112 : vector<2x16xf32>
    %120 = arith.mulf %119, %117 : vector<2x16xf32>
    %121 = arith.mulf %112, %2 : vector<2x16xf32>
    %122 = arith.addf %120, %121 : vector<2x16xf32>
    %c1 = arith.constant 1 : index
    %c0_46 = arith.constant 0 : index
    %c0_47 = arith.constant 0 : index
    %123 = vector.load %arg0[%c1, %c0_46, %c0_47] : memref<3x2x16xf32, #tpu.memory_space<vmem>>, vector<1x2x16xf32>
    %124 = vector.shape_cast %123 : vector<1x2x16xf32> to vector<2x16xf32>
    %125 = vector.extract_strided_slice %85 {offsets = [2, 0], sizes = [2, 16], strides = [1, 1]} : vector<4x16xf32> to vector<2x16xf32>
    %126 = tpu.concatenate %124, %125 in 1 : vector<2x16xf32>, vector<2x16xf32> -> vector<2x32xf32>
    %c0_48 = arith.constant 0 : index
    %c0_49 = arith.constant 0 : index
    %127 = vector.load %arg1[%c0_48, %c0_49] : memref<32x48xf32, #tpu.memory_space<vmem>>, vector<32x48xf32>
    %cst_50 = arith.constant dense<0.000000e+00> : vector<2x48xf32>
    %128 = tpu.matmul %126, %127, %cst_50 {dimension_numbers = #tpu.dot_dimension_numbers<[1], [0], [0], [1], [0, 0, 1, 1], [], []>} : vector<2x32xf32>, vector<32x48xf32>, vector<2x48xf32> -> vector<2x48xf32>
    %c0_51 = arith.constant 0 : index
    %c0_52 = arith.constant 0 : index
    %129 = vector.load %arg3[%c0_51, %c0_52] : memref<1x48xf32, #tpu.memory_space<vmem>>, vector<1x48xf32>
    %130 = vector.broadcast %129 : vector<1x48xf32> to vector<2x48xf32>
    %131 = arith.addf %128, %130 : vector<2x48xf32>
    %c0_53 = arith.constant 0 : index
    %c0_54 = arith.constant 0 : index
    %132 = vector.load %arg2[%c0_53, %c0_54] : memref<16x48xf32, #tpu.memory_space<vmem>>, vector<16x48xf32>
    %cst_55 = arith.constant dense<0.000000e+00> : vector<2x48xf32>
    %133 = tpu.matmul %44, %132, %cst_55 {dimension_numbers = #tpu.dot_dimension_numbers<[1], [0], [0], [1], [0, 0, 1, 1], [], []>} : vector<2x16xf32>, vector<16x48xf32>, vector<2x48xf32> -> vector<2x48xf32>
    %c0_56 = arith.constant 0 : index
    %c0_57 = arith.constant 0 : index
    %134 = vector.load %arg4[%c0_56, %c0_57] : memref<1x48xf32, #tpu.memory_space<vmem>>, vector<1x48xf32>
    %135 = vector.broadcast %134 : vector<1x48xf32> to vector<2x48xf32>
    %136 = arith.addf %133, %135 : vector<2x48xf32>
    %137 = vector.extract_strided_slice %131 {offsets = [0, 0], sizes = [2, 16], strides = [1, 1]} : vector<2x48xf32> to vector<2x16xf32>
    %138 = vector.extract_strided_slice %136 {offsets = [0, 0], sizes = [2, 16], strides = [1, 1]} : vector<2x48xf32> to vector<2x16xf32>
    %139 = arith.addf %137, %138 : vector<2x16xf32>
    %140 = arith.negf %139 : vector<2x16xf32>
    %141 = math.exp %140 : vector<2x16xf32>
    %cst_58 = arith.constant 1.000000e+00 : f32
    %142 = vector.broadcast %cst_58 : f32 to vector<2x16xf32>
    %143 = arith.addf %142, %141 : vector<2x16xf32>
    %144 = arith.divf %142, %143 : vector<2x16xf32>
    %145 = vector.extract_strided_slice %131 {offsets = [0, 16], sizes = [2, 16], strides = [1, 1]} : vector<2x48xf32> to vector<2x16xf32>
    %146 = vector.extract_strided_slice %136 {offsets = [0, 16], sizes = [2, 16], strides = [1, 1]} : vector<2x48xf32> to vector<2x16xf32>
    %147 = arith.addf %145, %146 : vector<2x16xf32>
    %148 = arith.negf %147 : vector<2x16xf32>
    %149 = math.exp %148 : vector<2x16xf32>
    %cst_59 = arith.constant 1.000000e+00 : f32
    %150 = vector.broadcast %cst_59 : f32 to vector<2x16xf32>
    %151 = arith.addf %150, %149 : vector<2x16xf32>
    %152 = arith.divf %150, %151 : vector<2x16xf32>
    %153 = vector.extract_strided_slice %131 {offsets = [0, 32], sizes = [2, 16], strides = [1, 1]} : vector<2x48xf32> to vector<2x16xf32>
    %154 = vector.extract_strided_slice %136 {offsets = [0, 32], sizes = [2, 16], strides = [1, 1]} : vector<2x48xf32> to vector<2x16xf32>
    %155 = arith.mulf %144, %154 : vector<2x16xf32>
    %156 = arith.addf %153, %155 : vector<2x16xf32>
    %157 = math.tanh %156 : vector<2x16xf32>
    %cst_60 = arith.constant 1.000000e+00 : f32
    %158 = vector.broadcast %cst_60 : f32 to vector<2x16xf32>
    %159 = arith.subf %158, %152 : vector<2x16xf32>
    %160 = arith.mulf %159, %157 : vector<2x16xf32>
    %161 = arith.mulf %152, %44 : vector<2x16xf32>
    %162 = arith.addf %160, %161 : vector<2x16xf32>
    %163 = tpu.concatenate %124, %44 in 1 : vector<2x16xf32>, vector<2x16xf32> -> vector<2x32xf32>
    %c0_61 = arith.constant 0 : index
    %c0_62 = arith.constant 0 : index
    %164 = vector.load %arg6[%c0_61, %c0_62] : memref<32x48xf32, #tpu.memory_space<vmem>>, vector<32x48xf32>
    %cst_63 = arith.constant dense<0.000000e+00> : vector<2x48xf32>
    %165 = tpu.matmul %163, %164, %cst_63 {dimension_numbers = #tpu.dot_dimension_numbers<[1], [0], [0], [1], [0, 0, 1, 1], [], []>} : vector<2x32xf32>, vector<32x48xf32>, vector<2x48xf32> -> vector<2x48xf32>
    %c0_64 = arith.constant 0 : index
    %c0_65 = arith.constant 0 : index
    %166 = vector.load %arg8[%c0_64, %c0_65] : memref<1x48xf32, #tpu.memory_space<vmem>>, vector<1x48xf32>
    %167 = vector.broadcast %166 : vector<1x48xf32> to vector<2x48xf32>
    %168 = arith.addf %165, %167 : vector<2x48xf32>
    %c0_66 = arith.constant 0 : index
    %c0_67 = arith.constant 0 : index
    %169 = vector.load %arg7[%c0_66, %c0_67] : memref<16x48xf32, #tpu.memory_space<vmem>>, vector<16x48xf32>
    %cst_68 = arith.constant dense<0.000000e+00> : vector<4x48xf32>
    %170 = tpu.matmul %85, %169, %cst_68 {dimension_numbers = #tpu.dot_dimension_numbers<[1], [0], [0], [1], [0, 0, 1, 1], [], []>} : vector<4x16xf32>, vector<16x48xf32>, vector<4x48xf32> -> vector<4x48xf32>
    %c0_69 = arith.constant 0 : index
    %c0_70 = arith.constant 0 : index
    %171 = vector.load %arg9[%c0_69, %c0_70] : memref<1x48xf32, #tpu.memory_space<vmem>>, vector<1x48xf32>
    %172 = vector.broadcast %171 : vector<1x48xf32> to vector<4x48xf32>
    %173 = arith.addf %170, %172 : vector<4x48xf32>
    %174 = tpu.concatenate %168, %168 in 0 : vector<2x48xf32>, vector<2x48xf32> -> vector<4x48xf32>
    %175 = vector.extract_strided_slice %174 {offsets = [0, 0], sizes = [4, 16], strides = [1, 1]} : vector<4x48xf32> to vector<4x16xf32>
    %176 = vector.extract_strided_slice %173 {offsets = [0, 0], sizes = [4, 16], strides = [1, 1]} : vector<4x48xf32> to vector<4x16xf32>
    %177 = arith.addf %175, %176 : vector<4x16xf32>
    %178 = arith.negf %177 : vector<4x16xf32>
    %179 = math.exp %178 : vector<4x16xf32>
    %cst_71 = arith.constant 1.000000e+00 : f32
    %180 = vector.broadcast %cst_71 : f32 to vector<4x16xf32>
    %181 = arith.addf %180, %179 : vector<4x16xf32>
    %182 = arith.divf %180, %181 : vector<4x16xf32>
    %183 = vector.extract_strided_slice %174 {offsets = [0, 16], sizes = [4, 16], strides = [1, 1]} : vector<4x48xf32> to vector<4x16xf32>
    %184 = vector.extract_strided_slice %173 {offsets = [0, 16], sizes = [4, 16], strides = [1, 1]} : vector<4x48xf32> to vector<4x16xf32>
    %185 = arith.addf %183, %184 : vector<4x16xf32>
    %186 = arith.negf %185 : vector<4x16xf32>
    %187 = math.exp %186 : vector<4x16xf32>
    %cst_72 = arith.constant 1.000000e+00 : f32
    %188 = vector.broadcast %cst_72 : f32 to vector<4x16xf32>
    %189 = arith.addf %188, %187 : vector<4x16xf32>
    %190 = arith.divf %188, %189 : vector<4x16xf32>
    %191 = vector.extract_strided_slice %174 {offsets = [0, 32], sizes = [4, 16], strides = [1, 1]} : vector<4x48xf32> to vector<4x16xf32>
    %192 = vector.extract_strided_slice %173 {offsets = [0, 32], sizes = [4, 16], strides = [1, 1]} : vector<4x48xf32> to vector<4x16xf32>
    %193 = arith.mulf %182, %192 : vector<4x16xf32>
    %194 = arith.addf %191, %193 : vector<4x16xf32>
    %195 = math.tanh %194 : vector<4x16xf32>
    %cst_73 = arith.constant 1.000000e+00 : f32
    %196 = vector.broadcast %cst_73 : f32 to vector<4x16xf32>
    %197 = arith.subf %196, %190 : vector<4x16xf32>
    %198 = arith.mulf %197, %195 : vector<4x16xf32>
    %199 = arith.mulf %190, %85 : vector<4x16xf32>
    %200 = arith.addf %198, %199 : vector<4x16xf32>
    %201 = vector.extract_strided_slice %85 {offsets = [0, 0], sizes = [2, 16], strides = [1, 1]} : vector<4x16xf32> to vector<2x16xf32>
    %202 = vector.extract_strided_slice %200 {offsets = [2, 0], sizes = [2, 16], strides = [1, 1]} : vector<4x16xf32> to vector<2x16xf32>
    %203 = tpu.concatenate %201, %202 in 0 : vector<2x16xf32>, vector<2x16xf32> -> vector<4x16xf32>
    %204 = vector.extract_strided_slice %200 {offsets = [2, 0], sizes = [2, 16], strides = [1, 1]} : vector<4x16xf32> to vector<2x16xf32>
    %c0_74 = arith.constant 0 : index
    %c0_75 = arith.constant 0 : index
    %205 = vector.load %arg10[%c0_74, %c0_75] : memref<16x48xf32, #tpu.memory_space<vmem>>, vector<16x48xf32>
    %cst_76 = arith.constant dense<0.000000e+00> : vector<2x48xf32>
    %206 = tpu.matmul %204, %205, %cst_76 {dimension_numbers = #tpu.dot_dimension_numbers<[1], [0], [0], [1], [0, 0, 1, 1], [], []>} : vector<2x16xf32>, vector<16x48xf32>, vector<2x48xf32> -> vector<2x48xf32>
    %c0_77 = arith.constant 0 : index
    %c0_78 = arith.constant 0 : index
    %207 = vector.load %arg12[%c0_77, %c0_78] : memref<1x48xf32, #tpu.memory_space<vmem>>, vector<1x48xf32>
    %208 = vector.broadcast %207 : vector<1x48xf32> to vector<2x48xf32>
    %209 = arith.addf %206, %208 : vector<2x48xf32>
    %c0_79 = arith.constant 0 : index
    %c0_80 = arith.constant 0 : index
    %210 = vector.load %arg11[%c0_79, %c0_80] : memref<16x48xf32, #tpu.memory_space<vmem>>, vector<16x48xf32>
    %cst_81 = arith.constant dense<0.000000e+00> : vector<2x48xf32>
    %211 = tpu.matmul %122, %210, %cst_81 {dimension_numbers = #tpu.dot_dimension_numbers<[1], [0], [0], [1], [0, 0, 1, 1], [], []>} : vector<2x16xf32>, vector<16x48xf32>, vector<2x48xf32> -> vector<2x48xf32>
    %c0_82 = arith.constant 0 : index
    %c0_83 = arith.constant 0 : index
    %212 = vector.load %arg13[%c0_82, %c0_83] : memref<1x48xf32, #tpu.memory_space<vmem>>, vector<1x48xf32>
    %213 = vector.broadcast %212 : vector<1x48xf32> to vector<2x48xf32>
    %214 = arith.addf %211, %213 : vector<2x48xf32>
    %215 = vector.extract_strided_slice %209 {offsets = [0, 0], sizes = [2, 16], strides = [1, 1]} : vector<2x48xf32> to vector<2x16xf32>
    %216 = vector.extract_strided_slice %214 {offsets = [0, 0], sizes = [2, 16], strides = [1, 1]} : vector<2x48xf32> to vector<2x16xf32>
    %217 = arith.addf %215, %216 : vector<2x16xf32>
    %218 = arith.negf %217 : vector<2x16xf32>
    %219 = math.exp %218 : vector<2x16xf32>
    %cst_84 = arith.constant 1.000000e+00 : f32
    %220 = vector.broadcast %cst_84 : f32 to vector<2x16xf32>
    %221 = arith.addf %220, %219 : vector<2x16xf32>
    %222 = arith.divf %220, %221 : vector<2x16xf32>
    %223 = vector.extract_strided_slice %209 {offsets = [0, 16], sizes = [2, 16], strides = [1, 1]} : vector<2x48xf32> to vector<2x16xf32>
    %224 = vector.extract_strided_slice %214 {offsets = [0, 16], sizes = [2, 16], strides = [1, 1]} : vector<2x48xf32> to vector<2x16xf32>
    %225 = arith.addf %223, %224 : vector<2x16xf32>
    %226 = arith.negf %225 : vector<2x16xf32>
    %227 = math.exp %226 : vector<2x16xf32>
    %cst_85 = arith.constant 1.000000e+00 : f32
    %228 = vector.broadcast %cst_85 : f32 to vector<2x16xf32>
    %229 = arith.addf %228, %227 : vector<2x16xf32>
    %230 = arith.divf %228, %229 : vector<2x16xf32>
    %231 = vector.extract_strided_slice %209 {offsets = [0, 32], sizes = [2, 16], strides = [1, 1]} : vector<2x48xf32> to vector<2x16xf32>
    %232 = vector.extract_strided_slice %214 {offsets = [0, 32], sizes = [2, 16], strides = [1, 1]} : vector<2x48xf32> to vector<2x16xf32>
    %233 = arith.mulf %222, %232 : vector<2x16xf32>
    %234 = arith.addf %231, %233 : vector<2x16xf32>
    %235 = math.tanh %234 : vector<2x16xf32>
    %cst_86 = arith.constant 1.000000e+00 : f32
    %236 = vector.broadcast %cst_86 : f32 to vector<2x16xf32>
    %237 = arith.subf %236, %230 : vector<2x16xf32>
    %238 = arith.mulf %237, %235 : vector<2x16xf32>
    %239 = arith.mulf %230, %122 : vector<2x16xf32>
    %240 = arith.addf %238, %239 : vector<2x16xf32>
    %c2 = arith.constant 2 : index
    %c0_87 = arith.constant 0 : index
    %c0_88 = arith.constant 0 : index
    %241 = vector.load %arg0[%c2, %c0_87, %c0_88] : memref<3x2x16xf32, #tpu.memory_space<vmem>>, vector<1x2x16xf32>
    %242 = vector.shape_cast %241 : vector<1x2x16xf32> to vector<2x16xf32>
    %243 = vector.broadcast %3 : vector<1x16xf32> to vector<2x16xf32>
    %244 = arith.mulf %44, %243 : vector<2x16xf32>
    %cst_89 = arith.constant dense<0.000000e+00> : vector<2xf32>
    %245 = vector.multi_reduction <add>, %244, %cst_89 [1] : vector<2x16xf32> to vector<2xf32>
    %246 = vector.shape_cast %245 : vector<2xf32> to vector<2x1xf32>
    %247 = vector.broadcast %3 : vector<1x16xf32> to vector<2x16xf32>
    %248 = arith.mulf %162, %247 : vector<2x16xf32>
    %cst_90 = arith.constant dense<0.000000e+00> : vector<2xf32>
    %249 = vector.multi_reduction <add>, %248, %cst_90 [1] : vector<2x16xf32> to vector<2xf32>
    %250 = vector.shape_cast %249 : vector<2xf32> to vector<2x1xf32>
    %251 = arith.maximumf %246, %250 : vector<2x1xf32>
    %252 = arith.subf %246, %251 : vector<2x1xf32>
    %253 = math.exp %252 : vector<2x1xf32>
    %254 = arith.subf %250, %251 : vector<2x1xf32>
    %255 = math.exp %254 : vector<2x1xf32>
    %256 = arith.addf %253, %255 : vector<2x1xf32>
    %cst_91 = arith.constant 1.000000e+00 : f32
    %257 = vector.broadcast %cst_91 : f32 to vector<2x1xf32>
    %258 = arith.divf %257, %256 : vector<2x1xf32>
    %259 = arith.mulf %253, %258 : vector<2x1xf32>
    %260 = vector.broadcast %259 : vector<2x1xf32> to vector<2x16xf32>
    %261 = arith.mulf %260, %44 : vector<2x16xf32>
    %262 = arith.mulf %255, %258 : vector<2x1xf32>
    %263 = vector.broadcast %262 : vector<2x1xf32> to vector<2x16xf32>
    %264 = arith.mulf %263, %162 : vector<2x16xf32>
    %265 = arith.addf %261, %264 : vector<2x16xf32>
    %266 = tpu.concatenate %242, %265 in 1 : vector<2x16xf32>, vector<2x16xf32> -> vector<2x32xf32>
    %c0_92 = arith.constant 0 : index
    %c0_93 = arith.constant 0 : index
    %267 = vector.load %arg6[%c0_92, %c0_93] : memref<32x48xf32, #tpu.memory_space<vmem>>, vector<32x48xf32>
    %cst_94 = arith.constant dense<0.000000e+00> : vector<2x48xf32>
    %268 = tpu.matmul %266, %267, %cst_94 {dimension_numbers = #tpu.dot_dimension_numbers<[1], [0], [0], [1], [0, 0, 1, 1], [], []>} : vector<2x32xf32>, vector<32x48xf32>, vector<2x48xf32> -> vector<2x48xf32>
    %c0_95 = arith.constant 0 : index
    %c0_96 = arith.constant 0 : index
    %269 = vector.load %arg8[%c0_95, %c0_96] : memref<1x48xf32, #tpu.memory_space<vmem>>, vector<1x48xf32>
    %270 = vector.broadcast %269 : vector<1x48xf32> to vector<2x48xf32>
    %271 = arith.addf %268, %270 : vector<2x48xf32>
    %c0_97 = arith.constant 0 : index
    %c0_98 = arith.constant 0 : index
    %272 = vector.load %arg7[%c0_97, %c0_98] : memref<16x48xf32, #tpu.memory_space<vmem>>, vector<16x48xf32>
    %cst_99 = arith.constant dense<0.000000e+00> : vector<4x48xf32>
    %273 = tpu.matmul %203, %272, %cst_99 {dimension_numbers = #tpu.dot_dimension_numbers<[1], [0], [0], [1], [0, 0, 1, 1], [], []>} : vector<4x16xf32>, vector<16x48xf32>, vector<4x48xf32> -> vector<4x48xf32>
    %c0_100 = arith.constant 0 : index
    %c0_101 = arith.constant 0 : index
    %274 = vector.load %arg9[%c0_100, %c0_101] : memref<1x48xf32, #tpu.memory_space<vmem>>, vector<1x48xf32>
    %275 = vector.broadcast %274 : vector<1x48xf32> to vector<4x48xf32>
    %276 = arith.addf %273, %275 : vector<4x48xf32>
    %277 = tpu.concatenate %271, %271 in 0 : vector<2x48xf32>, vector<2x48xf32> -> vector<4x48xf32>
    %278 = vector.extract_strided_slice %277 {offsets = [0, 0], sizes = [4, 16], strides = [1, 1]} : vector<4x48xf32> to vector<4x16xf32>
    %279 = vector.extract_strided_slice %276 {offsets = [0, 0], sizes = [4, 16], strides = [1, 1]} : vector<4x48xf32> to vector<4x16xf32>
    %280 = arith.addf %278, %279 : vector<4x16xf32>
    %281 = arith.negf %280 : vector<4x16xf32>
    %282 = math.exp %281 : vector<4x16xf32>
    %cst_102 = arith.constant 1.000000e+00 : f32
    %283 = vector.broadcast %cst_102 : f32 to vector<4x16xf32>
    %284 = arith.addf %283, %282 : vector<4x16xf32>
    %285 = arith.divf %283, %284 : vector<4x16xf32>
    %286 = vector.extract_strided_slice %277 {offsets = [0, 16], sizes = [4, 16], strides = [1, 1]} : vector<4x48xf32> to vector<4x16xf32>
    %287 = vector.extract_strided_slice %276 {offsets = [0, 16], sizes = [4, 16], strides = [1, 1]} : vector<4x48xf32> to vector<4x16xf32>
    %288 = arith.addf %286, %287 : vector<4x16xf32>
    %289 = arith.negf %288 : vector<4x16xf32>
    %290 = math.exp %289 : vector<4x16xf32>
    %cst_103 = arith.constant 1.000000e+00 : f32
    %291 = vector.broadcast %cst_103 : f32 to vector<4x16xf32>
    %292 = arith.addf %291, %290 : vector<4x16xf32>
    %293 = arith.divf %291, %292 : vector<4x16xf32>
    %294 = vector.extract_strided_slice %277 {offsets = [0, 32], sizes = [4, 16], strides = [1, 1]} : vector<4x48xf32> to vector<4x16xf32>
    %295 = vector.extract_strided_slice %276 {offsets = [0, 32], sizes = [4, 16], strides = [1, 1]} : vector<4x48xf32> to vector<4x16xf32>
    %296 = arith.mulf %285, %295 : vector<4x16xf32>
    %297 = arith.addf %294, %296 : vector<4x16xf32>
    %298 = math.tanh %297 : vector<4x16xf32>
    %cst_104 = arith.constant 1.000000e+00 : f32
    %299 = vector.broadcast %cst_104 : f32 to vector<4x16xf32>
    %300 = arith.subf %299, %293 : vector<4x16xf32>
    %301 = arith.mulf %300, %298 : vector<4x16xf32>
    %302 = arith.mulf %293, %203 : vector<4x16xf32>
    %303 = arith.addf %301, %302 : vector<4x16xf32>
    %304 = vector.extract_strided_slice %303 {offsets = [0, 0], sizes = [2, 16], strides = [1, 1]} : vector<4x16xf32> to vector<2x16xf32>
    %c0_105 = arith.constant 0 : index
    %c0_106 = arith.constant 0 : index
    %305 = vector.load %arg10[%c0_105, %c0_106] : memref<16x48xf32, #tpu.memory_space<vmem>>, vector<16x48xf32>
    %cst_107 = arith.constant dense<0.000000e+00> : vector<2x48xf32>
    %306 = tpu.matmul %304, %305, %cst_107 {dimension_numbers = #tpu.dot_dimension_numbers<[1], [0], [0], [1], [0, 0, 1, 1], [], []>} : vector<2x16xf32>, vector<16x48xf32>, vector<2x48xf32> -> vector<2x48xf32>
    %c0_108 = arith.constant 0 : index
    %c0_109 = arith.constant 0 : index
    %307 = vector.load %arg12[%c0_108, %c0_109] : memref<1x48xf32, #tpu.memory_space<vmem>>, vector<1x48xf32>
    %308 = vector.broadcast %307 : vector<1x48xf32> to vector<2x48xf32>
    %309 = arith.addf %306, %308 : vector<2x48xf32>
    %c0_110 = arith.constant 0 : index
    %c0_111 = arith.constant 0 : index
    %310 = vector.load %arg11[%c0_110, %c0_111] : memref<16x48xf32, #tpu.memory_space<vmem>>, vector<16x48xf32>
    %cst_112 = arith.constant dense<0.000000e+00> : vector<2x48xf32>
    %311 = tpu.matmul %240, %310, %cst_112 {dimension_numbers = #tpu.dot_dimension_numbers<[1], [0], [0], [1], [0, 0, 1, 1], [], []>} : vector<2x16xf32>, vector<16x48xf32>, vector<2x48xf32> -> vector<2x48xf32>
    %c0_113 = arith.constant 0 : index
    %c0_114 = arith.constant 0 : index
    %312 = vector.load %arg13[%c0_113, %c0_114] : memref<1x48xf32, #tpu.memory_space<vmem>>, vector<1x48xf32>
    %313 = vector.broadcast %312 : vector<1x48xf32> to vector<2x48xf32>
    %314 = arith.addf %311, %313 : vector<2x48xf32>
    %315 = vector.extract_strided_slice %309 {offsets = [0, 0], sizes = [2, 16], strides = [1, 1]} : vector<2x48xf32> to vector<2x16xf32>
    %316 = vector.extract_strided_slice %314 {offsets = [0, 0], sizes = [2, 16], strides = [1, 1]} : vector<2x48xf32> to vector<2x16xf32>
    %317 = arith.addf %315, %316 : vector<2x16xf32>
    %318 = arith.negf %317 : vector<2x16xf32>
    %319 = math.exp %318 : vector<2x16xf32>
    %cst_115 = arith.constant 1.000000e+00 : f32
    %320 = vector.broadcast %cst_115 : f32 to vector<2x16xf32>
    %321 = arith.addf %320, %319 : vector<2x16xf32>
    %322 = arith.divf %320, %321 : vector<2x16xf32>
    %323 = vector.extract_strided_slice %309 {offsets = [0, 16], sizes = [2, 16], strides = [1, 1]} : vector<2x48xf32> to vector<2x16xf32>
    %324 = vector.extract_strided_slice %314 {offsets = [0, 16], sizes = [2, 16], strides = [1, 1]} : vector<2x48xf32> to vector<2x16xf32>
    %325 = arith.addf %323, %324 : vector<2x16xf32>
    %326 = arith.negf %325 : vector<2x16xf32>
    %327 = math.exp %326 : vector<2x16xf32>
    %cst_116 = arith.constant 1.000000e+00 : f32
    %328 = vector.broadcast %cst_116 : f32 to vector<2x16xf32>
    %329 = arith.addf %328, %327 : vector<2x16xf32>
    %330 = arith.divf %328, %329 : vector<2x16xf32>
    %331 = vector.extract_strided_slice %309 {offsets = [0, 32], sizes = [2, 16], strides = [1, 1]} : vector<2x48xf32> to vector<2x16xf32>
    %332 = vector.extract_strided_slice %314 {offsets = [0, 32], sizes = [2, 16], strides = [1, 1]} : vector<2x48xf32> to vector<2x16xf32>
    %333 = arith.mulf %322, %332 : vector<2x16xf32>
    %334 = arith.addf %331, %333 : vector<2x16xf32>
    %335 = math.tanh %334 : vector<2x16xf32>
    %cst_117 = arith.constant 1.000000e+00 : f32
    %336 = vector.broadcast %cst_117 : f32 to vector<2x16xf32>
    %337 = arith.subf %336, %330 : vector<2x16xf32>
    %338 = arith.mulf %337, %335 : vector<2x16xf32>
    %339 = arith.mulf %330, %240 : vector<2x16xf32>
    %340 = arith.addf %338, %339 : vector<2x16xf32>
    %c2_118 = arith.constant 2 : index
    %c0_119 = arith.constant 0 : index
    %c0_120 = arith.constant 0 : index
    %341 = vector.load %arg0[%c2_118, %c0_119, %c0_120] : memref<3x2x16xf32, #tpu.memory_space<vmem>>, vector<1x2x16xf32>
    %342 = vector.shape_cast %341 : vector<1x2x16xf32> to vector<2x16xf32>
    %343 = tpu.concatenate %342, %0 in 1 : vector<2x16xf32>, vector<2x16xf32> -> vector<2x32xf32>
    %c0_121 = arith.constant 0 : index
    %c0_122 = arith.constant 0 : index
    %344 = vector.load %arg14[%c0_121, %c0_122] : memref<32x48xf32, #tpu.memory_space<vmem>>, vector<32x48xf32>
    %cst_123 = arith.constant dense<0.000000e+00> : vector<2x48xf32>
    %345 = tpu.matmul %343, %344, %cst_123 {dimension_numbers = #tpu.dot_dimension_numbers<[1], [0], [0], [1], [0, 0, 1, 1], [], []>} : vector<2x32xf32>, vector<32x48xf32>, vector<2x48xf32> -> vector<2x48xf32>
    %c0_124 = arith.constant 0 : index
    %c0_125 = arith.constant 0 : index
    %346 = vector.load %arg16[%c0_124, %c0_125] : memref<1x48xf32, #tpu.memory_space<vmem>>, vector<1x48xf32>
    %347 = vector.broadcast %346 : vector<1x48xf32> to vector<2x48xf32>
    %348 = arith.addf %345, %347 : vector<2x48xf32>
    %c0_126 = arith.constant 0 : index
    %c0_127 = arith.constant 0 : index
    %349 = vector.load %arg17[%c0_126, %c0_127] : memref<1x48xf32, #tpu.memory_space<vmem>>, vector<1x48xf32>
    %350 = vector.extract_strided_slice %348 {offsets = [0, 0], sizes = [2, 16], strides = [1, 1]} : vector<2x48xf32> to vector<2x16xf32>
    %351 = vector.extract_strided_slice %349 {offsets = [0, 0], sizes = [1, 16], strides = [1, 1]} : vector<1x48xf32> to vector<1x16xf32>
    %352 = vector.broadcast %351 : vector<1x16xf32> to vector<2x16xf32>
    %353 = arith.addf %350, %352 : vector<2x16xf32>
    %354 = arith.negf %353 : vector<2x16xf32>
    %355 = math.exp %354 : vector<2x16xf32>
    %cst_128 = arith.constant 1.000000e+00 : f32
    %356 = vector.broadcast %cst_128 : f32 to vector<2x16xf32>
    %357 = arith.addf %356, %355 : vector<2x16xf32>
    %358 = arith.divf %356, %357 : vector<2x16xf32>
    %359 = vector.extract_strided_slice %348 {offsets = [0, 16], sizes = [2, 16], strides = [1, 1]} : vector<2x48xf32> to vector<2x16xf32>
    %360 = vector.extract_strided_slice %349 {offsets = [0, 16], sizes = [1, 16], strides = [1, 1]} : vector<1x48xf32> to vector<1x16xf32>
    %361 = vector.broadcast %360 : vector<1x16xf32> to vector<2x16xf32>
    %362 = arith.addf %359, %361 : vector<2x16xf32>
    %363 = arith.negf %362 : vector<2x16xf32>
    %364 = math.exp %363 : vector<2x16xf32>
    %cst_129 = arith.constant 1.000000e+00 : f32
    %365 = vector.broadcast %cst_129 : f32 to vector<2x16xf32>
    %366 = arith.addf %365, %364 : vector<2x16xf32>
    %367 = arith.divf %365, %366 : vector<2x16xf32>
    %368 = vector.extract_strided_slice %348 {offsets = [0, 32], sizes = [2, 16], strides = [1, 1]} : vector<2x48xf32> to vector<2x16xf32>
    %369 = vector.extract_strided_slice %349 {offsets = [0, 32], sizes = [1, 16], strides = [1, 1]} : vector<1x48xf32> to vector<1x16xf32>
    %370 = vector.broadcast %369 : vector<1x16xf32> to vector<2x16xf32>
    %371 = arith.mulf %358, %370 : vector<2x16xf32>
    %372 = arith.addf %368, %371 : vector<2x16xf32>
    %373 = math.tanh %372 : vector<2x16xf32>
    %cst_130 = arith.constant 1.000000e+00 : f32
    %374 = vector.broadcast %cst_130 : f32 to vector<2x16xf32>
    %375 = arith.subf %374, %367 : vector<2x16xf32>
    %376 = arith.mulf %375, %373 : vector<2x16xf32>
    %377 = arith.mulf %367, %1 : vector<2x16xf32>
    %378 = arith.addf %376, %377 : vector<2x16xf32>
    %c0_131 = arith.constant 0 : index
    %c0_132 = arith.constant 0 : index
    %379 = vector.load %arg18[%c0_131, %c0_132] : memref<16x48xf32, #tpu.memory_space<vmem>>, vector<16x48xf32>
    %cst_133 = arith.constant dense<0.000000e+00> : vector<2x48xf32>
    %380 = tpu.matmul %378, %379, %cst_133 {dimension_numbers = #tpu.dot_dimension_numbers<[1], [0], [0], [1], [0, 0, 1, 1], [], []>} : vector<2x16xf32>, vector<16x48xf32>, vector<2x48xf32> -> vector<2x48xf32>
    %c0_134 = arith.constant 0 : index
    %c0_135 = arith.constant 0 : index
    %381 = vector.load %arg20[%c0_134, %c0_135] : memref<1x48xf32, #tpu.memory_space<vmem>>, vector<1x48xf32>
    %382 = vector.broadcast %381 : vector<1x48xf32> to vector<2x48xf32>
    %383 = arith.addf %380, %382 : vector<2x48xf32>
    %c0_136 = arith.constant 0 : index
    %c0_137 = arith.constant 0 : index
    %384 = vector.load %arg21[%c0_136, %c0_137] : memref<1x48xf32, #tpu.memory_space<vmem>>, vector<1x48xf32>
    %385 = vector.extract_strided_slice %383 {offsets = [0, 0], sizes = [2, 16], strides = [1, 1]} : vector<2x48xf32> to vector<2x16xf32>
    %386 = vector.extract_strided_slice %384 {offsets = [0, 0], sizes = [1, 16], strides = [1, 1]} : vector<1x48xf32> to vector<1x16xf32>
    %387 = vector.broadcast %386 : vector<1x16xf32> to vector<2x16xf32>
    %388 = arith.addf %385, %387 : vector<2x16xf32>
    %389 = arith.negf %388 : vector<2x16xf32>
    %390 = math.exp %389 : vector<2x16xf32>
    %cst_138 = arith.constant 1.000000e+00 : f32
    %391 = vector.broadcast %cst_138 : f32 to vector<2x16xf32>
    %392 = arith.addf %391, %390 : vector<2x16xf32>
    %393 = arith.divf %391, %392 : vector<2x16xf32>
    %394 = vector.extract_strided_slice %383 {offsets = [0, 16], sizes = [2, 16], strides = [1, 1]} : vector<2x48xf32> to vector<2x16xf32>
    %395 = vector.extract_strided_slice %384 {offsets = [0, 16], sizes = [1, 16], strides = [1, 1]} : vector<1x48xf32> to vector<1x16xf32>
    %396 = vector.broadcast %395 : vector<1x16xf32> to vector<2x16xf32>
    %397 = arith.addf %394, %396 : vector<2x16xf32>
    %398 = arith.negf %397 : vector<2x16xf32>
    %399 = math.exp %398 : vector<2x16xf32>
    %cst_139 = arith.constant 1.000000e+00 : f32
    %400 = vector.broadcast %cst_139 : f32 to vector<2x16xf32>
    %401 = arith.addf %400, %399 : vector<2x16xf32>
    %402 = arith.divf %400, %401 : vector<2x16xf32>
    %403 = vector.extract_strided_slice %383 {offsets = [0, 32], sizes = [2, 16], strides = [1, 1]} : vector<2x48xf32> to vector<2x16xf32>
    %404 = vector.extract_strided_slice %384 {offsets = [0, 32], sizes = [1, 16], strides = [1, 1]} : vector<1x48xf32> to vector<1x16xf32>
    %405 = vector.broadcast %404 : vector<1x16xf32> to vector<2x16xf32>
    %406 = arith.mulf %393, %405 : vector<2x16xf32>
    %407 = arith.addf %403, %406 : vector<2x16xf32>
    %408 = math.tanh %407 : vector<2x16xf32>
    %cst_140 = arith.constant 1.000000e+00 : f32
    %409 = vector.broadcast %cst_140 : f32 to vector<2x16xf32>
    %410 = arith.subf %409, %402 : vector<2x16xf32>
    %411 = arith.mulf %410, %408 : vector<2x16xf32>
    %412 = arith.mulf %402, %2 : vector<2x16xf32>
    %413 = arith.addf %411, %412 : vector<2x16xf32>
    %414 = tpu.concatenate %340, %413 in 1 : vector<2x16xf32>, vector<2x16xf32> -> vector<2x32xf32>
    %c0_141 = arith.constant 0 : index
    %c0_142 = arith.constant 0 : index
    %415 = vector.load %arg22[%c0_141, %c0_142] : memref<32x32xf32, #tpu.memory_space<vmem>>, vector<32x32xf32>
    %cst_143 = arith.constant dense<0.000000e+00> : vector<2x32xf32>
    %416 = tpu.matmul %414, %415, %cst_143 {dimension_numbers = #tpu.dot_dimension_numbers<[1], [0], [0], [1], [0, 0, 1, 1], [], []>} : vector<2x32xf32>, vector<32x32xf32>, vector<2x32xf32> -> vector<2x32xf32>
    %c0_144 = arith.constant 0 : index
    %c0_145 = arith.constant 0 : index
    %417 = vector.load %arg23[%c0_144, %c0_145] : memref<1x32xf32, #tpu.memory_space<vmem>>, vector<1x32xf32>
    %418 = vector.broadcast %417 : vector<1x32xf32> to vector<2x32xf32>
    %419 = arith.addf %416, %418 : vector<2x32xf32>
    %cst_146 = arith.constant 0.000000e+00 : f32
    %420 = vector.broadcast %cst_146 : f32 to vector<2x32xf32>
    %421 = arith.maximumf %419, %420 : vector<2x32xf32>
    %c0_147 = arith.constant 0 : index
    %c0_148 = arith.constant 0 : index
    %422 = vector.load %arg24[%c0_147, %c0_148] : memref<32x7xf32, #tpu.memory_space<vmem>>, vector<32x7xf32>
    %cst_149 = arith.constant dense<0.000000e+00> : vector<2x7xf32>
    %423 = tpu.matmul %421, %422, %cst_149 {dimension_numbers = #tpu.dot_dimension_numbers<[1], [0], [0], [1], [0, 0, 1, 1], [], []>} : vector<2x32xf32>, vector<32x7xf32>, vector<2x7xf32> -> vector<2x7xf32>
    %c0_150 = arith.constant 0 : index
    %c0_151 = arith.constant 0 : index
    %424 = vector.load %arg25[%c0_150, %c0_151] : memref<1x7xf32, #tpu.memory_space<vmem>>, vector<1x7xf32>
    %425 = vector.broadcast %424 : vector<1x7xf32> to vector<2x7xf32>
    %426 = arith.addf %423, %425 : vector<2x7xf32>
    %cst_152 = arith.constant dense<0xFF800000> : vector<2xf32>
    %427 = vector.multi_reduction <maximumf>, %426, %cst_152 [1] : vector<2x7xf32> to vector<2xf32>
    %428 = vector.shape_cast %427 : vector<2xf32> to vector<2x1xf32>
    %429 = vector.broadcast %428 : vector<2x1xf32> to vector<2x7xf32>
    %430 = arith.subf %426, %429 : vector<2x7xf32>
    %431 = math.exp %430 : vector<2x7xf32>
    %cst_153 = arith.constant dense<0.000000e+00> : vector<2xf32>
    %432 = vector.multi_reduction <add>, %431, %cst_153 [1] : vector<2x7xf32> to vector<2xf32>
    %433 = vector.shape_cast %432 : vector<2xf32> to vector<2x1xf32>
    %434 = math.log %433 : vector<2x1xf32>
    %435 = arith.addf %434, %428 : vector<2x1xf32>
    %436 = vector.broadcast %435 : vector<2x1xf32> to vector<2x7xf32>
    %437 = arith.subf %426, %436 : vector<2x7xf32>
    %c0_154 = arith.constant 0 : index
    %c0_155 = arith.constant 0 : index
    %438 = vector.load %arg26[%c0_154, %c0_155] : memref<2x7xf32, #tpu.memory_space<vmem>>, vector<2x7xf32>
    tpu.vector_store %arg26[%c0_154, %c0_155], %437 {strides = array<i32>} : memref<2x7xf32, #tpu.memory_space<vmem>>, vector<2x7xf32>,
    return
  }
}

</mosaic_0001>

<llo_original>
// kernel: bi_e2e_forward.2
$region0: #{bi_e2e_forward.2}
  #allocation0 [shape = 'u32[]', space=smem, size = 0x4, offset = 0x4, fixed_abs, tag = 'smem constant byte address 0x4 - core index']
  #allocation1 [shape = 'u32[144,128]{1,0:T(1,128)}', space=vmem, size = 0x12000, scoped, tag = 'internal scratch']
  #allocation2 [shape = 'f32[6,16]{1,0:T(8,128)}', space=vmem, size = 0x1000, scoped, tag = 'scratch operand']
  %s0 = inlined_call_operand.vmem [shape: f32[8,6,32], index: 0, kind: input, shape index: {}]
  %s1 = inlined_call_operand.vmem [shape: f32[32,48], index: 1, kind: input, shape index: {}]
  %s2 = inlined_call_operand.vmem [shape: f32[16,48], index: 2, kind: input, shape index: {}]
  %s3 = inlined_call_operand.vmem [shape: f32[1,48], index: 3, kind: input, shape index: {}]
  %s4 = inlined_call_operand.vmem [shape: f32[1,48], index: 4, kind: input, shape index: {}]
  %s5 = inlined_call_operand.vmem [shape: f32[6,16], index: 5, kind: output, shape index: {}]
  %s6 = sld [smem:[#allocation0]]
  $region61: #{bi_e2e_forward.2} parent=0
    _
  %s8 = ssub.s32 1, %s6
  %s9 = scalar_select 0, %s8, %s6
  loop: start=0, step=1, limit=10
  $region2: #{bi_e2e_forward.2} parent=0 // loop_pre_header
    _
  $region3: #{bi_e2e_forward.2} parent=0 // loop_header
    %s11 = sphi 0, %s15
    %p12 = scmp.ge.s32.totalorder %s11, 10
    %s21 = sphi 0, %s23
    %s24 = sphi 0, %s21
    %s25 = sphi 0, %s24
    %s41 = sphi 0, %s25
    %s45 = sphi 0, %s45
    %s47 = sphi 0, %s45
    %s48 = sphi 0, %s47
    %s62 = sphi 0, %s48
    %s66 = sphi 0, %s66
    %s68 = sphi 0, %s66
    %s69 = sphi 0, %s68
    %s83 = sphi 0, %s69
    %s87 = sphi 0, %s87
    %s89 = sphi 0, %s87
    %s90 = sphi 0, %s89
    %s104 = sphi 0, %s90
    %s108 = sphi 0, %s108
    %s110 = sphi 0, %s108
    %s111 = sphi 0, %s110
    %s125 = sphi 0, %s111
    %s129 = sphi 0, %s129
    %s131 = sphi 0, %s129
    %s132 = sphi 0, %s131
    %s146 = sphi 0, %s132
  $region4: #{bi_e2e_forward.2} parent=0 // loop_header_branch
    %14 = sbr.rel (%p12) target = $region8
  $region5: #{bi_e2e_forward.2} parent=0 // loop_body
    %s16 = ssub.s32 %s11, 1
    %s17 = ssub.s32 %s11, 2
    %s18 = sadd.s32 %s11, 1
    %s19 = ssub.s32 %s11, %s18
    %p20 = scmp.eq.s32.totalorder %s19, 0
    %s22 = sadd.s32 %s21, 1
    %s23 = scalar_select %p20, %s21, %s22
    %p26 = pneg %p20
    %p27 = scmp.eq.s32.totalorder %s11, 7
    %p28 = por %p26, %p27
    %p29 = scmp.ne.s32.totalorder %s21, %s24
    %p30 = scmp.eq.s32.totalorder %s11, 0
    %p31 = por %p29, %p30
    %p32 = scmp.ne.s32.totalorder %s21, %s24
    %p33 = scmp.eq.s32.totalorder %s16, 7
    %p34 = por %p32, %p33
    %p35 = scmp.ne.s32.totalorder %s24, %s25
    %p36 = scmp.eq.s32.totalorder %s16, 0
    %p37 = por %p35, %p36
    %p38 = scmp.ne.s32.totalorder %s24, %s25
    %p39 = scmp.eq.s32.totalorder %s17, 7
    %p40 = por %p38, %p39
    %p42 = scmp.ne.s32.totalorder %s25, %s41
    %p43 = scmp.eq.s32.totalorder %s17, 0
    %p44 = por %p42, %p43
    %s46 = sadd.s32 %s45, 1
    %p49 = scmp.eq.s32.totalorder %s11, 7
    %p50 = scmp.ne.s32.totalorder %s45, %s47
    %p51 = scmp.eq.s32.totalorder %s11, 0
    %p52 = por %p50, %p51
    %p53 = scmp.ne.s32.totalorder %s45, %s47
    %p54 = scmp.eq.s32.totalorder %s16, 7
    %p55 = por %p53, %p54
    %p56 = scmp.ne.s32.totalorder %s47, %s48
    %p57 = scmp.eq.s32.totalorder %s16, 0
    %p58 = por %p56, %p57
    %p59 = scmp.ne.s32.totalorder %s47, %s48
    %p60 = scmp.eq.s32.totalorder %s17, 7
    %p61 = por %p59, %p60
    %p63 = scmp.ne.s32.totalorder %s48, %s62
    %p64 = scmp.eq.s32.totalorder %s17, 0
    %p65 = por %p63, %p64
    %s67 = sadd.s32 %s66, 1
    %p70 = scmp.eq.s32.totalorder %s11, 7
    %p71 = scmp.ne.s32.totalorder %s66, %s68
    %p72 = scmp.eq.s32.totalorder %s11, 0
    %p73 = por %p71, %p72
    %p74 = scmp.ne.s32.totalorder %s66, %s68
    %p75 = scmp.eq.s32.totalorder %s16, 7
    %p76 = por %p74, %p75
    %p77 = scmp.ne.s32.totalorder %s68, %s69
    %p78 = scmp.eq.s32.totalorder %s16, 0
    %p79 = por %p77, %p78
    %p80 = scmp.ne.s32.totalorder %s68, %s69
    %p81 = scmp.eq.s32.totalorder %s17, 7
    %p82 = por %p80, %p81
    %p84 = scmp.ne.s32.totalorder %s69, %s83
    %p85 = scmp.eq.s32.totalorder %s17, 0
    %p86 = por %p84, %p85
    %s88 = sadd.s32 %s87, 1
    %p91 = scmp.eq.s32.totalorder %s11, 7
    %p92 = scmp.ne.s32.totalorder %s87, %s89
    %p93 = scmp.eq.s32.totalorder %s11, 0
    %p94 = por %p92, %p93
    %p95 = scmp.ne.s32.totalorder %s87, %s89
    %p96 = scmp.eq.s32.totalorder %s16, 7
    %p97 = por %p95, %p96
    %p98 = scmp.ne.s32.totalorder %s89, %s90
    %p99 = scmp.eq.s32.totalorder %s16, 0
    %p100 = por %p98, %p99
    %p101 = scmp.ne.s32.totalorder %s89, %s90
    %p102 = scmp.eq.s32.totalorder %s17, 7
    %p103 = por %p101, %p102
    %p105 = scmp.ne.s32.totalorder %s90, %s104
    %p106 = scmp.eq.s32.totalorder %s17, 0
    %p107 = por %p105, %p106
    %s109 = sadd.s32 %s108, 1
    %p112 = scmp.eq.s32.totalorder %s11, 7
    %p113 = scmp.ne.s32.totalorder %s108, %s110
    %p114 = scmp.eq.s32.totalorder %s11, 0
    %p115 = por %p113, %p114
    %p116 = scmp.ne.s32.totalorder %s108, %s110
    %p117 = scmp.eq.s32.totalorder %s16, 7
    %p118 = por %p116, %p117
    %p119 = scmp.ne.s32.totalorder %s110, %s111
    %p120 = scmp.eq.s32.totalorder %s16, 0
    %p121 = por %p119, %p120
    %p122 = scmp.ne.s32.totalorder %s110, %s111
    %p123 = scmp.eq.s32.totalorder %s17, 7
    %p124 = por %p122, %p123
    %p126 = scmp.ne.s32.totalorder %s111, %s125
    %p127 = scmp.eq.s32.totalorder %s17, 0
    %p128 = por %p126, %p127
    %s130 = sadd.s32 %s129, 1
    %p133 = scmp.eq.s32.totalorder %s11, 7
    %p134 = scmp.ne.s32.totalorder %s129, %s131
    %p135 = scmp.eq.s32.totalorder %s11, 0
    %p136 = por %p134, %p135
    %p137 = scmp.ne.s32.totalorder %s129, %s131
    %p138 = scmp.eq.s32.totalorder %s16, 7
    %p139 = por %p137, %p138
    %p140 = scmp.ne.s32.totalorder %s131, %s132
    %p141 = scmp.eq.s32.totalorder %s16, 0
    %p142 = por %p140, %p141
    %p143 = scmp.ne.s32.totalorder %s131, %s132
    %p144 = scmp.eq.s32.totalorder %s17, 7
    %p145 = por %p143, %p144
    %p147 = scmp.ne.s32.totalorder %s132, %s146
    %p148 = scmp.eq.s32.totalorder %s17, 0
    %p149 = por %p147, %p148
    %p150 = scmp.le.s32.totalorder 1, %s11
    %p151 = scmp.lt.s32.totalorder %s11, 9
    %p152 = pnand %p150, %p151
    %p153 = pneg %p152
    // Predicated region
    $region9: #{bi_e2e_forward.2} parent=5 // pred_check
      _
    $region10: #{bi_e2e_forward.2} parent=5 // pred_check_branch
      %155 = sbr.rel (%p152) target = $region12
    $region11: #{bi_e2e_forward.2} parent=5 // pred_region
      %s156 = ssub.s32 %s11, 1
      // Predicated region
      $region13: #{bi_e2e_forward.2} parent=11 // pred_check
        %p157 = pneg %p58
      $region14: #{bi_e2e_forward.2} parent=11 // pred_check_branch
        %159 = sbr.rel (%p157) target = $region16
      $region15: #{bi_e2e_forward.2} parent=11 // pred_region
        _
      $region16: #{bi_e2e_forward.2} parent=11 // pred_fallthru
        _
      // Predicated region
      $region17: #{bi_e2e_forward.2} parent=11 // pred_check
        %p160 = pneg %p79
      $region18: #{bi_e2e_forward.2} parent=11 // pred_check_branch
        %162 = sbr.rel (%p160) target = $region20
      $region19: #{bi_e2e_forward.2} parent=11 // pred_region
        _
      $region20: #{bi_e2e_forward.2} parent=11 // pred_fallthru
        _
      // Predicated region
      $region21: #{bi_e2e_forward.2} parent=11 // pred_check
        %p163 = pneg %p100
      $region22: #{bi_e2e_forward.2} parent=11 // pred_check_branch
        %165 = sbr.rel (%p163) target = $region24
      $region23: #{bi_e2e_forward.2} parent=11 // pred_region
        _
      $region24: #{bi_e2e_forward.2} parent=11 // pred_fallthru
        _
      // Predicated region
      $region25: #{bi_e2e_forward.2} parent=11 // pred_check
        %p166 = pneg %p121
      $region26: #{bi_e2e_forward.2} parent=11 // pred_check_branch
        %168 = sbr.rel (%p166) target = $region28
      $region27: #{bi_e2e_forward.2} parent=11 // pred_region
        _
      $region28: #{bi_e2e_forward.2} parent=11 // pred_fallthru
        _
    $region12: #{bi_e2e_forward.2} parent=5 // pred_fallthru
      _
    %p169 = scmp.lt.s32.totalorder %s11, 8
    // Predicated region
    $region29: #{bi_e2e_forward.2} parent=5 // pred_check
      %p170 = pneg %p169
    $region30: #{bi_e2e_forward.2} parent=5 // pred_check_branch
      %172 = sbr.rel (%p170) target = $region32
    $region31: #{bi_e2e_forward.2} parent=5 // pred_region
      // Predicated region
      $region33: #{bi_e2e_forward.2} parent=31 // pred_check
        %p173 = pneg %p31
      $region34: #{bi_e2e_forward.2} parent=31 // pred_check_branch
        %175 = sbr.rel (%p173) target = $region36
      $region35: #{bi_e2e_forward.2} parent=31 // pred_region
        %p176 = scmp.lt.s32.totalorder %s11, 7
        %s177 = scalar_select %p176, %s11, 7
        %s178 = smul.addr %s177, 8
        %s179 = scalar_lea.vmem %s0, %s178
      $region36: #{bi_e2e_forward.2} parent=31 // pred_fallthru
        _
    $region32: #{bi_e2e_forward.2} parent=5 // pred_fallthru
      _
    %p180 = scmp.le.s32.totalorder 1, %s11
    %p181 = scmp.lt.s32.totalorder %s11, 9
    %p182 = pnand %p180, %p181
    %p183 = pneg %p182
    // Predicated region
    $region37: #{bi_e2e_forward.2} parent=5 // pred_check
      _
    $region38: #{bi_e2e_forward.2} parent=5 // pred_check_branch
      %185 = sbr.rel (%p182) target = $region40
    $region39: #{bi_e2e_forward.2} parent=5 // pred_region
      %s186 = ssub.s32 %s11, 1
      %p187 = scmp.lt.s32.totalorder %s16, 7
      %s188 = scalar_select %p187, %s16, 7
      %s189 = smul.addr %s188, 8
      %s190 = scalar_lea.vmem %s0, %s189
      %p191 = pneg %p37
      %p192 = pneg %p34
      %p193 = pneg %p58
      %p194 = pneg %p55
      %p195 = pneg %p79
      %p196 = pneg %p76
      %p197 = pneg %p100
      %p198 = pneg %p97
      %p199 = pneg %p121
      %p200 = pneg %p118
      %p201 = pneg %p142
      %p202 = pneg %p139
      %p203 = scmp.lt.s32.totalorder %s16, 7
      %s204 = scalar_select %p203, %s16, 7
      %s205 = smul.addr %s204, 8
      %s206 = scalar_lea.vmem %s0, %s205
      %p207 = scmp.eq.s32.totalorder %s16, 0
      // Predicated region
      $region41: #{bi_e2e_forward.2} parent=39 // pred_check
        %p208 = pneg %p207
      $region42: #{bi_e2e_forward.2} parent=39 // pred_check_branch
        %210 = sbr.rel (%p208) target = $region44
      $region43: #{bi_e2e_forward.2} parent=39 // pred_region
        %vm211 = vcmask 128000
        %212 = vst.msk [vmem:[#allocation2] sm:$0x3f] %vm211, 0.0
      $region44: #{bi_e2e_forward.2} parent=39 // pred_fallthru
        _
      %v213 = vld [vmem:[%s206] sm:$0x3f]
      %v214 = vld [vmem:[#allocation2] sm:$0x3f]
      %v215 = vld [vmem:[%s1] sm:$0xff]
      %v216 = vld [vmem:[%s1 + $0x8] sm:$0xff]
      %v217 = vld [vmem:[%s1 + $0x10] sm:$0xff]
      %v218 = vld [vmem:[%s1 + $0x18] sm:$0xff]
      %v219 = vld [vmem:[%s3] sm:$0x1]
      %v221 = vlaneseq
      %v222 = vshrl.u32 %v221, 7
      %v223 = vsub.s32 0, %v222
      %v224 = vrot.slane %v219, %v223
      %vm226 = vcmask 261120
      %v228 = vsel %vm226, %v213, 0
      %230 = vmatprep.subr.mxu0 0.0
      %231 = vmatpush1.msra.mxu0 0.0
      %232 = vmatprep.subr.mxu0 0.0
      %233 = vmatpush1.msra.mxu0 0.0
      %234 = vmatprep.subr.mxu0 0.0
      %235 = vmatpush1.msra.mxu0 0.0
      %236 = vmatprep.subr.mxu0 0.0
      %237 = vmatpush1.msra.mxu0 0.0
      %238 = vmatprep.subr.mxu0 0.0
      %239 = vmatpush1.msra.mxu0 0.0
      %240 = vmatprep.subr.mxu0 0.0
      %241 = vmatpush1.msra.mxu0 0.0
      %242 = vmatprep.subr.mxu0 0.0
      %243 = vmatpush1.msra.mxu0 0.0
      %244 = vmatprep.subr.mxu0 0.0
      %245 = vmatpush1.msra.mxu0 0.0
      %246 = vmatprep.subr.mxu0 0.0
      %247 = vmatpush1.msra.mxu0 0.0
      %248 = vmatprep.subr.mxu0 0.0
      %249 = vmatpush1.msra.mxu0 0.0
      %250 = vmatprep.subr.mxu0 0.0
      %251 = vmatpush1.msra.mxu0 0.0
      %252 = vmatprep.subr.mxu0 0.0
      %253 = vmatpush1.msra.mxu0 0.0
      %254 = vmatprep.subr.mxu0 0.0
      %255 = vmatpush1.msra.mxu0 %v218
      %256 = vmatprep.subr.mxu0 0.0
      %257 = vmatpush1.msra.mxu0 %v217
      %258 = vmatprep.subr.mxu0 0.0
      %259 = vmatpush1.msra.mxu0 %v216
      %260 = vmatprep.subr.mxu0 0.0
      %261 = vmatpush1.msra.mxu0 %v215
      %262 = vmatprep.subr.mxu0 0.0
      %263 = vmatpush2.msra.mxu0 0.0
      %264 = vmatprep.subr.mxu0 0.0
      %265 = vmatpush2.msra.mxu0 0.0
      %266 = vmatprep.subr.mxu0 0.0
      %267 = vmatpush2.msra.mxu0 0.0
      %268 = vmatprep.subr.mxu0 0.0
      %269 = vmatpush2.msra.mxu0 0.0
      %270 = vmatprep.subr.mxu0 0.0
      %271 = vmatpush2.msra.mxu0 0.0
      %272 = vmatprep.subr.mxu0 0.0
      %273 = vmatpush2.msra.mxu0 0.0
      %274 = vmatprep.subr.mxu0 0.0
      %275 = vmatpush2.msra.mxu0 0.0
      %276 = vmatprep.subr.mxu0 0.0
      %277 = vmatpush2.msra.mxu0 0.0
      %278 = vmatprep.subr.mxu0 0.0
      %279 = vmatpush2.msra.mxu0 0.0
      %280 = vmatprep.subr.mxu0 0.0
      %281 = vmatpush2.msra.mxu0 0.0
      %282 = vmatprep.subr.mxu0 0.0
      %283 = vmatpush2.msra.mxu0 0.0
      %284 = vmatprep.subr.mxu0 0.0
      %285 = vmatpush2.msra.mxu0 0.0
      %286 = vmatprep.subr.mxu0 0.0
      %287 = vmatpush2.msra.mxu0 0.0
      %288 = vmatprep.subr.mxu0 0.0
      %289 = vmatpush2.msra.mxu0 0.0
      %290 = vmatprep.subr.mxu0 0.0
      %291 = vmatpush2.msra.mxu0 0.0
      %292 = vmatprep.subr.mxu0 0.0
      %293 = vmatpush2.msra.mxu0 0.0
      %294 = vmatprep.mubr.f32.mxu0 0.0
      %295 = vmatmul.mubr.f32.gmra.mxu0 %v228
      %v296 = vpop.f32.mrf.mxu0
      %v297 = vadd.f32 %v224, %v296
      %v298 = vpop.f32.mrf.mxu0
      %299 = vdwg.mxu0
      %v300 = vld [vmem:[%s2] sm:$0xff]
      %v301 = vld [vmem:[%s2 + $0x8] sm:$0xff]
      %v302 = vld [vmem:[%s4] sm:$0x1]
      %v304 = vlaneseq
      %v305 = vshrl.u32 %v304, 7
      %v306 = vsub.s32 0, %v305
      %v307 = vrot.slane %v302, %v306
      %vm309 = vcmask 130048
      %v311 = vsel %vm309, %v214, 0
      %313 = vmatprep.subr.mxu0 0.0
      %314 = vmatpush1.msra.mxu0 0.0
      %315 = vmatprep.subr.mxu0 0.0
      %316 = vmatpush1.msra.mxu0 0.0
      %317 = vmatprep.subr.mxu0 0.0
      %318 = vmatpush1.msra.mxu0 0.0
      %319 = vmatprep.subr.mxu0 0.0
      %320 = vmatpush1.msra.mxu0 0.0
      %321 = vmatprep.subr.mxu0 0.0
      %322 = vmatpush1.msra.mxu0 0.0
      %323 = vmatprep.subr.mxu0 0.0
      %324 = vmatpush1.msra.mxu0 0.0
      %325 = vmatprep.subr.mxu0 0.0
      %326 = vmatpush1.msra.mxu0 0.0
      %327 = vmatprep.subr.mxu0 0.0
      %328 = vmatpush1.msra.mxu0 0.0
      %329 = vmatprep.subr.mxu0 0.0
      %330 = vmatpush1.msra.mxu0 0.0
      %331 = vmatprep.subr.mxu0 0.0
      %332 = vmatpush1.msra.mxu0 0.0
      %333 = vmatprep.subr.mxu0 0.0
      %334 = vmatpush1.msra.mxu0 0.0
      %335 = vmatprep.subr.mxu0 0.0
      %336 = vmatpush1.msra.mxu0 0.0
      %337 = vmatprep.subr.mxu0 0.0
      %338 = vmatpush1.msra.mxu0 0.0
      %339 = vmatprep.subr.mxu0 0.0
      %340 = vmatpush1.msra.mxu0 0.0
      %341 = vmatprep.subr.mxu0 0.0
      %342 = vmatpush1.msra.mxu0 %v301
      %343 = vmatprep.subr.mxu0 0.0
      %344 = vmatpush1.msra.mxu0 %v300
      %345 = vmatprep.subr.mxu0 0.0
      %346 = vmatpush2.msra.mxu0 0.0
      %347 = vmatprep.subr.mxu0 0.0
      %348 = vmatpush2.msra.mxu0 0.0
      %349 = vmatprep.subr.mxu0 0.0
      %350 = vmatpush2.msra.mxu0 0.0
      %351 = vmatprep.subr.mxu0 0.0
      %352 = vmatpush2.msra.mxu0 0.0
      %353 = vmatprep.subr.mxu0 0.0
      %354 = vmatpush2.msra.mxu0 0.0
      %355 = vmatprep.subr.mxu0 0.0
      %356 = vmatpush2.msra.mxu0 0.0
      %357 = vmatprep.subr.mxu0 0.0
      %358 = vmatpush2.msra.mxu0 0.0
      %359 = vmatprep.subr.mxu0 0.0
      %360 = vmatpush2.msra.mxu0 0.0
      %361 = vmatprep.subr.mxu0 0.0
      %362 = vmatpush2.msra.mxu0 0.0
      %363 = vmatprep.subr.mxu0 0.0
      %364 = vmatpush2.msra.mxu0 0.0
      %365 = vmatprep.subr.mxu0 0.0
      %366 = vmatpush2.msra.mxu0 0.0
      %367 = vmatprep.subr.mxu0 0.0
      %368 = vmatpush2.msra.mxu0 0.0
      %369 = vmatprep.subr.mxu0 0.0
      %370 = vmatpush2.msra.mxu0 0.0
      %371 = vmatprep.subr.mxu0 0.0
      %372 = vmatpush2.msra.mxu0 0.0
      %373 = vmatprep.subr.mxu0 0.0
      %374 = vmatpush2.msra.mxu0 0.0
      %375 = vmatprep.subr.mxu0 0.0
      %376 = vmatpush2.msra.mxu0 0.0
      %377 = vmatprep.mubr.f32.mxu0 0.0
      %378 = vmatmul.mubr.f32.gmra.mxu0 %v311
      %v379 = vpop.f32.mrf.mxu0
      %v380 = vadd.f32 %v307, %v379
      %v381 = vpop.f32.mrf.mxu0
      %382 = vdwg.mxu0
      %v383 = vadd.f32 %v297, %v380
      %v384 = vxor.u32 %v383, 2147483648
      %v385 = vmul.f32 %v384, 1.442695
      %v386 = vpow.pop %v385
      %v387 = vadd.f32 %v386, 1.0
      %v388 = vrcp.pop %v387
      %v389 = vmul.f32 1.0, %v388
      %391 = vrot.lane.b32.xlu0 %v380, 96
      %v392 = vpop.permute.xlu0 %391
      %v394 = vmul.f32 %v389, %v392
      %396 = vrot.lane.b32.xlu0 %v394, 32
      %v397 = vpop.permute.xlu0 %396
      %v399 = vadd.f32 %v297, %v397
      %v400 = vtanh.pop %v399
      %v401 = vsub.f32 1.0, %v389
      %403 = vrot.lane.b32.xlu0 %v400, 112
      %v404 = vpop.permute.xlu0 %403
      %v406 = vmul.f32 %v401, %v404
      %407 = vrot.lane.b32.xlu0 %v214, 16
      %v408 = vpop.permute.xlu0 %407
      %v410 = vmul.f32 %v389, %v408
      %v411 = vadd.f32 %v406, %v410
      %413 = vrot.lane.b32.xlu0 %v411, 112
      %v414 = vpop.permute.xlu0 %413
      %vm416 = vcmask 128000
      %417 = vst.msk [vmem:[#allocation2] sm:$0x3f] %vm416, %v414
      %p418 = scmp.eq.s32.totalorder %s16, 7
      // Predicated region
      $region45: #{bi_e2e_forward.2} parent=39 // pred_check
        %p419 = pneg %p418
      $region46: #{bi_e2e_forward.2} parent=39 // pred_check_branch
        %421 = sbr.rel (%p419) target = $region48
      $region47: #{bi_e2e_forward.2} parent=39 // pred_region
        %422 = vst.msk [vmem:[%s5] sm:$0x3f] %vm416, %v414
      $region48: #{bi_e2e_forward.2} parent=39 // pred_fallthru
        _
      // Predicated region
      $region49: #{bi_e2e_forward.2} parent=39 // pred_check
        %p423 = pneg %p139
      $region50: #{bi_e2e_forward.2} parent=39 // pred_check_branch
        %425 = sbr.rel (%p423) target = $region52
      $region51: #{bi_e2e_forward.2} parent=39 // pred_region
        _
      $region52: #{bi_e2e_forward.2} parent=39 // pred_fallthru
        _
      // Predicated region
      $region53: #{bi_e2e_forward.2} parent=39 // pred_check
        %p426 = pneg %p139
      $region54: #{bi_e2e_forward.2} parent=39 // pred_check_branch
        %428 = sbr.rel (%p426) target = $region56
      $region55: #{bi_e2e_forward.2} parent=39 // pred_region
        _
      $region56: #{bi_e2e_forward.2} parent=39 // pred_fallthru
        _
    $region40: #{bi_e2e_forward.2} parent=5 // pred_fallthru
      _
    %p429 = scmp.le.s32.totalorder 2, %s11
    // Predicated region
    $region57: #{bi_e2e_forward.2} parent=5 // pred_check
      %p430 = pneg %p429
    $region58: #{bi_e2e_forward.2} parent=5 // pred_check_branch
      %432 = sbr.rel (%p430) target = $region60
    $region59: #{bi_e2e_forward.2} parent=5 // pred_region
      %s433 = ssub.s32 %s11, 2
    $region60: #{bi_e2e_forward.2} parent=5 // pred_fallthru
      _
  $region6: #{bi_e2e_forward.2} parent=0 // loop_footer
    %s15 = sadd.s32 1, %s11
  $region7: #{bi_e2e_forward.2} parent=0 // loop_footer_branch
    %10 = sbr.rel target = $region3
  $region8: #{bi_e2e_forward.2} parent=0 // loop_exit
    _

// kernel: bi_e2e_forward.3
$region0: #{bi_e2e_forward.3}
  #allocation0 [shape = 'u32[]', space=smem, size = 0x4, offset = 0x4, fixed_abs, tag = 'smem constant byte address 0x4 - core index']
  #allocation1 [shape = 'u32[144,128]{1,0:T(1,128)}', space=vmem, size = 0x12000, scoped, tag = 'internal scratch']
  %s0 = inlined_call_operand.vmem [shape: f32[3,2,16], index: 0, kind: input, shape index: {}]
  %s1 = inlined_call_operand.vmem [shape: f32[32,48], index: 1, kind: input, shape index: {}]
  %s2 = inlined_call_operand.vmem [shape: f32[16,48], index: 2, kind: input, shape index: {}]
  %s3 = inlined_call_operand.vmem [shape: f32[1,48], index: 3, kind: input, shape index: {}]
  %s4 = inlined_call_operand.vmem [shape: f32[1,48], index: 4, kind: input, shape index: {}]
  %s5 = inlined_call_operand.vmem [shape: f32[1,16], index: 5, kind: input, shape index: {}]
  %s6 = inlined_call_operand.vmem [shape: f32[32,48], index: 6, kind: input, shape index: {}]
  %s7 = inlined_call_operand.vmem [shape: f32[16,48], index: 7, kind: input, shape index: {}]
  %s8 = inlined_call_operand.vmem [shape: f32[1,48], index: 8, kind: input, shape index: {}]
  %s9 = inlined_call_operand.vmem [shape: f32[1,48], index: 9, kind: input, shape index: {}]
  %s10 = inlined_call_operand.vmem [shape: f32[16,48], index: 10, kind: input, shape index: {}]
  %s11 = inlined_call_operand.vmem [shape: f32[16,48], index: 11, kind: input, shape index: {}]
  %s12 = inlined_call_operand.vmem [shape: f32[1,48], index: 12, kind: input, shape index: {}]
  %s13 = inlined_call_operand.vmem [shape: f32[1,48], index: 13, kind: input, shape index: {}]
  %s14 = inlined_call_operand.vmem [shape: f32[32,48], index: 14, kind: input, shape index: {}]
  %s15 = inlined_call_operand.vmem [shape: f32[16,48], index: 15, kind: input, shape index: {}]
  %s16 = inlined_call_operand.vmem [shape: f32[1,48], index: 16, kind: input, shape index: {}]
  %s17 = inlined_call_operand.vmem [shape: f32[1,48], index: 17, kind: input, shape index: {}]
  %s18 = inlined_call_operand.vmem [shape: f32[16,48], index: 18, kind: input, shape index: {}]
  %s19 = inlined_call_operand.vmem [shape: f32[16,48], index: 19, kind: input, shape index: {}]
  %s20 = inlined_call_operand.vmem [shape: f32[1,48], index: 20, kind: input, shape index: {}]
  %s21 = inlined_call_operand.vmem [shape: f32[1,48], index: 21, kind: input, shape index: {}]
  %s22 = inlined_call_operand.vmem [shape: f32[32,32], index: 22, kind: input, shape index: {}]
  %s23 = inlined_call_operand.vmem [shape: f32[1,32], index: 23, kind: input, shape index: {}]
  %s24 = inlined_call_operand.vmem [shape: f32[32,7], index: 24, kind: input, shape index: {}]
  %s25 = inlined_call_operand.vmem [shape: f32[1,7], index: 25, kind: input, shape index: {}]
  %s26 = inlined_call_operand.hbm [shape: f32[2,7], index: 26, kind: output, shape index: {}]
  %s27 = sld [smem:[#allocation0]]
  $region114: #{bi_e2e_forward.3} parent=0
    _
  %s29 = ssub.s32 1, %s27
  %s30 = scalar_select 0, %s29, %s27
  $region1: #{bi_e2e_forward.3} parent=0
    #allocation2 [shape = 'u8[1024]{0}', space=vmem, size = 0x400, scoped, tag = 'output window, operand 0, single buffered']
    #allocation3 [shape = 's32[1]{0}', space=sflag, size = 0x4, scoped, tag = 'scoped memory for bi_e2e_forward.3']
    %31 = vsyncpa [#allocation3], 0
    // Predicated region
    $region2: #{bi_e2e_forward.3} parent=1 // pred_check
      _
    $region3: #{bi_e2e_forward.3} parent=1 // pred_check_branch
      %33 = sbr.rel (0) target = $region5
    $region4: #{bi_e2e_forward.3} parent=1 // pred_region
      _
    $region5: #{bi_e2e_forward.3} parent=1 // pred_fallthru
      _
    // Predicated region
    $region6: #{bi_e2e_forward.3} parent=1 // pred_check
      _
    $region7: #{bi_e2e_forward.3} parent=1 // pred_check_branch
      %35 = sbr.rel (0) target = $region9
    $region8: #{bi_e2e_forward.3} parent=1 // pred_region
      _
    $region9: #{bi_e2e_forward.3} parent=1 // pred_fallthru
      _
    // Predicated region
    $region10: #{bi_e2e_forward.3} parent=1 // pred_check
      _
    $region11: #{bi_e2e_forward.3} parent=1 // pred_check_branch
      %37 = sbr.rel (0) target = $region13
    $region12: #{bi_e2e_forward.3} parent=1 // pred_region
      _
    $region13: #{bi_e2e_forward.3} parent=1 // pred_fallthru
      _
    // Predicated region
    $region14: #{bi_e2e_forward.3} parent=1 // pred_check
      _
    $region15: #{bi_e2e_forward.3} parent=1 // pred_check_branch
      %39 = sbr.rel (0) target = $region17
    $region16: #{bi_e2e_forward.3} parent=1 // pred_region
      _
    $region17: #{bi_e2e_forward.3} parent=1 // pred_fallthru
      _
    // Predicated region
    $region18: #{bi_e2e_forward.3} parent=1 // pred_check
      _
    $region19: #{bi_e2e_forward.3} parent=1 // pred_check_branch
      %41 = sbr.rel (0) target = $region21
    $region20: #{bi_e2e_forward.3} parent=1 // pred_region
      _
    $region21: #{bi_e2e_forward.3} parent=1 // pred_fallthru
      _
    // Predicated region
    $region22: #{bi_e2e_forward.3} parent=1 // pred_check
      _
    $region23: #{bi_e2e_forward.3} parent=1 // pred_check_branch
      %43 = sbr.rel (0) target = $region25
    $region24: #{bi_e2e_forward.3} parent=1 // pred_region
      _
    $region25: #{bi_e2e_forward.3} parent=1 // pred_fallthru
      _
    // Predicated region
    $region26: #{bi_e2e_forward.3} parent=1 // pred_check
      _
    $region27: #{bi_e2e_forward.3} parent=1 // pred_check_branch
      %45 = sbr.rel (0) target = $region29
    $region28: #{bi_e2e_forward.3} parent=1 // pred_region
      _
    $region29: #{bi_e2e_forward.3} parent=1 // pred_fallthru
      _
    // Predicated region
    $region30: #{bi_e2e_forward.3} parent=1 // pred_check
      _
    $region31: #{bi_e2e_forward.3} parent=1 // pred_check_branch
      %47 = sbr.rel (0) target = $region33
    $region32: #{bi_e2e_forward.3} parent=1 // pred_region
      _
    $region33: #{bi_e2e_forward.3} parent=1 // pred_fallthru
      _
    // Predicated region
    $region34: #{bi_e2e_forward.3} parent=1 // pred_check
      _
    $region35: #{bi_e2e_forward.3} parent=1 // pred_check_branch
      %49 = sbr.rel (0) target = $region37
    $region36: #{bi_e2e_forward.3} parent=1 // pred_region
      _
    $region37: #{bi_e2e_forward.3} parent=1 // pred_fallthru
      _
    // Predicated region
    $region38: #{bi_e2e_forward.3} parent=1 // pred_check
      _
    $region39: #{bi_e2e_forward.3} parent=1 // pred_check_branch
      %51 = sbr.rel (0) target = $region41
    $region40: #{bi_e2e_forward.3} parent=1 // pred_region
      _
    $region41: #{bi_e2e_forward.3} parent=1 // pred_fallthru
      _
    // Predicated region
    $region42: #{bi_e2e_forward.3} parent=1 // pred_check
      _
    $region43: #{bi_e2e_forward.3} parent=1 // pred_check_branch
      %53 = sbr.rel (0) target = $region45
    $region44: #{bi_e2e_forward.3} parent=1 // pred_region
      _
    $region45: #{bi_e2e_forward.3} parent=1 // pred_fallthru
      _
    // Predicated region
    $region46: #{bi_e2e_forward.3} parent=1 // pred_check
      _
    $region47: #{bi_e2e_forward.3} parent=1 // pred_check_branch
      %55 = sbr.rel (0) target = $region49
    $region48: #{bi_e2e_forward.3} parent=1 // pred_region
      _
    $region49: #{bi_e2e_forward.3} parent=1 // pred_fallthru
      _
    // Predicated region
    $region50: #{bi_e2e_forward.3} parent=1 // pred_check
      _
    $region51: #{bi_e2e_forward.3} parent=1 // pred_check_branch
      %57 = sbr.rel (0) target = $region53
    $region52: #{bi_e2e_forward.3} parent=1 // pred_region
      _
    $region53: #{bi_e2e_forward.3} parent=1 // pred_fallthru
      _
    // Predicated region
    $region54: #{bi_e2e_forward.3} parent=1 // pred_check
      _
    $region55: #{bi_e2e_forward.3} parent=1 // pred_check_branch
      %59 = sbr.rel (0) target = $region57
    $region56: #{bi_e2e_forward.3} parent=1 // pred_region
      _
    $region57: #{bi_e2e_forward.3} parent=1 // pred_fallthru
      _
    // Predicated region
    $region58: #{bi_e2e_forward.3} parent=1 // pred_check
      _
    $region59: #{bi_e2e_forward.3} parent=1 // pred_check_branch
      %61 = sbr.rel (0) target = $region61
    $region60: #{bi_e2e_forward.3} parent=1 // pred_region
      _
    $region61: #{bi_e2e_forward.3} parent=1 // pred_fallthru
      _
    // Predicated region
    $region62: #{bi_e2e_forward.3} parent=1 // pred_check
      _
    $region63: #{bi_e2e_forward.3} parent=1 // pred_check_branch
      %63 = sbr.rel (0) target = $region65
    $region64: #{bi_e2e_forward.3} parent=1 // pred_region
      _
    $region65: #{bi_e2e_forward.3} parent=1 // pred_fallthru
      _
    // Predicated region
    $region66: #{bi_e2e_forward.3} parent=1 // pred_check
      _
    $region67: #{bi_e2e_forward.3} parent=1 // pred_check_branch
      %65 = sbr.rel (0) target = $region69
    $region68: #{bi_e2e_forward.3} parent=1 // pred_region
      _
    $region69: #{bi_e2e_forward.3} parent=1 // pred_fallthru
      _
    // Predicated region
    $region70: #{bi_e2e_forward.3} parent=1 // pred_check
      _
    $region71: #{bi_e2e_forward.3} parent=1 // pred_check_branch
      %67 = sbr.rel (0) target = $region73
    $region72: #{bi_e2e_forward.3} parent=1 // pred_region
      _
    $region73: #{bi_e2e_forward.3} parent=1 // pred_fallthru
      _
    // Predicated region
    $region74: #{bi_e2e_forward.3} parent=1 // pred_check
      _
    $region75: #{bi_e2e_forward.3} parent=1 // pred_check_branch
      %69 = sbr.rel (0) target = $region77
    $region76: #{bi_e2e_forward.3} parent=1 // pred_region
      _
    $region77: #{bi_e2e_forward.3} parent=1 // pred_fallthru
      _
    // Predicated region
    $region78: #{bi_e2e_forward.3} parent=1 // pred_check
      _
    $region79: #{bi_e2e_forward.3} parent=1 // pred_check_branch
      %71 = sbr.rel (0) target = $region81
    $region80: #{bi_e2e_forward.3} parent=1 // pred_region
      _
    $region81: #{bi_e2e_forward.3} parent=1 // pred_fallthru
      _
    // Predicated region
    $region82: #{bi_e2e_forward.3} parent=1 // pred_check
      _
    $region83: #{bi_e2e_forward.3} parent=1 // pred_check_branch
      %73 = sbr.rel (0) target = $region85
    $region84: #{bi_e2e_forward.3} parent=1 // pred_region
      _
    $region85: #{bi_e2e_forward.3} parent=1 // pred_fallthru
      _
    // Predicated region
    $region86: #{bi_e2e_forward.3} parent=1 // pred_check
      _
    $region87: #{bi_e2e_forward.3} parent=1 // pred_check_branch
      %75 = sbr.rel (0) target = $region89
    $region88: #{bi_e2e_forward.3} parent=1 // pred_region
      _
    $region89: #{bi_e2e_forward.3} parent=1 // pred_fallthru
      _
    // Predicated region
    $region90: #{bi_e2e_forward.3} parent=1 // pred_check
      _
    $region91: #{bi_e2e_forward.3} parent=1 // pred_check_branch
      %77 = sbr.rel (0) target = $region93
    $region92: #{bi_e2e_forward.3} parent=1 // pred_region
      _
    $region93: #{bi_e2e_forward.3} parent=1 // pred_fallthru
      _
    // Predicated region
    $region94: #{bi_e2e_forward.3} parent=1 // pred_check
      _
    $region95: #{bi_e2e_forward.3} parent=1 // pred_check_branch
      %79 = sbr.rel (0) target = $region97
    $region96: #{bi_e2e_forward.3} parent=1 // pred_region
      _
    $region97: #{bi_e2e_forward.3} parent=1 // pred_fallthru
      _
    // Predicated region
    $region98: #{bi_e2e_forward.3} parent=1 // pred_check
      _
    $region99: #{bi_e2e_forward.3} parent=1 // pred_check_branch
      %81 = sbr.rel (0) target = $region101
    $region100: #{bi_e2e_forward.3} parent=1 // pred_region
      _
    $region101: #{bi_e2e_forward.3} parent=1 // pred_fallthru
      _
    // Predicated region
    $region102: #{bi_e2e_forward.3} parent=1 // pred_check
      _
    $region103: #{bi_e2e_forward.3} parent=1 // pred_check_branch
      %83 = sbr.rel (0) target = $region105
    $region104: #{bi_e2e_forward.3} parent=1 // pred_region
      _
    $region105: #{bi_e2e_forward.3} parent=1 // pred_fallthru
      _
    %v84 = vld [vmem:[%s5] sm:$0x1]
    %v85 = vld [vmem:[%s0] sm:$0x3]
    %vm86 = vcmask 130048
    %v87 = vsel %vm86, %v85, 0.0
    %v88 = vld [vmem:[%s1] sm:$0xff]
    %v89 = vld [vmem:[%s1 + $0x8] sm:$0xff]
    %v90 = vld [vmem:[%s1 + $0x10] sm:$0xff]
    %v91 = vld [vmem:[%s1 + $0x18] sm:$0xff]
    %v92 = vld [vmem:[%s3] sm:$0x1]
    %v94 = vlaneseq
    %v95 = vshrl.u32 %v94, 7
    %v96 = vsub.s32 0, %v95
    %v97 = vrot.slane %v92, %v96
    %vm99 = vcmask 261120
    %v101 = vsel %vm99, %v87, 0
    %103 = vmatprep.subr.mxu0 0.0
    %104 = vmatpush1.msra.mxu0 0.0
    %105 = vmatprep.subr.mxu0 0.0
    %106 = vmatpush1.msra.mxu0 0.0
    %107 = vmatprep.subr.mxu0 0.0
    %108 = vmatpush1.msra.mxu0 0.0
    %109 = vmatprep.subr.mxu0 0.0
    %110 = vmatpush1.msra.mxu0 0.0
    %111 = vmatprep.subr.mxu0 0.0
    %112 = vmatpush1.msra.mxu0 0.0
    %113 = vmatprep.subr.mxu0 0.0
    %114 = vmatpush1.msra.mxu0 0.0
    %115 = vmatprep.subr.mxu0 0.0
    %116 = vmatpush1.msra.mxu0 0.0
    %117 = vmatprep.subr.mxu0 0.0
    %118 = vmatpush1.msra.mxu0 0.0
    %119 = vmatprep.subr.mxu0 0.0
    %120 = vmatpush1.msra.mxu0 0.0
    %121 = vmatprep.subr.mxu0 0.0
    %122 = vmatpush1.msra.mxu0 0.0
    %123 = vmatprep.subr.mxu0 0.0
    %124 = vmatpush1.msra.mxu0 0.0
    %125 = vmatprep.subr.mxu0 0.0
    %126 = vmatpush1.msra.mxu0 0.0
    %127 = vmatprep.subr.mxu0 0.0
    %128 = vmatpush1.msra.mxu0 %v91
    %129 = vmatprep.subr.mxu0 0.0
    %130 = vmatpush1.msra.mxu0 %v90
    %131 = vmatprep.subr.mxu0 0.0
    %132 = vmatpush1.msra.mxu0 %v89
    %133 = vmatprep.subr.mxu0 0.0
    %134 = vmatpush1.msra.mxu0 %v88
    %135 = vmatprep.subr.mxu0 0.0
    %136 = vmatpush2.msra.mxu0 0.0
    %137 = vmatprep.subr.mxu0 0.0
    %138 = vmatpush2.msra.mxu0 0.0
    %139 = vmatprep.subr.mxu0 0.0
    %140 = vmatpush2.msra.mxu0 0.0
    %141 = vmatprep.subr.mxu0 0.0
    %142 = vmatpush2.msra.mxu0 0.0
    %143 = vmatprep.subr.mxu0 0.0
    %144 = vmatpush2.msra.mxu0 0.0
    %145 = vmatprep.subr.mxu0 0.0
    %146 = vmatpush2.msra.mxu0 0.0
    %147 = vmatprep.subr.mxu0 0.0
    %148 = vmatpush2.msra.mxu0 0.0
    %149 = vmatprep.subr.mxu0 0.0
    %150 = vmatpush2.msra.mxu0 0.0
    %151 = vmatprep.subr.mxu0 0.0
    %152 = vmatpush2.msra.mxu0 0.0
    %153 = vmatprep.subr.mxu0 0.0
    %154 = vmatpush2.msra.mxu0 0.0
    %155 = vmatprep.subr.mxu0 0.0
    %156 = vmatpush2.msra.mxu0 0.0
    %157 = vmatprep.subr.mxu0 0.0
    %158 = vmatpush2.msra.mxu0 0.0
    %159 = vmatprep.subr.mxu0 0.0
    %160 = vmatpush2.msra.mxu0 0.0
    %161 = vmatprep.subr.mxu0 0.0
    %162 = vmatpush2.msra.mxu0 0.0
    %163 = vmatprep.subr.mxu0 0.0
    %164 = vmatpush2.msra.mxu0 0.0
    %165 = vmatprep.subr.mxu0 0.0
    %166 = vmatpush2.msra.mxu0 0.0
    %167 = vmatprep.mubr.f32.mxu0 0.0
    %168 = vmatmul.mubr.f32.gmra.mxu0 %v101
    %v169 = vpop.f32.mrf.mxu0
    %v170 = vadd.f32 %v97, %v169
    %v171 = vpop.f32.mrf.mxu0
    %172 = vdwg.mxu0
    %v173 = vld [vmem:[%s2] sm:$0xff]
    %v174 = vld [vmem:[%s2 + $0x8] sm:$0xff]
    %v175 = vld [vmem:[%s4] sm:$0x1]
    %v177 = vlaneseq
    %v178 = vshrl.u32 %v177, 7
    %v179 = vsub.s32 0, %v178
    %v180 = vrot.slane %v175, %v179
    %v183 = vsel %vm86, 0.0, 0
    %185 = vmatprep.subr.mxu0 0.0
    %186 = vmatpush1.msra.mxu0 0.0
    %187 = vmatprep.subr.mxu0 0.0
    %188 = vmatpush1.msra.mxu0 0.0
    %189 = vmatprep.subr.mxu0 0.0
    %190 = vmatpush1.msra.mxu0 0.0
    %191 = vmatprep.subr.mxu0 0.0
    %192 = vmatpush1.msra.mxu0 0.0
    %193 = vmatprep.subr.mxu0 0.0
    %194 = vmatpush1.msra.mxu0 0.0
    %195 = vmatprep.subr.mxu0 0.0
    %196 = vmatpush1.msra.mxu0 0.0
    %197 = vmatprep.subr.mxu0 0.0
    %198 = vmatpush1.msra.mxu0 0.0
    %199 = vmatprep.subr.mxu0 0.0
    %200 = vmatpush1.msra.mxu0 0.0
    %201 = vmatprep.subr.mxu0 0.0
    %202 = vmatpush1.msra.mxu0 0.0
    %203 = vmatprep.subr.mxu0 0.0
    %204 = vmatpush1.msra.mxu0 0.0
    %205 = vmatprep.subr.mxu0 0.0
    %206 = vmatpush1.msra.mxu0 0.0
    %207 = vmatprep.subr.mxu0 0.0
    %208 = vmatpush1.msra.mxu0 0.0
    %209 = vmatprep.subr.mxu0 0.0
    %210 = vmatpush1.msra.mxu0 0.0
    %211 = vmatprep.subr.mxu0 0.0
    %212 = vmatpush1.msra.mxu0 0.0
    %213 = vmatprep.subr.mxu0 0.0
    %214 = vmatpush1.msra.mxu0 %v174
    %215 = vmatprep.subr.mxu0 0.0
    %216 = vmatpush1.msra.mxu0 %v173
    %217 = vmatprep.subr.mxu0 0.0
    %218 = vmatpush2.msra.mxu0 0.0
    %219 = vmatprep.subr.mxu0 0.0
    %220 = vmatpush2.msra.mxu0 0.0
    %221 = vmatprep.subr.mxu0 0.0
    %222 = vmatpush2.msra.mxu0 0.0
    %223 = vmatprep.subr.mxu0 0.0
    %224 = vmatpush2.msra.mxu0 0.0
    %225 = vmatprep.subr.mxu0 0.0
    %226 = vmatpush2.msra.mxu0 0.0
    %227 = vmatprep.subr.mxu0 0.0
    %228 = vmatpush2.msra.mxu0 0.0
    %229 = vmatprep.subr.mxu0 0.0
    %230 = vmatpush2.msra.mxu0 0.0
    %231 = vmatprep.subr.mxu0 0.0
    %232 = vmatpush2.msra.mxu0 0.0
    %233 = vmatprep.subr.mxu0 0.0
    %234 = vmatpush2.msra.mxu0 0.0
    %235 = vmatprep.subr.mxu0 0.0
    %236 = vmatpush2.msra.mxu0 0.0
    %237 = vmatprep.subr.mxu0 0.0
    %238 = vmatpush2.msra.mxu0 0.0
    %239 = vmatprep.subr.mxu0 0.0
    %240 = vmatpush2.msra.mxu0 0.0
    %241 = vmatprep.subr.mxu0 0.0
    %242 = vmatpush2.msra.mxu0 0.0
    %243 = vmatprep.subr.mxu0 0.0
    %244 = vmatpush2.msra.mxu0 0.0
    %245 = vmatprep.subr.mxu0 0.0
    %246 = vmatpush2.msra.mxu0 0.0
    %247 = vmatprep.subr.mxu0 0.0
    %248 = vmatpush2.msra.mxu0 0.0
    %249 = vmatprep.mubr.f32.mxu0 0.0
    %250 = vmatmul.mubr.f32.gmra.mxu0 %v183
    %v251 = vpop.f32.mrf.mxu0
    %v252 = vadd.f32 %v180, %v251
    %v253 = vpop.f32.mrf.mxu0
    %254 = vdwg.mxu0
    %v255 = vadd.f32 %v170, %v252
    %v256 = vxor.u32 %v255, 2147483648
    %v257 = vmul.f32 %v256, 1.442695
    %v258 = vpow.pop %v257
    %v259 = vadd.f32 %v258, 1.0
    %v260 = vrcp.pop %v259
    %v261 = vmul.f32 1.0, %v260
    %263 = vrot.lane.b32.xlu0 %v252, 96
    %v264 = vpop.permute.xlu0 %263
    %v266 = vmul.f32 %v261, %v264
    %268 = vrot.lane.b32.xlu0 %v266, 32
    %v269 = vpop.permute.xlu0 %268
    %v271 = vadd.f32 %v170, %v269
    %v272 = vtanh.pop %v271
    %v273 = vsub.f32 1.0, %v261
    %275 = vrot.lane.b32.xlu0 %v272, 112
    %v276 = vpop.permute.xlu0 %275
    %v278 = vmul.f32 %v273, %v276
    %v279 = vmul.f32 %v261, 0.0
    %v280 = vadd.f32 %v278, %v279
    %v281 = vld [vmem:[%s6] sm:$0xff]
    %v282 = vld [vmem:[%s6 + $0x8] sm:$0xff]
    %v283 = vld [vmem:[%s6 + $0x10] sm:$0xff]
    %v284 = vld [vmem:[%s6 + $0x18] sm:$0xff]
    %v285 = vld [vmem:[%s8] sm:$0x1]
    %v287 = vlaneseq
    %v288 = vshrl.u32 %v287, 7
    %v289 = vsub.s32 0, %v288
    %v290 = vrot.slane %v285, %v289
    %292 = vmatprep.subr.mxu0 0.0
    %293 = vmatpush1.msra.mxu0 0.0
    %294 = vmatprep.subr.mxu0 0.0
    %295 = vmatpush1.msra.mxu0 0.0
    %296 = vmatprep.subr.mxu0 0.0
    %297 = vmatpush1.msra.mxu0 0.0
    %298 = vmatprep.subr.mxu0 0.0
    %299 = vmatpush1.msra.mxu0 0.0
    %300 = vmatprep.subr.mxu0 0.0
    %301 = vmatpush1.msra.mxu0 0.0
    %302 = vmatprep.subr.mxu0 0.0
    %303 = vmatpush1.msra.mxu0 0.0
    %304 = vmatprep.subr.mxu0 0.0
    %305 = vmatpush1.msra.mxu0 0.0
    %306 = vmatprep.subr.mxu0 0.0
    %307 = vmatpush1.msra.mxu0 0.0
    %308 = vmatprep.subr.mxu0 0.0
    %309 = vmatpush1.msra.mxu0 0.0
    %310 = vmatprep.subr.mxu0 0.0
    %311 = vmatpush1.msra.mxu0 0.0
    %312 = vmatprep.subr.mxu0 0.0
    %313 = vmatpush1.msra.mxu0 0.0
    %314 = vmatprep.subr.mxu0 0.0
    %315 = vmatpush1.msra.mxu0 0.0
    %316 = vmatprep.subr.mxu0 0.0
    %317 = vmatpush1.msra.mxu0 %v284
    %318 = vmatprep.subr.mxu0 0.0
    %319 = vmatpush1.msra.mxu0 %v283
    %320 = vmatprep.subr.mxu0 0.0
    %321 = vmatpush1.msra.mxu0 %v282
    %322 = vmatprep.subr.mxu0 0.0
    %323 = vmatpush1.msra.mxu0 %v281
    %324 = vmatprep.subr.mxu0 0.0
    %325 = vmatpush2.msra.mxu0 0.0
    %326 = vmatprep.subr.mxu0 0.0
    %327 = vmatpush2.msra.mxu0 0.0
    %328 = vmatprep.subr.mxu0 0.0
    %329 = vmatpush2.msra.mxu0 0.0
    %330 = vmatprep.subr.mxu0 0.0
    %331 = vmatpush2.msra.mxu0 0.0
    %332 = vmatprep.subr.mxu0 0.0
    %333 = vmatpush2.msra.mxu0 0.0
    %334 = vmatprep.subr.mxu0 0.0
    %335 = vmatpush2.msra.mxu0 0.0
    %336 = vmatprep.subr.mxu0 0.0
    %337 = vmatpush2.msra.mxu0 0.0
    %338 = vmatprep.subr.mxu0 0.0
    %339 = vmatpush2.msra.mxu0 0.0
    %340 = vmatprep.subr.mxu0 0.0
    %341 = vmatpush2.msra.mxu0 0.0
    %342 = vmatprep.subr.mxu0 0.0
    %343 = vmatpush2.msra.mxu0 0.0
    %344 = vmatprep.subr.mxu0 0.0
    %345 = vmatpush2.msra.mxu0 0.0
    %346 = vmatprep.subr.mxu0 0.0
    %347 = vmatpush2.msra.mxu0 0.0
    %348 = vmatprep.subr.mxu0 0.0
    %349 = vmatpush2.msra.mxu0 0.0
    %350 = vmatprep.subr.mxu0 0.0
    %351 = vmatpush2.msra.mxu0 0.0
    %352 = vmatprep.subr.mxu0 0.0
    %353 = vmatpush2.msra.mxu0 0.0
    %354 = vmatprep.subr.mxu0 0.0
    %355 = vmatpush2.msra.mxu0 0.0
    %356 = vmatprep.mubr.f32.mxu0 0.0
    %357 = vmatmul.mubr.f32.gmra.mxu0 %v101
    %v358 = vpop.f32.mrf.mxu0
    %v359 = vadd.f32 %v290, %v358
    %v360 = vpop.f32.mrf.mxu0
    %361 = vdwg.mxu0
    %v362 = vld [vmem:[%s7] sm:$0xff]
    %v363 = vld [vmem:[%s7 + $0x8] sm:$0xff]
    %v364 = vld [vmem:[%s9] sm:$0x1]
    %v366 = vlaneseq
    %v367 = vshrl.u32 %v366, 7
    %v368 = vsub.s32 0, %v367
    %v369 = vrot.slane %v364, %v368
    %371 = vmatprep.subr.mxu0 0.0
    %372 = vmatpush1.msra.mxu0 0.0
    %373 = vmatprep.subr.mxu0 0.0
    %374 = vmatpush1.msra.mxu0 0.0
    %375 = vmatprep.subr.mxu0 0.0
    %376 = vmatpush1.msra.mxu0 0.0
    %377 = vmatprep.subr.mxu0 0.0
    %378 = vmatpush1.msra.mxu0 0.0
    %379 = vmatprep.subr.mxu0 0.0
    %380 = vmatpush1.msra.mxu0 0.0
    %381 = vmatprep.subr.mxu0 0.0
    %382 = vmatpush1.msra.mxu0 0.0
    %383 = vmatprep.subr.mxu0 0.0
    %384 = vmatpush1.msra.mxu0 0.0
    %385 = vmatprep.subr.mxu0 0.0
    %386 = vmatpush1.msra.mxu0 0.0
    %387 = vmatprep.subr.mxu0 0.0
    %388 = vmatpush1.msra.mxu0 0.0
    %389 = vmatprep.subr.mxu0 0.0
    %390 = vmatpush1.msra.mxu0 0.0
    %391 = vmatprep.subr.mxu0 0.0
    %392 = vmatpush1.msra.mxu0 0.0
    %393 = vmatprep.subr.mxu0 0.0
    %394 = vmatpush1.msra.mxu0 0.0
    %395 = vmatprep.subr.mxu0 0.0
    %396 = vmatpush1.msra.mxu0 0.0
    %397 = vmatprep.subr.mxu0 0.0
    %398 = vmatpush1.msra.mxu0 0.0
    %399 = vmatprep.subr.mxu0 0.0
    %400 = vmatpush1.msra.mxu0 %v363
    %401 = vmatprep.subr.mxu0 0.0
    %402 = vmatpush1.msra.mxu0 %v362
    %403 = vmatprep.subr.mxu0 0.0
    %404 = vmatpush2.msra.mxu0 0.0
    %405 = vmatprep.subr.mxu0 0.0
    %406 = vmatpush2.msra.mxu0 0.0
    %407 = vmatprep.subr.mxu0 0.0
    %408 = vmatpush2.msra.mxu0 0.0
    %409 = vmatprep.subr.mxu0 0.0
    %410 = vmatpush2.msra.mxu0 0.0
    %411 = vmatprep.subr.mxu0 0.0
    %412 = vmatpush2.msra.mxu0 0.0
    %413 = vmatprep.subr.mxu0 0.0
    %414 = vmatpush2.msra.mxu0 0.0
    %415 = vmatprep.subr.mxu0 0.0
    %416 = vmatpush2.msra.mxu0 0.0
    %417 = vmatprep.subr.mxu0 0.0
    %418 = vmatpush2.msra.mxu0 0.0
    %419 = vmatprep.subr.mxu0 0.0
    %420 = vmatpush2.msra.mxu0 0.0
    %421 = vmatprep.subr.mxu0 0.0
    %422 = vmatpush2.msra.mxu0 0.0
    %423 = vmatprep.subr.mxu0 0.0
    %424 = vmatpush2.msra.mxu0 0.0
    %425 = vmatprep.subr.mxu0 0.0
    %426 = vmatpush2.msra.mxu0 0.0
    %427 = vmatprep.subr.mxu0 0.0
    %428 = vmatpush2.msra.mxu0 0.0
    %429 = vmatprep.subr.mxu0 0.0
    %430 = vmatpush2.msra.mxu0 0.0
    %431 = vmatprep.subr.mxu0 0.0
    %432 = vmatpush2.msra.mxu0 0.0
    %433 = vmatprep.subr.mxu0 0.0
    %434 = vmatpush2.msra.mxu0 0.0
    %435 = vmatprep.mubr.f32.mxu0 0.0
    %436 = vmatmul.mubr.f32.gmra.mxu0 %v183
    %v437 = vpop.f32.mrf.mxu0
    %v438 = vadd.f32 %v369, %v437
    %v439 = vpop.f32.mrf.mxu0
    %440 = vdwg.mxu0
    %v442 = vrot.slane %v359, 6
    %vm444 = vcmask 1041408
    %v445 = vsel %vm444, %v359, %v442
    %v446 = vadd.f32 %v445, %v438
    %v447 = vxor.u32 %v446, 2147483648
    %v448 = vmul.f32 %v447, 1.442695
    %v449 = vpow.pop %v448
    %v450 = vadd.f32 %v449, 1.0
    %v451 = vrcp.pop %v450
    %v452 = vmul.f32 1.0, %v451
    %454 = vrot.lane.b32.xlu0 %v438, 96
    %v455 = vpop.permute.xlu0 %454
    %v457 = vmul.f32 %v452, %v455
    %459 = vrot.lane.b32.xlu0 %v457, 32
    %v460 = vpop.permute.xlu0 %459
    %v462 = vadd.f32 %v445, %v460
    %v463 = vtanh.pop %v462
    %v464 = vsub.f32 1.0, %v452
    %466 = vrot.lane.b32.xlu0 %v463, 112
    %v467 = vpop.permute.xlu0 %466
    %v469 = vmul.f32 %v464, %v467
    %v470 = vmul.f32 %v452, 0.0
    %v471 = vadd.f32 %v469, %v470
    %v472 = vsel %vm444, %v471, 0.0
    %v473 = vld [vmem:[%s10] sm:$0xff]
    %v474 = vld [vmem:[%s10 + $0x8] sm:$0xff]
    %v475 = vld [vmem:[%s12] sm:$0x1]
    %v477 = vlaneseq
    %v478 = vshrl.u32 %v477, 7
    %v479 = vsub.s32 0, %v478
    %v480 = vrot.slane %v475, %v479
    %483 = vrot.lane.b32.xlu0 %v471, 112
    %v484 = vpop.permute.xlu0 %483
    %v485 = vsel %vm86, %v484, 0
    %487 = vmatprep.subr.mxu0 0.0
    %488 = vmatpush1.msra.mxu0 0.0
    %489 = vmatprep.subr.mxu0 0.0
    %490 = vmatpush1.msra.mxu0 0.0
    %491 = vmatprep.subr.mxu0 0.0
    %492 = vmatpush1.msra.mxu0 0.0
    %493 = vmatprep.subr.mxu0 0.0
    %494 = vmatpush1.msra.mxu0 0.0
    %495 = vmatprep.subr.mxu0 0.0
    %496 = vmatpush1.msra.mxu0 0.0
    %497 = vmatprep.subr.mxu0 0.0
    %498 = vmatpush1.msra.mxu0 0.0
    %499 = vmatprep.subr.mxu0 0.0
    %500 = vmatpush1.msra.mxu0 0.0
    %501 = vmatprep.subr.mxu0 0.0
    %502 = vmatpush1.msra.mxu0 0.0
    %503 = vmatprep.subr.mxu0 0.0
    %504 = vmatpush1.msra.mxu0 0.0
    %505 = vmatprep.subr.mxu0 0.0
    %506 = vmatpush1.msra.mxu0 0.0
    %507 = vmatprep.subr.mxu0 0.0
    %508 = vmatpush1.msra.mxu0 0.0
    %509 = vmatprep.subr.mxu0 0.0
    %510 = vmatpush1.msra.mxu0 0.0
    %511 = vmatprep.subr.mxu0 0.0
    %512 = vmatpush1.msra.mxu0 0.0
    %513 = vmatprep.subr.mxu0 0.0
    %514 = vmatpush1.msra.mxu0 0.0
    %515 = vmatprep.subr.mxu0 0.0
    %516 = vmatpush1.msra.mxu0 %v474
    %517 = vmatprep.subr.mxu0 0.0
    %518 = vmatpush1.msra.mxu0 %v473
    %519 = vmatprep.subr.mxu0 0.0
    %520 = vmatpush2.msra.mxu0 0.0
    %521 = vmatprep.subr.mxu0 0.0
    %522 = vmatpush2.msra.mxu0 0.0
    %523 = vmatprep.subr.mxu0 0.0
    %524 = vmatpush2.msra.mxu0 0.0
    %525 = vmatprep.subr.mxu0 0.0
    %526 = vmatpush2.msra.mxu0 0.0
    %527 = vmatprep.subr.mxu0 0.0
    %528 = vmatpush2.msra.mxu0 0.0
    %529 = vmatprep.subr.mxu0 0.0
    %530 = vmatpush2.msra.mxu0 0.0
    %531 = vmatprep.subr.mxu0 0.0
    %532 = vmatpush2.msra.mxu0 0.0
    %533 = vmatprep.subr.mxu0 0.0
    %534 = vmatpush2.msra.mxu0 0.0
    %535 = vmatprep.subr.mxu0 0.0
    %536 = vmatpush2.msra.mxu0 0.0
    %537 = vmatprep.subr.mxu0 0.0
    %538 = vmatpush2.msra.mxu0 0.0
    %539 = vmatprep.subr.mxu0 0.0
    %540 = vmatpush2.msra.mxu0 0.0
    %541 = vmatprep.subr.mxu0 0.0
    %542 = vmatpush2.msra.mxu0 0.0
    %543 = vmatprep.subr.mxu0 0.0
    %544 = vmatpush2.msra.mxu0 0.0
    %545 = vmatprep.subr.mxu0 0.0
    %546 = vmatpush2.msra.mxu0 0.0
    %547 = vmatprep.subr.mxu0 0.0
    %548 = vmatpush2.msra.mxu0 0.0
    %549 = vmatprep.subr.mxu0 0.0
    %550 = vmatpush2.msra.mxu0 0.0
    %551 = vmatprep.mubr.f32.mxu0 0.0
    %552 = vmatmul.mubr.f32.gmra.mxu0 %v485
    %v553 = vpop.f32.mrf.mxu0
    %v554 = vadd.f32 %v480, %v553
    %v555 = vpop.f32.mrf.mxu0
    %556 = vdwg.mxu0
    %v557 = vld [vmem:[%s11] sm:$0xff]
    %v558 = vld [vmem:[%s11 + $0x8] sm:$0xff]
    %v559 = vld [vmem:[%s13] sm:$0x1]
    %v561 = vlaneseq
    %v562 = vshrl.u32 %v561, 7
    %v563 = vsub.s32 0, %v562
    %v564 = vrot.slane %v559, %v563
    %566 = vmatprep.subr.mxu0 0.0
    %567 = vmatpush1.msra.mxu0 0.0
    %568 = vmatprep.subr.mxu0 0.0
    %569 = vmatpush1.msra.mxu0 0.0
    %570 = vmatprep.subr.mxu0 0.0
    %571 = vmatpush1.msra.mxu0 0.0
    %572 = vmatprep.subr.mxu0 0.0
    %573 = vmatpush1.msra.mxu0 0.0
    %574 = vmatprep.subr.mxu0 0.0
    %575 = vmatpush1.msra.mxu0 0.0
    %576 = vmatprep.subr.mxu0 0.0
    %577 = vmatpush1.msra.mxu0 0.0
    %578 = vmatprep.subr.mxu0 0.0
    %579 = vmatpush1.msra.mxu0 0.0
    %580 = vmatprep.subr.mxu0 0.0
    %581 = vmatpush1.msra.mxu0 0.0
    %582 = vmatprep.subr.mxu0 0.0
    %583 = vmatpush1.msra.mxu0 0.0
    %584 = vmatprep.subr.mxu0 0.0
    %585 = vmatpush1.msra.mxu0 0.0
    %586 = vmatprep.subr.mxu0 0.0
    %587 = vmatpush1.msra.mxu0 0.0
    %588 = vmatprep.subr.mxu0 0.0
    %589 = vmatpush1.msra.mxu0 0.0
    %590 = vmatprep.subr.mxu0 0.0
    %591 = vmatpush1.msra.mxu0 0.0
    %592 = vmatprep.subr.mxu0 0.0
    %593 = vmatpush1.msra.mxu0 0.0
    %594 = vmatprep.subr.mxu0 0.0
    %595 = vmatpush1.msra.mxu0 %v558
    %596 = vmatprep.subr.mxu0 0.0
    %597 = vmatpush1.msra.mxu0 %v557
    %598 = vmatprep.subr.mxu0 0.0
    %599 = vmatpush2.msra.mxu0 0.0
    %600 = vmatprep.subr.mxu0 0.0
    %601 = vmatpush2.msra.mxu0 0.0
    %602 = vmatprep.subr.mxu0 0.0
    %603 = vmatpush2.msra.mxu0 0.0
    %604 = vmatprep.subr.mxu0 0.0
    %605 = vmatpush2.msra.mxu0 0.0
    %606 = vmatprep.subr.mxu0 0.0
    %607 = vmatpush2.msra.mxu0 0.0
    %608 = vmatprep.subr.mxu0 0.0
    %609 = vmatpush2.msra.mxu0 0.0
    %610 = vmatprep.subr.mxu0 0.0
    %611 = vmatpush2.msra.mxu0 0.0
    %612 = vmatprep.subr.mxu0 0.0
    %613 = vmatpush2.msra.mxu0 0.0
    %614 = vmatprep.subr.mxu0 0.0
    %615 = vmatpush2.msra.mxu0 0.0
    %616 = vmatprep.subr.mxu0 0.0
    %617 = vmatpush2.msra.mxu0 0.0
    %618 = vmatprep.subr.mxu0 0.0
    %619 = vmatpush2.msra.mxu0 0.0
    %620 = vmatprep.subr.mxu0 0.0
    %621 = vmatpush2.msra.mxu0 0.0
    %622 = vmatprep.subr.mxu0 0.0
    %623 = vmatpush2.msra.mxu0 0.0
    %624 = vmatprep.subr.mxu0 0.0
    %625 = vmatpush2.msra.mxu0 0.0
    %626 = vmatprep.subr.mxu0 0.0
    %627 = vmatpush2.msra.mxu0 0.0
    %628 = vmatprep.subr.mxu0 0.0
    %629 = vmatpush2.msra.mxu0 0.0
    %630 = vmatprep.mubr.f32.mxu0 0.0
    %631 = vmatmul.mubr.f32.gmra.mxu0 %v183
    %v632 = vpop.f32.mrf.mxu0
    %v633 = vadd.f32 %v564, %v632
    %v634 = vpop.f32.mrf.mxu0
    %635 = vdwg.mxu0
    %v636 = vadd.f32 %v554, %v633
    %v637 = vxor.u32 %v636, 2147483648
    %v638 = vmul.f32 %v637, 1.442695
    %v639 = vpow.pop %v638
    %v640 = vadd.f32 %v639, 1.0
    %v641 = vrcp.pop %v640
    %v642 = vmul.f32 1.0, %v641
    %644 = vrot.lane.b32.xlu0 %v633, 96
    %v645 = vpop.permute.xlu0 %644
    %v647 = vmul.f32 %v642, %v645
    %649 = vrot.lane.b32.xlu0 %v647, 32
    %v650 = vpop.permute.xlu0 %649
    %v652 = vadd.f32 %v554, %v650
    %v653 = vtanh.pop %v652
    %v654 = vsub.f32 1.0, %v642
    %656 = vrot.lane.b32.xlu0 %v653, 112
    %v657 = vpop.permute.xlu0 %656
    %v659 = vmul.f32 %v654, %v657
    %v660 = vmul.f32 %v642, 0.0
    %v661 = vadd.f32 %v659, %v660
    %s662 = scalar_lea.vmem %s0, 2
    %v663 = vld [vmem:[%s662] sm:$0x3]
    %v665 = vrot.slane %v472, 2
    %v667 = vsel %vm86, %v663, %v665
    %v669 = vsel %vm99, %v667, 0
    %671 = vmatprep.subr.mxu0 0.0
    %672 = vmatpush1.msra.mxu0 0.0
    %673 = vmatprep.subr.mxu0 0.0
    %674 = vmatpush1.msra.mxu0 0.0
    %675 = vmatprep.subr.mxu0 0.0
    %676 = vmatpush1.msra.mxu0 0.0
    %677 = vmatprep.subr.mxu0 0.0
    %678 = vmatpush1.msra.mxu0 0.0
    %679 = vmatprep.subr.mxu0 0.0
    %680 = vmatpush1.msra.mxu0 0.0
    %681 = vmatprep.subr.mxu0 0.0
    %682 = vmatpush1.msra.mxu0 0.0
    %683 = vmatprep.subr.mxu0 0.0
    %684 = vmatpush1.msra.mxu0 0.0
    %685 = vmatprep.subr.mxu0 0.0
    %686 = vmatpush1.msra.mxu0 0.0
    %687 = vmatprep.subr.mxu0 0.0
    %688 = vmatpush1.msra.mxu0 0.0
    %689 = vmatprep.subr.mxu0 0.0
    %690 = vmatpush1.msra.mxu0 0.0
    %691 = vmatprep.subr.mxu0 0.0
    %692 = vmatpush1.msra.mxu0 0.0
    %693 = vmatprep.subr.mxu0 0.0
    %694 = vmatpush1.msra.mxu0 0.0
    %695 = vmatprep.subr.mxu0 0.0
    %696 = vmatpush1.msra.mxu0 %v91
    %697 = vmatprep.subr.mxu0 0.0
    %698 = vmatpush1.msra.mxu0 %v90
    %699 = vmatprep.subr.mxu0 0.0
    %700 = vmatpush1.msra.mxu0 %v89
    %701 = vmatprep.subr.mxu0 0.0
    %702 = vmatpush1.msra.mxu0 %v88
    %703 = vmatprep.subr.mxu0 0.0
    %704 = vmatpush2.msra.mxu0 0.0
    %705 = vmatprep.subr.mxu0 0.0
    %706 = vmatpush2.msra.mxu0 0.0
    %707 = vmatprep.subr.mxu0 0.0
    %708 = vmatpush2.msra.mxu0 0.0
    %709 = vmatprep.subr.mxu0 0.0
    %710 = vmatpush2.msra.mxu0 0.0
    %711 = vmatprep.subr.mxu0 0.0
    %712 = vmatpush2.msra.mxu0 0.0
    %713 = vmatprep.subr.mxu0 0.0
    %714 = vmatpush2.msra.mxu0 0.0
    %715 = vmatprep.subr.mxu0 0.0
    %716 = vmatpush2.msra.mxu0 0.0
    %717 = vmatprep.subr.mxu0 0.0
    %718 = vmatpush2.msra.mxu0 0.0
    %719 = vmatprep.subr.mxu0 0.0
    %720 = vmatpush2.msra.mxu0 0.0
    %721 = vmatprep.subr.mxu0 0.0
    %722 = vmatpush2.msra.mxu0 0.0
    %723 = vmatprep.subr.mxu0 0.0
    %724 = vmatpush2.msra.mxu0 0.0
    %725 = vmatprep.subr.mxu0 0.0
    %726 = vmatpush2.msra.mxu0 0.0
    %727 = vmatprep.subr.mxu0 0.0
    %728 = vmatpush2.msra.mxu0 0.0
    %729 = vmatprep.subr.mxu0 0.0
    %730 = vmatpush2.msra.mxu0 0.0
    %731 = vmatprep.subr.mxu0 0.0
    %732 = vmatpush2.msra.mxu0 0.0
    %733 = vmatprep.subr.mxu0 0.0
    %734 = vmatpush2.msra.mxu0 0.0
    %735 = vmatprep.mubr.f32.mxu0 0.0
    %736 = vmatmul.mubr.f32.gmra.mxu0 %v669
    %v737 = vpop.f32.mrf.mxu0
    %v738 = vadd.f32 %v97, %v737
    %v739 = vpop.f32.mrf.mxu0
    %740 = vdwg.mxu0
    %742 = vrot.lane.b32.xlu0 %v280, 112
    %v743 = vpop.permute.xlu0 %742
    %v744 = vsel %vm86, %v743, 0
    %746 = vmatprep.subr.mxu0 0.0
    %747 = vmatpush1.msra.mxu0 0.0
    %748 = vmatprep.subr.mxu0 0.0
    %749 = vmatpush1.msra.mxu0 0.0
    %750 = vmatprep.subr.mxu0 0.0
    %751 = vmatpush1.msra.mxu0 0.0
    %752 = vmatprep.subr.mxu0 0.0
    %753 = vmatpush1.msra.mxu0 0.0
    %754 = vmatprep.subr.mxu0 0.0
    %755 = vmatpush1.msra.mxu0 0.0
    %756 = vmatprep.subr.mxu0 0.0
    %757 = vmatpush1.msra.mxu0 0.0
    %758 = vmatprep.subr.mxu0 0.0
    %759 = vmatpush1.msra.mxu0 0.0
    %760 = vmatprep.subr.mxu0 0.0
    %761 = vmatpush1.msra.mxu0 0.0
    %762 = vmatprep.subr.mxu0 0.0
    %763 = vmatpush1.msra.mxu0 0.0
    %764 = vmatprep.subr.mxu0 0.0
    %765 = vmatpush1.msra.mxu0 0.0
    %766 = vmatprep.subr.mxu0 0.0
    %767 = vmatpush1.msra.mxu0 0.0
    %768 = vmatprep.subr.mxu0 0.0
    %769 = vmatpush1.msra.mxu0 0.0
    %770 = vmatprep.subr.mxu0 0.0
    %771 = vmatpush1.msra.mxu0 0.0
    %772 = vmatprep.subr.mxu0 0.0
    %773 = vmatpush1.msra.mxu0 0.0
    %774 = vmatprep.subr.mxu0 0.0
    %775 = vmatpush1.msra.mxu0 %v174
    %776 = vmatprep.subr.mxu0 0.0
    %777 = vmatpush1.msra.mxu0 %v173
    %778 = vmatprep.subr.mxu0 0.0
    %779 = vmatpush2.msra.mxu0 0.0
    %780 = vmatprep.subr.mxu0 0.0
    %781 = vmatpush2.msra.mxu0 0.0
    %782 = vmatprep.subr.mxu0 0.0
    %783 = vmatpush2.msra.mxu0 0.0
    %784 = vmatprep.subr.mxu0 0.0
    %785 = vmatpush2.msra.mxu0 0.0
    %786 = vmatprep.subr.mxu0 0.0
    %787 = vmatpush2.msra.mxu0 0.0
    %788 = vmatprep.subr.mxu0 0.0
    %789 = vmatpush2.msra.mxu0 0.0
    %790 = vmatprep.subr.mxu0 0.0
    %791 = vmatpush2.msra.mxu0 0.0
    %792 = vmatprep.subr.mxu0 0.0
    %793 = vmatpush2.msra.mxu0 0.0
    %794 = vmatprep.subr.mxu0 0.0
    %795 = vmatpush2.msra.mxu0 0.0
    %796 = vmatprep.subr.mxu0 0.0
    %797 = vmatpush2.msra.mxu0 0.0
    %798 = vmatprep.subr.mxu0 0.0
    %799 = vmatpush2.msra.mxu0 0.0
    %800 = vmatprep.subr.mxu0 0.0
    %801 = vmatpush2.msra.mxu0 0.0
    %802 = vmatprep.subr.mxu0 0.0
    %803 = vmatpush2.msra.mxu0 0.0
    %804 = vmatprep.subr.mxu0 0.0
    %805 = vmatpush2.msra.mxu0 0.0
    %806 = vmatprep.subr.mxu0 0.0
    %807 = vmatpush2.msra.mxu0 0.0
    %808 = vmatprep.subr.mxu0 0.0
    %809 = vmatpush2.msra.mxu0 0.0
    %810 = vmatprep.mubr.f32.mxu0 0.0
    %811 = vmatmul.mubr.f32.gmra.mxu0 %v744
    %v812 = vpop.f32.mrf.mxu0
    %v813 = vadd.f32 %v180, %v812
    %v814 = vpop.f32.mrf.mxu0
    %815 = vdwg.mxu0
    %v816 = vadd.f32 %v738, %v813
    %v817 = vxor.u32 %v816, 2147483648
    %v818 = vmul.f32 %v817, 1.442695
    %v819 = vpow.pop %v818
    %v820 = vadd.f32 %v819, 1.0
    %v821 = vrcp.pop %v820
    %v822 = vmul.f32 1.0, %v821
    %824 = vrot.lane.b32.xlu0 %v813, 96
    %v825 = vpop.permute.xlu0 %824
    %v827 = vmul.f32 %v822, %v825
    %829 = vrot.lane.b32.xlu0 %v827, 32
    %v830 = vpop.permute.xlu0 %829
    %v832 = vadd.f32 %v738, %v830
    %v833 = vtanh.pop %v832
    %v834 = vsub.f32 1.0, %v822
    %836 = vrot.lane.b32.xlu0 %v833, 112
    %v837 = vpop.permute.xlu0 %836
    %v839 = vmul.f32 %v834, %v837
    %v840 = vmul.f32 %v822, %v280
    %v841 = vadd.f32 %v839, %v840
    %v842 = vsel %vm86, %v663, %v280
    %v844 = vsel %vm99, %v842, 0
    %846 = vmatprep.subr.mxu0 0.0
    %847 = vmatpush1.msra.mxu0 0.0
    %848 = vmatprep.subr.mxu0 0.0
    %849 = vmatpush1.msra.mxu0 0.0
    %850 = vmatprep.subr.mxu0 0.0
    %851 = vmatpush1.msra.mxu0 0.0
    %852 = vmatprep.subr.mxu0 0.0
    %853 = vmatpush1.msra.mxu0 0.0
    %854 = vmatprep.subr.mxu0 0.0
    %855 = vmatpush1.msra.mxu0 0.0
    %856 = vmatprep.subr.mxu0 0.0
    %857 = vmatpush1.msra.mxu0 0.0
    %858 = vmatprep.subr.mxu0 0.0
    %859 = vmatpush1.msra.mxu0 0.0
    %860 = vmatprep.subr.mxu0 0.0
    %861 = vmatpush1.msra.mxu0 0.0
    %862 = vmatprep.subr.mxu0 0.0
    %863 = vmatpush1.msra.mxu0 0.0
    %864 = vmatprep.subr.mxu0 0.0
    %865 = vmatpush1.msra.mxu0 0.0
    %866 = vmatprep.subr.mxu0 0.0
    %867 = vmatpush1.msra.mxu0 0.0
    %868 = vmatprep.subr.mxu0 0.0
    %869 = vmatpush1.msra.mxu0 0.0
    %870 = vmatprep.subr.mxu0 0.0
    %871 = vmatpush1.msra.mxu0 %v284
    %872 = vmatprep.subr.mxu0 0.0
    %873 = vmatpush1.msra.mxu0 %v283
    %874 = vmatprep.subr.mxu0 0.0
    %875 = vmatpush1.msra.mxu0 %v282
    %876 = vmatprep.subr.mxu0 0.0
    %877 = vmatpush1.msra.mxu0 %v281
    %878 = vmatprep.subr.mxu0 0.0
    %879 = vmatpush2.msra.mxu0 0.0
    %880 = vmatprep.subr.mxu0 0.0
    %881 = vmatpush2.msra.mxu0 0.0
    %882 = vmatprep.subr.mxu0 0.0
    %883 = vmatpush2.msra.mxu0 0.0
    %884 = vmatprep.subr.mxu0 0.0
    %885 = vmatpush2.msra.mxu0 0.0
    %886 = vmatprep.subr.mxu0 0.0
    %887 = vmatpush2.msra.mxu0 0.0
    %888 = vmatprep.subr.mxu0 0.0
    %889 = vmatpush2.msra.mxu0 0.0
    %890 = vmatprep.subr.mxu0 0.0
    %891 = vmatpush2.msra.mxu0 0.0
    %892 = vmatprep.subr.mxu0 0.0
    %893 = vmatpush2.msra.mxu0 0.0
    %894 = vmatprep.subr.mxu0 0.0
    %895 = vmatpush2.msra.mxu0 0.0
    %896 = vmatprep.subr.mxu0 0.0
    %897 = vmatpush2.msra.mxu0 0.0
    %898 = vmatprep.subr.mxu0 0.0
    %899 = vmatpush2.msra.mxu0 0.0
    %900 = vmatprep.subr.mxu0 0.0
    %901 = vmatpush2.msra.mxu0 0.0
    %902 = vmatprep.subr.mxu0 0.0
    %903 = vmatpush2.msra.mxu0 0.0
    %904 = vmatprep.subr.mxu0 0.0
    %905 = vmatpush2.msra.mxu0 0.0
    %906 = vmatprep.subr.mxu0 0.0
    %907 = vmatpush2.msra.mxu0 0.0
    %908 = vmatprep.subr.mxu0 0.0
    %909 = vmatpush2.msra.mxu0 0.0
    %910 = vmatprep.mubr.f32.mxu0 0.0
    %911 = vmatmul.mubr.f32.gmra.mxu0 %v844
    %v912 = vpop.f32.mrf.mxu0
    %v913 = vadd.f32 %v290, %v912
    %v914 = vpop.f32.mrf.mxu0
    %915 = vdwg.mxu0
    %916 = vrot.lane.b32.xlu0 %v472, 112
    %v917 = vpop.permute.xlu0 %916
    %v918 = vsel %vm86, %v917, 0
    %920 = vmatprep.subr.mxu0 0.0
    %921 = vmatpush1.msra.mxu0 0.0
    %922 = vmatprep.subr.mxu0 0.0
    %923 = vmatpush1.msra.mxu0 0.0
    %924 = vmatprep.subr.mxu0 0.0
    %925 = vmatpush1.msra.mxu0 0.0
    %926 = vmatprep.subr.mxu0 0.0
    %927 = vmatpush1.msra.mxu0 0.0
    %928 = vmatprep.subr.mxu0 0.0
    %929 = vmatpush1.msra.mxu0 0.0
    %930 = vmatprep.subr.mxu0 0.0
    %931 = vmatpush1.msra.mxu0 0.0
    %932 = vmatprep.subr.mxu0 0.0
    %933 = vmatpush1.msra.mxu0 0.0
    %934 = vmatprep.subr.mxu0 0.0
    %935 = vmatpush1.msra.mxu0 0.0
    %936 = vmatprep.subr.mxu0 0.0
    %937 = vmatpush1.msra.mxu0 0.0
    %938 = vmatprep.subr.mxu0 0.0
    %939 = vmatpush1.msra.mxu0 0.0
    %940 = vmatprep.subr.mxu0 0.0
    %941 = vmatpush1.msra.mxu0 0.0
    %942 = vmatprep.subr.mxu0 0.0
    %943 = vmatpush1.msra.mxu0 0.0
    %944 = vmatprep.subr.mxu0 0.0
    %945 = vmatpush1.msra.mxu0 0.0
    %946 = vmatprep.subr.mxu0 0.0
    %947 = vmatpush1.msra.mxu0 0.0
    %948 = vmatprep.subr.mxu0 0.0
    %949 = vmatpush1.msra.mxu0 %v363
    %950 = vmatprep.subr.mxu0 0.0
    %951 = vmatpush1.msra.mxu0 %v362
    %952 = vmatprep.subr.mxu0 0.0
    %953 = vmatpush2.msra.mxu0 0.0
    %954 = vmatprep.subr.mxu0 0.0
    %955 = vmatpush2.msra.mxu0 0.0
    %956 = vmatprep.subr.mxu0 0.0
    %957 = vmatpush2.msra.mxu0 0.0
    %958 = vmatprep.subr.mxu0 0.0
    %959 = vmatpush2.msra.mxu0 0.0
    %960 = vmatprep.subr.mxu0 0.0
    %961 = vmatpush2.msra.mxu0 0.0
    %962 = vmatprep.subr.mxu0 0.0
    %963 = vmatpush2.msra.mxu0 0.0
    %964 = vmatprep.subr.mxu0 0.0
    %965 = vmatpush2.msra.mxu0 0.0
    %966 = vmatprep.subr.mxu0 0.0
    %967 = vmatpush2.msra.mxu0 0.0
    %968 = vmatprep.subr.mxu0 0.0
    %969 = vmatpush2.msra.mxu0 0.0
    %970 = vmatprep.subr.mxu0 0.0
    %971 = vmatpush2.msra.mxu0 0.0
    %972 = vmatprep.subr.mxu0 0.0
    %973 = vmatpush2.msra.mxu0 0.0
    %974 = vmatprep.subr.mxu0 0.0
    %975 = vmatpush2.msra.mxu0 0.0
    %976 = vmatprep.subr.mxu0 0.0
    %977 = vmatpush2.msra.mxu0 0.0
    %978 = vmatprep.subr.mxu0 0.0
    %979 = vmatpush2.msra.mxu0 0.0
    %980 = vmatprep.subr.mxu0 0.0
    %981 = vmatpush2.msra.mxu0 0.0
    %982 = vmatprep.subr.mxu0 0.0
    %983 = vmatpush2.msra.mxu0 0.0
    %984 = vmatprep.mubr.f32.mxu0 0.0
    %985 = vmatmul.mubr.f32.gmra.mxu0 %v918
    %v986 = vpop.f32.mrf.mxu0
    %v987 = vadd.f32 %v369, %v986
    %v988 = vpop.f32.mrf.mxu0
    %989 = vdwg.mxu0
    %v991 = vrot.slane %v913, 6
    %v993 = vsel %vm444, %v913, %v991
    %v994 = vadd.f32 %v993, %v987
    %v995 = vxor.u32 %v994, 2147483648
    %v996 = vmul.f32 %v995, 1.442695
    %v997 = vpow.pop %v996
    %v998 = vadd.f32 %v997, 1.0
    %v999 = vrcp.pop %v998
    %v1000 = vmul.f32 1.0, %v999
    %1002 = vrot.lane.b32.xlu0 %v987, 96
    %v1003 = vpop.permute.xlu0 %1002
    %v1005 = vmul.f32 %v1000, %v1003
    %1007 = vrot.lane.b32.xlu0 %v1005, 32
    %v1008 = vpop.permute.xlu0 %1007
    %v1010 = vadd.f32 %v993, %v1008
    %v1011 = vtanh.pop %v1010
    %v1012 = vsub.f32 1.0, %v1000
    %1014 = vrot.lane.b32.xlu0 %v1011, 112
    %v1015 = vpop.permute.xlu0 %1014
    %v1017 = vmul.f32 %v1012, %v1015
    %v1018 = vmul.f32 %v1000, %v472
    %v1019 = vadd.f32 %v1017, %v1018
    %v1020 = vsel %vm444, %v472, %v1019
    %v1022 = vrot.slane %v1019, 2
    %1023 = vrot.lane.b32.xlu0 %v1022, 112
    %v1024 = vpop.permute.xlu0 %1023
    %v1025 = vsel %vm86, %v1024, 0
    %1027 = vmatprep.subr.mxu0 0.0
    %1028 = vmatpush1.msra.mxu0 0.0
    %1029 = vmatprep.subr.mxu0 0.0
    %1030 = vmatpush1.msra.mxu0 0.0
    %1031 = vmatprep.subr.mxu0 0.0
    %1032 = vmatpush1.msra.mxu0 0.0
    %1033 = vmatprep.subr.mxu0 0.0
    %1034 = vmatpush1.msra.mxu0 0.0
    %1035 = vmatprep.subr.mxu0 0.0
    %1036 = vmatpush1.msra.mxu0 0.0
    %1037 = vmatprep.subr.mxu0 0.0
    %1038 = vmatpush1.msra.mxu0 0.0
    %1039 = vmatprep.subr.mxu0 0.0
    %1040 = vmatpush1.msra.mxu0 0.0
    %1041 = vmatprep.subr.mxu0 0.0
    %1042 = vmatpush1.msra.mxu0 0.0
    %1043 = vmatprep.subr.mxu0 0.0
    %1044 = vmatpush1.msra.mxu0 0.0
    %1045 = vmatprep.subr.mxu0 0.0
    %1046 = vmatpush1.msra.mxu0 0.0
    %1047 = vmatprep.subr.mxu0 0.0
    %1048 = vmatpush1.msra.mxu0 0.0
    %1049 = vmatprep.subr.mxu0 0.0
    %1050 = vmatpush1.msra.mxu0 0.0
    %1051 = vmatprep.subr.mxu0 0.0
    %1052 = vmatpush1.msra.mxu0 0.0
    %1053 = vmatprep.subr.mxu0 0.0
    %1054 = vmatpush1.msra.mxu0 0.0
    %1055 = vmatprep.subr.mxu0 0.0
    %1056 = vmatpush1.msra.mxu0 %v474
    %1057 = vmatprep.subr.mxu0 0.0
    %1058 = vmatpush1.msra.mxu0 %v473
    %1059 = vmatprep.subr.mxu0 0.0
    %1060 = vmatpush2.msra.mxu0 0.0
    %1061 = vmatprep.subr.mxu0 0.0
    %1062 = vmatpush2.msra.mxu0 0.0
    %1063 = vmatprep.subr.mxu0 0.0
    %1064 = vmatpush2.msra.mxu0 0.0
    %1065 = vmatprep.subr.mxu0 0.0
    %1066 = vmatpush2.msra.mxu0 0.0
    %1067 = vmatprep.subr.mxu0 0.0
    %1068 = vmatpush2.msra.mxu0 0.0
    %1069 = vmatprep.subr.mxu0 0.0
    %1070 = vmatpush2.msra.mxu0 0.0
    %1071 = vmatprep.subr.mxu0 0.0
    %1072 = vmatpush2.msra.mxu0 0.0
    %1073 = vmatprep.subr.mxu0 0.0
    %1074 = vmatpush2.msra.mxu0 0.0
    %1075 = vmatprep.subr.mxu0 0.0
    %1076 = vmatpush2.msra.mxu0 0.0
    %1077 = vmatprep.subr.mxu0 0.0
    %1078 = vmatpush2.msra.mxu0 0.0
    %1079 = vmatprep.subr.mxu0 0.0
    %1080 = vmatpush2.msra.mxu0 0.0
    %1081 = vmatprep.subr.mxu0 0.0
    %1082 = vmatpush2.msra.mxu0 0.0
    %1083 = vmatprep.subr.mxu0 0.0
    %1084 = vmatpush2.msra.mxu0 0.0
    %1085 = vmatprep.subr.mxu0 0.0
    %1086 = vmatpush2.msra.mxu0 0.0
    %1087 = vmatprep.subr.mxu0 0.0
    %1088 = vmatpush2.msra.mxu0 0.0
    %1089 = vmatprep.subr.mxu0 0.0
    %1090 = vmatpush2.msra.mxu0 0.0
    %1091 = vmatprep.mubr.f32.mxu0 0.0
    %1092 = vmatmul.mubr.f32.gmra.mxu0 %v1025
    %v1093 = vpop.f32.mrf.mxu0
    %v1094 = vadd.f32 %v480, %v1093
    %v1095 = vpop.f32.mrf.mxu0
    %1096 = vdwg.mxu0
    %1098 = vrot.lane.b32.xlu0 %v661, 112
    %v1099 = vpop.permute.xlu0 %1098
    %v1100 = vsel %vm86, %v1099, 0
    %1102 = vmatprep.subr.mxu0 0.0
    %1103 = vmatpush1.msra.mxu0 0.0
    %1104 = vmatprep.subr.mxu0 0.0
    %1105 = vmatpush1.msra.mxu0 0.0
    %1106 = vmatprep.subr.mxu0 0.0
    %1107 = vmatpush1.msra.mxu0 0.0
    %1108 = vmatprep.subr.mxu0 0.0
    %1109 = vmatpush1.msra.mxu0 0.0
    %1110 = vmatprep.subr.mxu0 0.0
    %1111 = vmatpush1.msra.mxu0 0.0
    %1112 = vmatprep.subr.mxu0 0.0
    %1113 = vmatpush1.msra.mxu0 0.0
    %1114 = vmatprep.subr.mxu0 0.0
    %1115 = vmatpush1.msra.mxu0 0.0
    %1116 = vmatprep.subr.mxu0 0.0
    %1117 = vmatpush1.msra.mxu0 0.0
    %1118 = vmatprep.subr.mxu0 0.0
    %1119 = vmatpush1.msra.mxu0 0.0
    %1120 = vmatprep.subr.mxu0 0.0
    %1121 = vmatpush1.msra.mxu0 0.0
    %1122 = vmatprep.subr.mxu0 0.0
    %1123 = vmatpush1.msra.mxu0 0.0
    %1124 = vmatprep.subr.mxu0 0.0
    %1125 = vmatpush1.msra.mxu0 0.0
    %1126 = vmatprep.subr.mxu0 0.0
    %1127 = vmatpush1.msra.mxu0 0.0
    %1128 = vmatprep.subr.mxu0 0.0
    %1129 = vmatpush1.msra.mxu0 0.0
    %1130 = vmatprep.subr.mxu0 0.0
    %1131 = vmatpush1.msra.mxu0 %v558
    %1132 = vmatprep.subr.mxu0 0.0
    %1133 = vmatpush1.msra.mxu0 %v557
    %1134 = vmatprep.subr.mxu0 0.0
    %1135 = vmatpush2.msra.mxu0 0.0
    %1136 = vmatprep.subr.mxu0 0.0
    %1137 = vmatpush2.msra.mxu0 0.0
    %1138 = vmatprep.subr.mxu0 0.0
    %1139 = vmatpush2.msra.mxu0 0.0
    %1140 = vmatprep.subr.mxu0 0.0
    %1141 = vmatpush2.msra.mxu0 0.0
    %1142 = vmatprep.subr.mxu0 0.0
    %1143 = vmatpush2.msra.mxu0 0.0
    %1144 = vmatprep.subr.mxu0 0.0
    %1145 = vmatpush2.msra.mxu0 0.0
    %1146 = vmatprep.subr.mxu0 0.0
    %1147 = vmatpush2.msra.mxu0 0.0
    %1148 = vmatprep.subr.mxu0 0.0
    %1149 = vmatpush2.msra.mxu0 0.0
    %1150 = vmatprep.subr.mxu0 0.0
    %1151 = vmatpush2.msra.mxu0 0.0
    %1152 = vmatprep.subr.mxu0 0.0
    %1153 = vmatpush2.msra.mxu0 0.0
    %1154 = vmatprep.subr.mxu0 0.0
    %1155 = vmatpush2.msra.mxu0 0.0
    %1156 = vmatprep.subr.mxu0 0.0
    %1157 = vmatpush2.msra.mxu0 0.0
    %1158 = vmatprep.subr.mxu0 0.0
    %1159 = vmatpush2.msra.mxu0 0.0
    %1160 = vmatprep.subr.mxu0 0.0
    %1161 = vmatpush2.msra.mxu0 0.0
    %1162 = vmatprep.subr.mxu0 0.0
    %1163 = vmatpush2.msra.mxu0 0.0
    %1164 = vmatprep.subr.mxu0 0.0
    %1165 = vmatpush2.msra.mxu0 0.0
    %1166 = vmatprep.mubr.f32.mxu0 0.0
    %1167 = vmatmul.mubr.f32.gmra.mxu0 %v1100
    %v1168 = vpop.f32.mrf.mxu0
    %v1169 = vadd.f32 %v564, %v1168
    %v1170 = vpop.f32.mrf.mxu0
    %1171 = vdwg.mxu0
    %v1172 = vadd.f32 %v1094, %v1169
    %v1173 = vxor.u32 %v1172, 2147483648
    %v1174 = vmul.f32 %v1173, 1.442695
    %v1175 = vpow.pop %v1174
    %v1176 = vadd.f32 %v1175, 1.0
    %v1177 = vrcp.pop %v1176
    %v1178 = vmul.f32 1.0, %v1177
    %1180 = vrot.lane.b32.xlu0 %v1169, 96
    %v1181 = vpop.permute.xlu0 %1180
    %v1183 = vmul.f32 %v1178, %v1181
    %1185 = vrot.lane.b32.xlu0 %v1183, 32
    %v1186 = vpop.permute.xlu0 %1185
    %v1188 = vadd.f32 %v1094, %v1186
    %v1189 = vtanh.pop %v1188
    %v1190 = vsub.f32 1.0, %v1178
    %1192 = vrot.lane.b32.xlu0 %v1189, 112
    %v1193 = vpop.permute.xlu0 %1192
    %v1195 = vmul.f32 %v1190, %v1193
    %v1196 = vmul.f32 %v1178, %v661
    %v1197 = vadd.f32 %v1195, %v1196
    %s1198 = scalar_lea.vmem %s0, 4
    %v1199 = vld [vmem:[%s1198] sm:$0x3]
    %v1201 = vlaneseq
    %v1202 = vshrl.u32 %v1201, 7
    %v1203 = vsub.s32 0, %v1202
    %v1204 = vrot.slane %v84, %v1203
    %1205 = vrot.lane.b32.xlu0 %v1204, 16
    %v1206 = vpop.permute.xlu0 %1205
    %v1208 = vmul.f32 %v280, %v1206
    %1210 = vrot.lane.b32.xlu0 %v1208, 112
    %v1211 = vpop.permute.xlu0 %1210
    %vm1213 = vcmask 123904
    %v1214 = vsel %vm1213, %v1211, 0.0
    %1215 = vadd.xlane.f32.xlu0 %v1214
    %v1216 = vpop.xlane.xlu0 %1215
    %v1217 = vmul.f32 %v841, %v1206
    %1219 = vrot.lane.b32.xlu0 %v1217, 112
    %v1220 = vpop.permute.xlu0 %1219
    %v1222 = vsel %vm1213, %v1220, 0.0
    %1223 = vadd.xlane.f32.xlu0 %v1222
    %v1224 = vpop.xlane.xlu0 %1223
    %v1225 = vmax.f32 %v1216, %v1224
    %v1226 = vsub.f32 %v1216, %v1225
    %v1227 = vmul.f32 %v1226, 1.442695
    %v1228 = vpow.pop %v1227
    %v1229 = vsub.f32 %v1224, %v1225
    %v1230 = vmul.f32 %v1229, 1.442695
    %v1231 = vpow.pop %v1230
    %v1232 = vadd.f32 %v1228, %v1231
    %v1233 = vrcp.pop %v1232
    %v1234 = vmul.f32 1.0, %v1233
    %v1235 = vmul.f32 %v1228, %v1234
    %v1236 = vmul.f32 %v1235, %v280
    %v1237 = vmul.f32 %v1231, %v1234
    %v1238 = vmul.f32 %v1237, %v841
    %v1239 = vadd.f32 %v1236, %v1238
    %v1240 = vsel %vm86, %v1199, %v1239
    %v1242 = vsel %vm99, %v1240, 0
    %1244 = vmatprep.subr.mxu0 0.0
    %1245 = vmatpush1.msra.mxu0 0.0
    %1246 = vmatprep.subr.mxu0 0.0
    %1247 = vmatpush1.msra.mxu0 0.0
    %1248 = vmatprep.subr.mxu0 0.0
    %1249 = vmatpush1.msra.mxu0 0.0
    %1250 = vmatprep.subr.mxu0 0.0
    %1251 = vmatpush1.msra.mxu0 0.0
    %1252 = vmatprep.subr.mxu0 0.0
    %1253 = vmatpush1.msra.mxu0 0.0
    %1254 = vmatprep.subr.mxu0 0.0
    %1255 = vmatpush1.msra.mxu0 0.0
    %1256 = vmatprep.subr.mxu0 0.0
    %1257 = vmatpush1.msra.mxu0 0.0
    %1258 = vmatprep.subr.mxu0 0.0
    %1259 = vmatpush1.msra.mxu0 0.0
    %1260 = vmatprep.subr.mxu0 0.0
    %1261 = vmatpush1.msra.mxu0 0.0
    %1262 = vmatprep.subr.mxu0 0.0
    %1263 = vmatpush1.msra.mxu0 0.0
    %1264 = vmatprep.subr.mxu0 0.0
    %1265 = vmatpush1.msra.mxu0 0.0
    %1266 = vmatprep.subr.mxu0 0.0
    %1267 = vmatpush1.msra.mxu0 0.0
    %1268 = vmatprep.subr.mxu0 0.0
    %1269 = vmatpush1.msra.mxu0 %v284
    %1270 = vmatprep.subr.mxu0 0.0
    %1271 = vmatpush1.msra.mxu0 %v283
    %1272 = vmatprep.subr.mxu0 0.0
    %1273 = vmatpush1.msra.mxu0 %v282
    %1274 = vmatprep.subr.mxu0 0.0
    %1275 = vmatpush1.msra.mxu0 %v281
    %1276 = vmatprep.subr.mxu0 0.0
    %1277 = vmatpush2.msra.mxu0 0.0
    %1278 = vmatprep.subr.mxu0 0.0
    %1279 = vmatpush2.msra.mxu0 0.0
    %1280 = vmatprep.subr.mxu0 0.0
    %1281 = vmatpush2.msra.mxu0 0.0
    %1282 = vmatprep.subr.mxu0 0.0
    %1283 = vmatpush2.msra.mxu0 0.0
    %1284 = vmatprep.subr.mxu0 0.0
    %1285 = vmatpush2.msra.mxu0 0.0
    %1286 = vmatprep.subr.mxu0 0.0
    %1287 = vmatpush2.msra.mxu0 0.0
    %1288 = vmatprep.subr.mxu0 0.0
    %1289 = vmatpush2.msra.mxu0 0.0
    %1290 = vmatprep.subr.mxu0 0.0
    %1291 = vmatpush2.msra.mxu0 0.0
    %1292 = vmatprep.subr.mxu0 0.0
    %1293 = vmatpush2.msra.mxu0 0.0
    %1294 = vmatprep.subr.mxu0 0.0
    %1295 = vmatpush2.msra.mxu0 0.0
    %1296 = vmatprep.subr.mxu0 0.0
    %1297 = vmatpush2.msra.mxu0 0.0
    %1298 = vmatprep.subr.mxu0 0.0
    %1299 = vmatpush2.msra.mxu0 0.0
    %1300 = vmatprep.subr.mxu0 0.0
    %1301 = vmatpush2.msra.mxu0 0.0
    %1302 = vmatprep.subr.mxu0 0.0
    %1303 = vmatpush2.msra.mxu0 0.0
    %1304 = vmatprep.subr.mxu0 0.0
    %1305 = vmatpush2.msra.mxu0 0.0
    %1306 = vmatprep.subr.mxu0 0.0
    %1307 = vmatpush2.msra.mxu0 0.0
    %1308 = vmatprep.mubr.f32.mxu0 0.0
    %1309 = vmatmul.mubr.f32.gmra.mxu0 %v1242
    %v1310 = vpop.f32.mrf.mxu0
    %v1311 = vadd.f32 %v290, %v1310
    %v1312 = vpop.f32.mrf.mxu0
    %1313 = vdwg.mxu0
    %1315 = vrot.lane.b32.xlu0 %v1020, 112
    %v1316 = vpop.permute.xlu0 %1315
    %v1317 = vsel %vm86, %v1316, 0
    %1319 = vmatprep.subr.mxu0 0.0
    %1320 = vmatpush1.msra.mxu0 0.0
    %1321 = vmatprep.subr.mxu0 0.0
    %1322 = vmatpush1.msra.mxu0 0.0
    %1323 = vmatprep.subr.mxu0 0.0
    %1324 = vmatpush1.msra.mxu0 0.0
    %1325 = vmatprep.subr.mxu0 0.0
    %1326 = vmatpush1.msra.mxu0 0.0
    %1327 = vmatprep.subr.mxu0 0.0
    %1328 = vmatpush1.msra.mxu0 0.0
    %1329 = vmatprep.subr.mxu0 0.0
    %1330 = vmatpush1.msra.mxu0 0.0
    %1331 = vmatprep.subr.mxu0 0.0
    %1332 = vmatpush1.msra.mxu0 0.0
    %1333 = vmatprep.subr.mxu0 0.0
    %1334 = vmatpush1.msra.mxu0 0.0
    %1335 = vmatprep.subr.mxu0 0.0
    %1336 = vmatpush1.msra.mxu0 0.0
    %1337 = vmatprep.subr.mxu0 0.0
    %1338 = vmatpush1.msra.mxu0 0.0
    %1339 = vmatprep.subr.mxu0 0.0
    %1340 = vmatpush1.msra.mxu0 0.0
    %1341 = vmatprep.subr.mxu0 0.0
    %1342 = vmatpush1.msra.mxu0 0.0
    %1343 = vmatprep.subr.mxu0 0.0
    %1344 = vmatpush1.msra.mxu0 0.0
    %1345 = vmatprep.subr.mxu0 0.0
    %1346 = vmatpush1.msra.mxu0 0.0
    %1347 = vmatprep.subr.mxu0 0.0
    %1348 = vmatpush1.msra.mxu0 %v363
    %1349 = vmatprep.subr.mxu0 0.0
    %1350 = vmatpush1.msra.mxu0 %v362
    %1351 = vmatprep.subr.mxu0 0.0
    %1352 = vmatpush2.msra.mxu0 0.0
    %1353 = vmatprep.subr.mxu0 0.0
    %1354 = vmatpush2.msra.mxu0 0.0
    %1355 = vmatprep.subr.mxu0 0.0
    %1356 = vmatpush2.msra.mxu0 0.0
    %1357 = vmatprep.subr.mxu0 0.0
    %1358 = vmatpush2.msra.mxu0 0.0
    %1359 = vmatprep.subr.mxu0 0.0
    %1360 = vmatpush2.msra.mxu0 0.0
    %1361 = vmatprep.subr.mxu0 0.0
    %1362 = vmatpush2.msra.mxu0 0.0
    %1363 = vmatprep.subr.mxu0 0.0
    %1364 = vmatpush2.msra.mxu0 0.0
    %1365 = vmatprep.subr.mxu0 0.0
    %1366 = vmatpush2.msra.mxu0 0.0
    %1367 = vmatprep.subr.mxu0 0.0
    %1368 = vmatpush2.msra.mxu0 0.0
    %1369 = vmatprep.subr.mxu0 0.0
    %1370 = vmatpush2.msra.mxu0 0.0
    %1371 = vmatprep.subr.mxu0 0.0
    %1372 = vmatpush2.msra.mxu0 0.0
    %1373 = vmatprep.subr.mxu0 0.0
    %1374 = vmatpush2.msra.mxu0 0.0
    %1375 = vmatprep.subr.mxu0 0.0
    %1376 = vmatpush2.msra.mxu0 0.0
    %1377 = vmatprep.subr.mxu0 0.0
    %1378 = vmatpush2.msra.mxu0 0.0
    %1379 = vmatprep.subr.mxu0 0.0
    %1380 = vmatpush2.msra.mxu0 0.0
    %1381 = vmatprep.subr.mxu0 0.0
    %1382 = vmatpush2.msra.mxu0 0.0
    %1383 = vmatprep.mubr.f32.mxu0 0.0
    %1384 = vmatmul.mubr.f32.gmra.mxu0 %v1317
    %v1385 = vpop.f32.mrf.mxu0
    %v1386 = vadd.f32 %v369, %v1385
    %v1387 = vpop.f32.mrf.mxu0
    %1388 = vdwg.mxu0
    %v1390 = vrot.slane %v1311, 6
    %v1392 = vsel %vm444, %v1311, %v1390
    %v1393 = vadd.f32 %v1392, %v1386
    %v1394 = vxor.u32 %v1393, 2147483648
    %v1395 = vmul.f32 %v1394, 1.442695
    %v1396 = vpow.pop %v1395
    %v1397 = vadd.f32 %v1396, 1.0
    %v1398 = vrcp.pop %v1397
    %v1399 = vmul.f32 1.0, %v1398
    %1401 = vrot.lane.b32.xlu0 %v1386, 96
    %v1402 = vpop.permute.xlu0 %1401
    %v1404 = vmul.f32 %v1399, %v1402
    %1406 = vrot.lane.b32.xlu0 %v1404, 32
    %v1407 = vpop.permute.xlu0 %1406
    %v1409 = vadd.f32 %v1392, %v1407
    %v1410 = vtanh.pop %v1409
    %v1411 = vsub.f32 1.0, %v1399
    %1413 = vrot.lane.b32.xlu0 %v1410, 112
    %v1414 = vpop.permute.xlu0 %1413
    %v1416 = vmul.f32 %v1411, %v1414
    %v1417 = vmul.f32 %v1399, %v1020
    %v1418 = vadd.f32 %v1416, %v1417
    %1420 = vrot.lane.b32.xlu0 %v1418, 112
    %v1421 = vpop.permute.xlu0 %1420
    %v1422 = vsel %vm86, %v1421, 0
    %1424 = vmatprep.subr.mxu0 0.0
    %1425 = vmatpush1.msra.mxu0 0.0
    %1426 = vmatprep.subr.mxu0 0.0
    %1427 = vmatpush1.msra.mxu0 0.0
    %1428 = vmatprep.subr.mxu0 0.0
    %1429 = vmatpush1.msra.mxu0 0.0
    %1430 = vmatprep.subr.mxu0 0.0
    %1431 = vmatpush1.msra.mxu0 0.0
    %1432 = vmatprep.subr.mxu0 0.0
    %1433 = vmatpush1.msra.mxu0 0.0
    %1434 = vmatprep.subr.mxu0 0.0
    %1435 = vmatpush1.msra.mxu0 0.0
    %1436 = vmatprep.subr.mxu0 0.0
    %1437 = vmatpush1.msra.mxu0 0.0
    %1438 = vmatprep.subr.mxu0 0.0
    %1439 = vmatpush1.msra.mxu0 0.0
    %1440 = vmatprep.subr.mxu0 0.0
    %1441 = vmatpush1.msra.mxu0 0.0
    %1442 = vmatprep.subr.mxu0 0.0
    %1443 = vmatpush1.msra.mxu0 0.0
    %1444 = vmatprep.subr.mxu0 0.0
    %1445 = vmatpush1.msra.mxu0 0.0
    %1446 = vmatprep.subr.mxu0 0.0
    %1447 = vmatpush1.msra.mxu0 0.0
    %1448 = vmatprep.subr.mxu0 0.0
    %1449 = vmatpush1.msra.mxu0 0.0
    %1450 = vmatprep.subr.mxu0 0.0
    %1451 = vmatpush1.msra.mxu0 0.0
    %1452 = vmatprep.subr.mxu0 0.0
    %1453 = vmatpush1.msra.mxu0 %v474
    %1454 = vmatprep.subr.mxu0 0.0
    %1455 = vmatpush1.msra.mxu0 %v473
    %1456 = vmatprep.subr.mxu0 0.0
    %1457 = vmatpush2.msra.mxu0 0.0
    %1458 = vmatprep.subr.mxu0 0.0
    %1459 = vmatpush2.msra.mxu0 0.0
    %1460 = vmatprep.subr.mxu0 0.0
    %1461 = vmatpush2.msra.mxu0 0.0
    %1462 = vmatprep.subr.mxu0 0.0
    %1463 = vmatpush2.msra.mxu0 0.0
    %1464 = vmatprep.subr.mxu0 0.0
    %1465 = vmatpush2.msra.mxu0 0.0
    %1466 = vmatprep.subr.mxu0 0.0
    %1467 = vmatpush2.msra.mxu0 0.0
    %1468 = vmatprep.subr.mxu0 0.0
    %1469 = vmatpush2.msra.mxu0 0.0
    %1470 = vmatprep.subr.mxu0 0.0
    %1471 = vmatpush2.msra.mxu0 0.0
    %1472 = vmatprep.subr.mxu0 0.0
    %1473 = vmatpush2.msra.mxu0 0.0
    %1474 = vmatprep.subr.mxu0 0.0
    %1475 = vmatpush2.msra.mxu0 0.0
    %1476 = vmatprep.subr.mxu0 0.0
    %1477 = vmatpush2.msra.mxu0 0.0
    %1478 = vmatprep.subr.mxu0 0.0
    %1479 = vmatpush2.msra.mxu0 0.0
    %1480 = vmatprep.subr.mxu0 0.0
    %1481 = vmatpush2.msra.mxu0 0.0
    %1482 = vmatprep.subr.mxu0 0.0
    %1483 = vmatpush2.msra.mxu0 0.0
    %1484 = vmatprep.subr.mxu0 0.0
    %1485 = vmatpush2.msra.mxu0 0.0
    %1486 = vmatprep.subr.mxu0 0.0
    %1487 = vmatpush2.msra.mxu0 0.0
    %1488 = vmatprep.mubr.f32.mxu0 0.0
    %1489 = vmatmul.mubr.f32.gmra.mxu0 %v1422
    %v1490 = vpop.f32.mrf.mxu0
    %v1491 = vadd.f32 %v480, %v1490
    %v1492 = vpop.f32.mrf.mxu0
    %1493 = vdwg.mxu0
    %1495 = vrot.lane.b32.xlu0 %v1197, 112
    %v1496 = vpop.permute.xlu0 %1495
    %v1497 = vsel %vm86, %v1496, 0
    %1499 = vmatprep.subr.mxu0 0.0
    %1500 = vmatpush1.msra.mxu0 0.0
    %1501 = vmatprep.subr.mxu0 0.0
    %1502 = vmatpush1.msra.mxu0 0.0
    %1503 = vmatprep.subr.mxu0 0.0
    %1504 = vmatpush1.msra.mxu0 0.0
    %1505 = vmatprep.subr.mxu0 0.0
    %1506 = vmatpush1.msra.mxu0 0.0
    %1507 = vmatprep.subr.mxu0 0.0
    %1508 = vmatpush1.msra.mxu0 0.0
    %1509 = vmatprep.subr.mxu0 0.0
    %1510 = vmatpush1.msra.mxu0 0.0
    %1511 = vmatprep.subr.mxu0 0.0
    %1512 = vmatpush1.msra.mxu0 0.0
    %1513 = vmatprep.subr.mxu0 0.0
    %1514 = vmatpush1.msra.mxu0 0.0
    %1515 = vmatprep.subr.mxu0 0.0
    %1516 = vmatpush1.msra.mxu0 0.0
    %1517 = vmatprep.subr.mxu0 0.0
    %1518 = vmatpush1.msra.mxu0 0.0
    %1519 = vmatprep.subr.mxu0 0.0
    %1520 = vmatpush1.msra.mxu0 0.0
    %1521 = vmatprep.subr.mxu0 0.0
    %1522 = vmatpush1.msra.mxu0 0.0
    %1523 = vmatprep.subr.mxu0 0.0
    %1524 = vmatpush1.msra.mxu0 0.0
    %1525 = vmatprep.subr.mxu0 0.0
    %1526 = vmatpush1.msra.mxu0 0.0
    %1527 = vmatprep.subr.mxu0 0.0
    %1528 = vmatpush1.msra.mxu0 %v558
    %1529 = vmatprep.subr.mxu0 0.0
    %1530 = vmatpush1.msra.mxu0 %v557
    %1531 = vmatprep.subr.mxu0 0.0
    %1532 = vmatpush2.msra.mxu0 0.0
    %1533 = vmatprep.subr.mxu0 0.0
    %1534 = vmatpush2.msra.mxu0 0.0
    %1535 = vmatprep.subr.mxu0 0.0
    %1536 = vmatpush2.msra.mxu0 0.0
    %1537 = vmatprep.subr.mxu0 0.0
    %1538 = vmatpush2.msra.mxu0 0.0
    %1539 = vmatprep.subr.mxu0 0.0
    %1540 = vmatpush2.msra.mxu0 0.0
    %1541 = vmatprep.subr.mxu0 0.0
    %1542 = vmatpush2.msra.mxu0 0.0
    %1543 = vmatprep.subr.mxu0 0.0
    %1544 = vmatpush2.msra.mxu0 0.0
    %1545 = vmatprep.subr.mxu0 0.0
    %1546 = vmatpush2.msra.mxu0 0.0
    %1547 = vmatprep.subr.mxu0 0.0
    %1548 = vmatpush2.msra.mxu0 0.0
    %1549 = vmatprep.subr.mxu0 0.0
    %1550 = vmatpush2.msra.mxu0 0.0
    %1551 = vmatprep.subr.mxu0 0.0
    %1552 = vmatpush2.msra.mxu0 0.0
    %1553 = vmatprep.subr.mxu0 0.0
    %1554 = vmatpush2.msra.mxu0 0.0
    %1555 = vmatprep.subr.mxu0 0.0
    %1556 = vmatpush2.msra.mxu0 0.0
    %1557 = vmatprep.subr.mxu0 0.0
    %1558 = vmatpush2.msra.mxu0 0.0
    %1559 = vmatprep.subr.mxu0 0.0
    %1560 = vmatpush2.msra.mxu0 0.0
    %1561 = vmatprep.subr.mxu0 0.0
    %1562 = vmatpush2.msra.mxu0 0.0
    %1563 = vmatprep.mubr.f32.mxu0 0.0
    %1564 = vmatmul.mubr.f32.gmra.mxu0 %v1497
    %v1565 = vpop.f32.mrf.mxu0
    %v1566 = vadd.f32 %v564, %v1565
    %v1567 = vpop.f32.mrf.mxu0
    %1568 = vdwg.mxu0
    %v1569 = vadd.f32 %v1491, %v1566
    %v1570 = vxor.u32 %v1569, 2147483648
    %v1571 = vmul.f32 %v1570, 1.442695
    %v1572 = vpow.pop %v1571
    %v1573 = vadd.f32 %v1572, 1.0
    %v1574 = vrcp.pop %v1573
    %v1575 = vmul.f32 1.0, %v1574
    %1577 = vrot.lane.b32.xlu0 %v1566, 96
    %v1578 = vpop.permute.xlu0 %1577
    %v1580 = vmul.f32 %v1575, %v1578
    %1582 = vrot.lane.b32.xlu0 %v1580, 32
    %v1583 = vpop.permute.xlu0 %1582
    %v1585 = vadd.f32 %v1491, %v1583
    %v1586 = vtanh.pop %v1585
    %v1587 = vsub.f32 1.0, %v1575
    %1589 = vrot.lane.b32.xlu0 %v1586, 112
    %v1590 = vpop.permute.xlu0 %1589
    %v1592 = vmul.f32 %v1587, %v1590
    %v1593 = vmul.f32 %v1575, %v1197
    %v1594 = vadd.f32 %v1592, %v1593
    %v1595 = vsel %vm86, %v1199, 0.0
    %v1596 = vld [vmem:[%s14] sm:$0xff]
    %v1597 = vld [vmem:[%s14 + $0x8] sm:$0xff]
    %v1598 = vld [vmem:[%s14 + $0x10] sm:$0xff]
    %v1599 = vld [vmem:[%s14 + $0x18] sm:$0xff]
    %v1600 = vld [vmem:[%s16] sm:$0x1]
    %v1602 = vlaneseq
    %v1603 = vshrl.u32 %v1602, 7
    %v1604 = vsub.s32 0, %v1603
    %v1605 = vrot.slane %v1600, %v1604
    %v1608 = vsel %vm99, %v1595, 0
    %1610 = vmatprep.subr.mxu0 0.0
    %1611 = vmatpush1.msra.mxu0 0.0
    %1612 = vmatprep.subr.mxu0 0.0
    %1613 = vmatpush1.msra.mxu0 0.0
    %1614 = vmatprep.subr.mxu0 0.0
    %1615 = vmatpush1.msra.mxu0 0.0
    %1616 = vmatprep.subr.mxu0 0.0
    %1617 = vmatpush1.msra.mxu0 0.0
    %1618 = vmatprep.subr.mxu0 0.0
    %1619 = vmatpush1.msra.mxu0 0.0
    %1620 = vmatprep.subr.mxu0 0.0
    %1621 = vmatpush1.msra.mxu0 0.0
    %1622 = vmatprep.subr.mxu0 0.0
    %1623 = vmatpush1.msra.mxu0 0.0
    %1624 = vmatprep.subr.mxu0 0.0
    %1625 = vmatpush1.msra.mxu0 0.0
    %1626 = vmatprep.subr.mxu0 0.0
    %1627 = vmatpush1.msra.mxu0 0.0
    %1628 = vmatprep.subr.mxu0 0.0
    %1629 = vmatpush1.msra.mxu0 0.0
    %1630 = vmatprep.subr.mxu0 0.0
    %1631 = vmatpush1.msra.mxu0 0.0
    %1632 = vmatprep.subr.mxu0 0.0
    %1633 = vmatpush1.msra.mxu0 0.0
    %1634 = vmatprep.subr.mxu0 0.0
    %1635 = vmatpush1.msra.mxu0 %v1599
    %1636 = vmatprep.subr.mxu0 0.0
    %1637 = vmatpush1.msra.mxu0 %v1598
    %1638 = vmatprep.subr.mxu0 0.0
    %1639 = vmatpush1.msra.mxu0 %v1597
    %1640 = vmatprep.subr.mxu0 0.0
    %1641 = vmatpush1.msra.mxu0 %v1596
    %1642 = vmatprep.subr.mxu0 0.0
    %1643 = vmatpush2.msra.mxu0 0.0
    %1644 = vmatprep.subr.mxu0 0.0
    %1645 = vmatpush2.msra.mxu0 0.0
    %1646 = vmatprep.subr.mxu0 0.0
    %1647 = vmatpush2.msra.mxu0 0.0
    %1648 = vmatprep.subr.mxu0 0.0
    %1649 = vmatpush2.msra.mxu0 0.0
    %1650 = vmatprep.subr.mxu0 0.0
    %1651 = vmatpush2.msra.mxu0 0.0
    %1652 = vmatprep.subr.mxu0 0.0
    %1653 = vmatpush2.msra.mxu0 0.0
    %1654 = vmatprep.subr.mxu0 0.0
    %1655 = vmatpush2.msra.mxu0 0.0
    %1656 = vmatprep.subr.mxu0 0.0
    %1657 = vmatpush2.msra.mxu0 0.0
    %1658 = vmatprep.subr.mxu0 0.0
    %1659 = vmatpush2.msra.mxu0 0.0
    %1660 = vmatprep.subr.mxu0 0.0
    %1661 = vmatpush2.msra.mxu0 0.0
    %1662 = vmatprep.subr.mxu0 0.0
    %1663 = vmatpush2.msra.mxu0 0.0
    %1664 = vmatprep.subr.mxu0 0.0
    %1665 = vmatpush2.msra.mxu0 0.0
    %1666 = vmatprep.subr.mxu0 0.0
    %1667 = vmatpush2.msra.mxu0 0.0
    %1668 = vmatprep.subr.mxu0 0.0
    %1669 = vmatpush2.msra.mxu0 0.0
    %1670 = vmatprep.subr.mxu0 0.0
    %1671 = vmatpush2.msra.mxu0 0.0
    %1672 = vmatprep.subr.mxu0 0.0
    %1673 = vmatpush2.msra.mxu0 0.0
    %1674 = vmatprep.mubr.f32.mxu0 0.0
    %1675 = vmatmul.mubr.f32.gmra.mxu0 %v1608
    %v1676 = vpop.f32.mrf.mxu0
    %v1677 = vadd.f32 %v1605, %v1676
    %v1678 = vpop.f32.mrf.mxu0
    %1679 = vdwg.mxu0
    %v1680 = vld [vmem:[%s17] sm:$0x1]
    %v1682 = vlaneseq
    %v1683 = vshrl.u32 %v1682, 7
    %v1684 = vsub.s32 0, %v1683
    %v1685 = vrot.slane %v1680, %v1684
    %v1687 = vadd.f32 %v1677, %v1685
    %v1688 = vxor.u32 %v1687, 2147483648
    %v1689 = vmul.f32 %v1688, 1.442695
    %v1690 = vpow.pop %v1689
    %v1691 = vadd.f32 %v1690, 1.0
    %v1692 = vrcp.pop %v1691
    %v1693 = vmul.f32 1.0, %v1692
    %1694 = vrot.lane.b32.xlu0 %v1685, 96
    %v1695 = vpop.permute.xlu0 %1694
    %v1697 = vmul.f32 %v1693, %v1695
    %1699 = vrot.lane.b32.xlu0 %v1697, 32
    %v1700 = vpop.permute.xlu0 %1699
    %v1702 = vadd.f32 %v1677, %v1700
    %v1703 = vtanh.pop %v1702
    %v1704 = vsub.f32 1.0, %v1693
    %1706 = vrot.lane.b32.xlu0 %v1703, 112
    %v1707 = vpop.permute.xlu0 %1706
    %v1709 = vmul.f32 %v1704, %v1707
    %v1710 = vmul.f32 %v1693, 0.0
    %v1711 = vadd.f32 %v1709, %v1710
    %v1712 = vld [vmem:[%s18] sm:$0xff]
    %v1713 = vld [vmem:[%s18 + $0x8] sm:$0xff]
    %v1714 = vld [vmem:[%s20] sm:$0x1]
    %v1716 = vlaneseq
    %v1717 = vshrl.u32 %v1716, 7
    %v1718 = vsub.s32 0, %v1717
    %v1719 = vrot.slane %v1714, %v1718
    %1722 = vrot.lane.b32.xlu0 %v1711, 112
    %v1723 = vpop.permute.xlu0 %1722
    %v1724 = vsel %vm86, %v1723, 0
    %1726 = vmatprep.subr.mxu0 0.0
    %1727 = vmatpush1.msra.mxu0 0.0
    %1728 = vmatprep.subr.mxu0 0.0
    %1729 = vmatpush1.msra.mxu0 0.0
    %1730 = vmatprep.subr.mxu0 0.0
    %1731 = vmatpush1.msra.mxu0 0.0
    %1732 = vmatprep.subr.mxu0 0.0
    %1733 = vmatpush1.msra.mxu0 0.0
    %1734 = vmatprep.subr.mxu0 0.0
    %1735 = vmatpush1.msra.mxu0 0.0
    %1736 = vmatprep.subr.mxu0 0.0
    %1737 = vmatpush1.msra.mxu0 0.0
    %1738 = vmatprep.subr.mxu0 0.0
    %1739 = vmatpush1.msra.mxu0 0.0
    %1740 = vmatprep.subr.mxu0 0.0
    %1741 = vmatpush1.msra.mxu0 0.0
    %1742 = vmatprep.subr.mxu0 0.0
    %1743 = vmatpush1.msra.mxu0 0.0
    %1744 = vmatprep.subr.mxu0 0.0
    %1745 = vmatpush1.msra.mxu0 0.0
    %1746 = vmatprep.subr.mxu0 0.0
    %1747 = vmatpush1.msra.mxu0 0.0
    %1748 = vmatprep.subr.mxu0 0.0
    %1749 = vmatpush1.msra.mxu0 0.0
    %1750 = vmatprep.subr.mxu0 0.0
    %1751 = vmatpush1.msra.mxu0 0.0
    %1752 = vmatprep.subr.mxu0 0.0
    %1753 = vmatpush1.msra.mxu0 0.0
    %1754 = vmatprep.subr.mxu0 0.0
    %1755 = vmatpush1.msra.mxu0 %v1713
    %1756 = vmatprep.subr.mxu0 0.0
    %1757 = vmatpush1.msra.mxu0 %v1712
    %1758 = vmatprep.subr.mxu0 0.0
    %1759 = vmatpush2.msra.mxu0 0.0
    %1760 = vmatprep.subr.mxu0 0.0
    %1761 = vmatpush2.msra.mxu0 0.0
    %1762 = vmatprep.subr.mxu0 0.0
    %1763 = vmatpush2.msra.mxu0 0.0
    %1764 = vmatprep.subr.mxu0 0.0
    %1765 = vmatpush2.msra.mxu0 0.0
    %1766 = vmatprep.subr.mxu0 0.0
    %1767 = vmatpush2.msra.mxu0 0.0
    %1768 = vmatprep.subr.mxu0 0.0
    %1769 = vmatpush2.msra.mxu0 0.0
    %1770 = vmatprep.subr.mxu0 0.0
    %1771 = vmatpush2.msra.mxu0 0.0
    %1772 = vmatprep.subr.mxu0 0.0
    %1773 = vmatpush2.msra.mxu0 0.0
    %1774 = vmatprep.subr.mxu0 0.0
    %1775 = vmatpush2.msra.mxu0 0.0
    %1776 = vmatprep.subr.mxu0 0.0
    %1777 = vmatpush2.msra.mxu0 0.0
    %1778 = vmatprep.subr.mxu0 0.0
    %1779 = vmatpush2.msra.mxu0 0.0
    %1780 = vmatprep.subr.mxu0 0.0
    %1781 = vmatpush2.msra.mxu0 0.0
    %1782 = vmatprep.subr.mxu0 0.0
    %1783 = vmatpush2.msra.mxu0 0.0
    %1784 = vmatprep.subr.mxu0 0.0
    %1785 = vmatpush2.msra.mxu0 0.0
    %1786 = vmatprep.subr.mxu0 0.0
    %1787 = vmatpush2.msra.mxu0 0.0
    %1788 = vmatprep.subr.mxu0 0.0
    %1789 = vmatpush2.msra.mxu0 0.0
    %1790 = vmatprep.mubr.f32.mxu0 0.0
    %1791 = vmatmul.mubr.f32.gmra.mxu0 %v1724
    %v1792 = vpop.f32.mrf.mxu0
    %v1793 = vadd.f32 %v1719, %v1792
    %v1794 = vpop.f32.mrf.mxu0
    %1795 = vdwg.mxu0
    %v1796 = vld [vmem:[%s21] sm:$0x1]
    %v1798 = vlaneseq
    %v1799 = vshrl.u32 %v1798, 7
    %v1800 = vsub.s32 0, %v1799
    %v1801 = vrot.slane %v1796, %v1800
    %v1803 = vadd.f32 %v1793, %v1801
    %v1804 = vxor.u32 %v1803, 2147483648
    %v1805 = vmul.f32 %v1804, 1.442695
    %v1806 = vpow.pop %v1805
    %v1807 = vadd.f32 %v1806, 1.0
    %v1808 = vrcp.pop %v1807
    %v1809 = vmul.f32 1.0, %v1808
    %1810 = vrot.lane.b32.xlu0 %v1801, 96
    %v1811 = vpop.permute.xlu0 %1810
    %v1813 = vmul.f32 %v1809, %v1811
    %1815 = vrot.lane.b32.xlu0 %v1813, 32
    %v1816 = vpop.permute.xlu0 %1815
    %v1818 = vadd.f32 %v1793, %v1816
    %v1819 = vtanh.pop %v1818
    %v1820 = vsub.f32 1.0, %v1809
    %1822 = vrot.lane.b32.xlu0 %v1819, 112
    %v1823 = vpop.permute.xlu0 %1822
    %v1825 = vmul.f32 %v1820, %v1823
    %v1826 = vmul.f32 %v1809, 0.0
    %v1827 = vadd.f32 %v1825, %v1826
    %1829 = vrot.lane.b32.xlu0 %v1594, 112
    %v1830 = vpop.permute.xlu0 %1829
    %v1832 = vsel %vm86, %v1830, %v1827
    %v1833 = vld [vmem:[%s22] sm:$0xff]
    %v1834 = vld [vmem:[%s22 + $0x8] sm:$0xff]
    %v1835 = vld [vmem:[%s22 + $0x10] sm:$0xff]
    %v1836 = vld [vmem:[%s22 + $0x18] sm:$0xff]
    %v1837 = vld [vmem:[%s23] sm:$0x1]
    %v1839 = vlaneseq
    %v1840 = vshrl.u32 %v1839, 7
    %v1841 = vsub.s32 0, %v1840
    %v1842 = vrot.slane %v1837, %v1841
    %v1845 = vsel %vm99, %v1832, 0
    %1847 = vmatprep.subr.mxu0 0.0
    %1848 = vmatpush1.msra.mxu0 0.0
    %1849 = vmatprep.subr.mxu0 0.0
    %1850 = vmatpush1.msra.mxu0 0.0
    %1851 = vmatprep.subr.mxu0 0.0
    %1852 = vmatpush1.msra.mxu0 0.0
    %1853 = vmatprep.subr.mxu0 0.0
    %1854 = vmatpush1.msra.mxu0 0.0
    %1855 = vmatprep.subr.mxu0 0.0
    %1856 = vmatpush1.msra.mxu0 0.0
    %1857 = vmatprep.subr.mxu0 0.0
    %1858 = vmatpush1.msra.mxu0 0.0
    %1859 = vmatprep.subr.mxu0 0.0
    %1860 = vmatpush1.msra.mxu0 0.0
    %1861 = vmatprep.subr.mxu0 0.0
    %1862 = vmatpush1.msra.mxu0 0.0
    %1863 = vmatprep.subr.mxu0 0.0
    %1864 = vmatpush1.msra.mxu0 0.0
    %1865 = vmatprep.subr.mxu0 0.0
    %1866 = vmatpush1.msra.mxu0 0.0
    %1867 = vmatprep.subr.mxu0 0.0
    %1868 = vmatpush1.msra.mxu0 0.0
    %1869 = vmatprep.subr.mxu0 0.0
    %1870 = vmatpush1.msra.mxu0 0.0
    %1871 = vmatprep.subr.mxu0 0.0
    %1872 = vmatpush1.msra.mxu0 %v1836
    %1873 = vmatprep.subr.mxu0 0.0
    %1874 = vmatpush1.msra.mxu0 %v1835
    %1875 = vmatprep.subr.mxu0 0.0
    %1876 = vmatpush1.msra.mxu0 %v1834
    %1877 = vmatprep.subr.mxu0 0.0
    %1878 = vmatpush1.msra.mxu0 %v1833
    %1879 = vmatprep.subr.mxu0 0.0
    %1880 = vmatpush2.msra.mxu0 0.0
    %1881 = vmatprep.subr.mxu0 0.0
    %1882 = vmatpush2.msra.mxu0 0.0
    %1883 = vmatprep.subr.mxu0 0.0
    %1884 = vmatpush2.msra.mxu0 0.0
    %1885 = vmatprep.subr.mxu0 0.0
    %1886 = vmatpush2.msra.mxu0 0.0
    %1887 = vmatprep.subr.mxu0 0.0
    %1888 = vmatpush2.msra.mxu0 0.0
    %1889 = vmatprep.subr.mxu0 0.0
    %1890 = vmatpush2.msra.mxu0 0.0
    %1891 = vmatprep.subr.mxu0 0.0
    %1892 = vmatpush2.msra.mxu0 0.0
    %1893 = vmatprep.subr.mxu0 0.0
    %1894 = vmatpush2.msra.mxu0 0.0
    %1895 = vmatprep.subr.mxu0 0.0
    %1896 = vmatpush2.msra.mxu0 0.0
    %1897 = vmatprep.subr.mxu0 0.0
    %1898 = vmatpush2.msra.mxu0 0.0
    %1899 = vmatprep.subr.mxu0 0.0
    %1900 = vmatpush2.msra.mxu0 0.0
    %1901 = vmatprep.subr.mxu0 0.0
    %1902 = vmatpush2.msra.mxu0 0.0
    %1903 = vmatprep.subr.mxu0 0.0
    %1904 = vmatpush2.msra.mxu0 0.0
    %1905 = vmatprep.subr.mxu0 0.0
    %1906 = vmatpush2.msra.mxu0 0.0
    %1907 = vmatprep.subr.mxu0 0.0
    %1908 = vmatpush2.msra.mxu0 0.0
    %1909 = vmatprep.subr.mxu0 0.0
    %1910 = vmatpush2.msra.mxu0 0.0
    %1911 = vmatprep.mubr.f32.mxu0 0.0
    %1912 = vmatmul.mubr.f32.gmra.mxu0 %v1845
    %v1913 = vpop.f32.mrf.mxu0
    %v1914 = vadd.f32 %v1842, %v1913
    %v1915 = vpop.f32.mrf.mxu0
    %1916 = vdwg.mxu0
    %v1917 = vmax.f32 %v1914, 0.0
    %v1918 = vld [vmem:[%s24] sm:$0xff]
    %v1919 = vld [vmem:[%s24 + $0x8] sm:$0xff]
    %v1920 = vld [vmem:[%s24 + $0x10] sm:$0xff]
    %v1921 = vld [vmem:[%s24 + $0x18] sm:$0xff]
    %v1922 = vld [vmem:[%s25] sm:$0x1]
    %v1924 = vlaneseq
    %v1925 = vshrl.u32 %v1924, 7
    %v1926 = vsub.s32 0, %v1925
    %v1927 = vrot.slane %v1922, %v1926
    %v1930 = vsel %vm99, %v1917, 0
    %1932 = vmatprep.subr.mxu0 0.0
    %1933 = vmatpush1.msra.mxu0 0.0
    %1934 = vmatprep.subr.mxu0 0.0
    %1935 = vmatpush1.msra.mxu0 0.0
    %1936 = vmatprep.subr.mxu0 0.0
    %1937 = vmatpush1.msra.mxu0 0.0
    %1938 = vmatprep.subr.mxu0 0.0
    %1939 = vmatpush1.msra.mxu0 0.0
    %1940 = vmatprep.subr.mxu0 0.0
    %1941 = vmatpush1.msra.mxu0 0.0
    %1942 = vmatprep.subr.mxu0 0.0
    %1943 = vmatpush1.msra.mxu0 0.0
    %1944 = vmatprep.subr.mxu0 0.0
    %1945 = vmatpush1.msra.mxu0 0.0
    %1946 = vmatprep.subr.mxu0 0.0
    %1947 = vmatpush1.msra.mxu0 0.0
    %1948 = vmatprep.subr.mxu0 0.0
    %1949 = vmatpush1.msra.mxu0 0.0
    %1950 = vmatprep.subr.mxu0 0.0
    %1951 = vmatpush1.msra.mxu0 0.0
    %1952 = vmatprep.subr.mxu0 0.0
    %1953 = vmatpush1.msra.mxu0 0.0
    %1954 = vmatprep.subr.mxu0 0.0
    %1955 = vmatpush1.msra.mxu0 0.0
    %1956 = vmatprep.subr.mxu0 0.0
    %1957 = vmatpush1.msra.mxu0 %v1921
    %1958 = vmatprep.subr.mxu0 0.0
    %1959 = vmatpush1.msra.mxu0 %v1920
    %1960 = vmatprep.subr.mxu0 0.0
    %1961 = vmatpush1.msra.mxu0 %v1919
    %1962 = vmatprep.subr.mxu0 0.0
    %1963 = vmatpush1.msra.mxu0 %v1918
    %1964 = vmatprep.subr.mxu0 0.0
    %1965 = vmatpush2.msra.mxu0 0.0
    %1966 = vmatprep.subr.mxu0 0.0
    %1967 = vmatpush2.msra.mxu0 0.0
    %1968 = vmatprep.subr.mxu0 0.0
    %1969 = vmatpush2.msra.mxu0 0.0
    %1970 = vmatprep.subr.mxu0 0.0
    %1971 = vmatpush2.msra.mxu0 0.0
    %1972 = vmatprep.subr.mxu0 0.0
    %1973 = vmatpush2.msra.mxu0 0.0
    %1974 = vmatprep.subr.mxu0 0.0
    %1975 = vmatpush2.msra.mxu0 0.0
    %1976 = vmatprep.subr.mxu0 0.0
    %1977 = vmatpush2.msra.mxu0 0.0
    %1978 = vmatprep.subr.mxu0 0.0
    %1979 = vmatpush2.msra.mxu0 0.0
    %1980 = vmatprep.subr.mxu0 0.0
    %1981 = vmatpush2.msra.mxu0 0.0
    %1982 = vmatprep.subr.mxu0 0.0
    %1983 = vmatpush2.msra.mxu0 0.0
    %1984 = vmatprep.subr.mxu0 0.0
    %1985 = vmatpush2.msra.mxu0 0.0
    %1986 = vmatprep.subr.mxu0 0.0
    %1987 = vmatpush2.msra.mxu0 0.0
    %1988 = vmatprep.subr.mxu0 0.0
    %1989 = vmatpush2.msra.mxu0 0.0
    %1990 = vmatprep.subr.mxu0 0.0
    %1991 = vmatpush2.msra.mxu0 0.0
    %1992 = vmatprep.subr.mxu0 0.0
    %1993 = vmatpush2.msra.mxu0 0.0
    %1994 = vmatprep.subr.mxu0 0.0
    %1995 = vmatpush2.msra.mxu0 0.0
    %1996 = vmatprep.mubr.f32.mxu0 0.0
    %1997 = vmatmul.mubr.f32.gmra.mxu0 %v1930
    %v1998 = vpop.f32.mrf.mxu0
    %v1999 = vadd.f32 %v1927, %v1998
    %v2000 = vpop.f32.mrf.mxu0
    %2001 = vdwg.mxu0
    %vm2002 = vcmask 50176
    %v2003 = vsel %vm2002, %v1999, -inf
    %2004 = vmax.xlane.f32.xlu0 %v2003
    %v2005 = vpop.xlane.xlu0 %2004
    %v2006 = vsub.f32 %v1999, %v2005
    %v2007 = vmul.f32 %v2006, 1.442695
    %v2008 = vpow.pop %v2007
    %v2009 = vsel %vm2002, %v2008, 0.0
    %2010 = vadd.xlane.f32.xlu0 %v2009
    %v2011 = vpop.xlane.xlu0 %2010
    %v2012 = vlog2.pop %v2011
    %v2013 = vmul.f32 %v2012, 0.6931472
    %v2014 = vadd.f32 %v2013, %v2005
    %v2015 = vsub.f32 %v1999, %v2014
    %2016 = vst.msk [vmem:[#allocation2] sm:$0x3] %vm2002, %v2015
    // Predicated region
    $region106: #{bi_e2e_forward.3} parent=1 // pred_check
      _
    $region107: #{bi_e2e_forward.3} parent=1 // pred_check_branch
      %2018 = sbr.rel (0) target = $region109
    $region108: #{bi_e2e_forward.3} parent=1 // pred_region
      %s2020 = ssub.s32 32, 32
      %2021 = vsyncadd [#allocation3], %s2020
      %s2023 = sshll.u32 [#allocation2], 4
      %s2024 = int_to_ptr.vmem [resolvable:$true] %s2023
      %2026 = dma.vmem_to_hbm [thread:$0]  %s2024, 32, %s26, [#allocation3]
    $region109: #{bi_e2e_forward.3} parent=1 // pred_fallthru
      _
    // Predicated region
    $region110: #{bi_e2e_forward.3} parent=1 // pred_check
      _
    $region111: #{bi_e2e_forward.3} parent=1 // pred_check_branch
      %2028 = sbr.rel (0) target = $region113
    $region112: #{bi_e2e_forward.3} parent=1 // pred_region
      %2029 = dma.done [#allocation3], 32
    $region113: #{bi_e2e_forward.3} parent=1 // pred_fallthru
      _
    %2030 = vsyncpa [#allocation3], 1

</llo_original>
